<compile_context>
chip_gen: v7x
topology: tpu7x:2x2x1
jax: 0.10.0
libtpu: 0.0.40
codegen_flags: <defaults>
</compile_context>

<pallas_src>
import jax
import jax.numpy as jnp
from jax.experimental import pallas as pl
from jax.experimental.pallas import tpu as pltpu

EPS = 1e-5
_FULL_IM2COL_MAX_K = 256        # single-matmul path when K_total fits MXU depth
_VMEM_LIMIT_CACHE = None


def _vmem_limit():
    """~3/4 of per-core VMEM (96 MiB on v5e/v6e, 48 MiB on v7x); cached."""
    global _VMEM_LIMIT_CACHE
    if _VMEM_LIMIT_CACHE is None:
        try:
            cap = int(pltpu.get_tpu_info().vmem_capacity_bytes)
        except Exception:
            cap = 64 * 1024 * 1024
        _VMEM_LIMIT_CACHE = int(min(cap - cap // 4, 112 * 1024 * 1024))
    return _VMEM_LIMIT_CACHE


# ----------------------------------------------------------------------------
# Pallas kernels
# ----------------------------------------------------------------------------
def _make_conv_kernel(keff, Ho, Wo, cin_p, full_im2col, relu,
                      has_res, has_sc, sc_off, sc_cin):
    """Direct stride-1 conv on a VMEM-resident image block.

    Per kernel row di, the kw shifted windows are channel-concatenated into a
    single deep-K LHS and fed to one MXU matmul (or, when K_total is small,
    the whole im2col LHS is built for a single matmul).  Fused epilogue:
    +bias [+residual] [ReLU]; optional fused 1x1/stride-2 projection shortcut
    computed from the phase-(1,1) channel slice of the same input block."""

    def kernel(*refs):
        it = iter(refs)
        x_ref = next(it)
        w_ref = next(it)
        b_ref = next(it)
        r_ref = next(it) if has_res else None
        if has_sc:
            wsc_ref = next(it)
            bsc_ref = next(it)
        o_ref = next(it)
        osc_ref = next(it) if has_sc else None

        nb = x_ref.shape[0]
        M = Ho * Wo

        def window(di, dj):
            return x_ref[:, di:di + Ho, dj:dj + Wo, :]      # (nb, Ho, Wo, cin_p)

        if full_im2col:
            lhs_rows = [jnp.concatenate(
                [window(di, dj) for di in range(keff) for dj in range(keff)],
                axis=-1).reshape(nb * M, keff * keff * cin_p)]
            w_rows = [w_ref[...]]
        else:
            k_row = keff * cin_p
            lhs_rows = [jnp.concatenate(
                [window(di, dj) for dj in range(keff)],
                axis=-1).reshape(nb * M, k_row) for di in range(keff)]
            w_rows = [w_ref[di * k_row:(di + 1) * k_row, :] for di in range(keff)]

        # Back-to-back MXU matmuls chained into a single f32 accumulator
        # (lets Mosaic keep the accumulation in the MXU result buffer on v7x).
        acc = jnp.dot(lhs_rows[0], w_rows[0], preferred_element_type=jnp.float32)
        for lhs, w in zip(lhs_rows[1:], w_rows[1:]):
            acc = acc + jnp.dot(lhs, w, preferred_element_type=jnp.float32)

        acc = acc + b_ref[...]                               # (1, TCout) broadcast
        if has_res:
            acc = acc + r_ref[...].reshape(nb * M, -1).astype(jnp.float32)
        if relu:
            acc = jnp.maximum(acc, 0.0)
        o_ref[...] = acc.reshape(nb, M, -1).astype(o_ref.dtype)

        if has_sc:
            # 1x1/stride-2 projection shortcut == matmul over the phase-(1,1)
            # channel slice of the space-to-depth block at tap (0, 0).
            lhs_sc = x_ref[:, 0:Ho, 0:Wo, sc_off:sc_off + sc_cin]
            lhs_sc = lhs_sc.reshape(nb * M, sc_cin)
            acc_sc = jnp.dot(lhs_sc, wsc_ref[...], preferred_element_type=jnp.float32)
            acc_sc = acc_sc + bsc_ref[...]
            osc_ref[...] = acc_sc.reshape(nb, M, -1).astype(osc_ref.dtype)

    return kernel


def _make_maxpool_kernel(Ho, Wo, k):
    """3x3/stride-2 max pool over four 2x2-phase inputs (unit-stride slices).
    NOTE: zero padding only matches PyTorch's -inf padding because the input
    is guaranteed post-ReLU (>= 0)."""
    pairs = [(q, r) for q in range((k + 1) // 2) for r in range(2) if 2 * q + r < k]

    def kernel(p00, p01, p10, p11, o_ref):
        phases = (p00, p01, p10, p11)
        out = None
        for qi, ri in pairs:
            for qj, rj in pairs:
                ref = phases[ri * 2 + rj]
                v = ref[0, qi:qi + Ho, qj:qj + Wo, :]
                out = v if out is None else jnp.maximum(out, v)
        o_ref[0] = out

    return kernel


def _avgpool_fc_kernel(x_ref, w_ref, b_ref, o_ref):
    # x_ref: (N, H*W, C) bf16 ; w_ref: (C, NCp) bf16 ; b_ref: (1, NCp) f32
    hw = x_ref.shape[1]
    feat = jnp.sum(x_ref[...].astype(jnp.float32), axis=1) * (1.0 / hw)   # (N, C)
    o_ref[...] = jnp.dot(feat.astype(jnp.bfloat16), w_ref[...],
                         preferred_element_type=jnp.float32) + b_ref[...]


# ----------------------------------------------------------------------------
# pallas_call wrappers
# ----------------------------------------------------------------------------
def _pick_nb(N, per_image_bytes, n_co, vmem_limit):
    """Largest batch-block (divisor of N) fitting the VMEM budget; keep >= 2
    grid steps on a parallel axis when possible (v7x megacore)."""
    budget = max(vmem_limit // 6, 1)
    nb = max(1, min(N, budget // max(per_image_bytes, 1)))
    while N % nb:
        nb -= 1
    if nb == N and N > 1 and n_co == 1:
        nb = max(1, N // 2)
        while N % nb:
            nb -= 1
    return nb


def _conv_pallas(x_in, cw, Ho, Wo, relu, residual=None, shortcut=None):
    """Direct conv on an NHWC block with in-kernel window gathering.

    x_in : (N, Hin, Win, cin_p) bf16, Hin >= Ho+keff-1, Win >= Wo+keff-1
    cw   : prepped conv params {w2d (K_total, Cout) bf16, bias (1, Cout) f32,
           keff, cin_p, ...}
    """
    N, Hin, Win, cin_p = x_in.shape
    assert cin_p == cw["cin_p"]
    w2d, bias, keff = cw["w2d"], cw["bias"], cw["keff"]
    K_total, Cout = w2d.shape
    M = Ho * Wo

    # Lane-dense 128-wide output tiles; fall back to one whole tile if Cout is
    # not a multiple of 128 (never drop channels).
    TCout = 128 if (Cout > 128 and Cout % 128 == 0) else Cout
    n_co = Cout // TCout
    full = K_total <= _FULL_IM2COL_MAX_K
    has_res = residual is not None
    has_sc = shortcut is not None

    vmem_limit = _vmem_limit()
    k_build = (keff * keff if full else keff) * cin_p
    per_image = 2 * Hin * Win * cin_p + 2 * M * k_build + 8 * M * Cout
    Nb = _pick_nb(N, per_image, n_co, vmem_limit)
    nb_blocks = N // Nb

    # Keep the larger operand resident across the inner grid axis.
    weight_resident = 2 * K_total * TCout >= 2 * Nb * Hin * Win * cin_p
    if weight_resident:
        grid = (n_co, nb_blocks)
        bsel = lambda co, b: b
        csel = lambda co, b: co
    else:
        grid = (nb_blocks, n_co)
        bsel = lambda b, co: b
        csel = lambda b, co: co

    x_spec = pl.BlockSpec((Nb, Hin, Win, cin_p), lambda *g: (bsel(*g), 0, 0, 0))
    w_spec = pl.BlockSpec((K_total, TCout), lambda *g: (0, csel(*g)))
    b_spec = pl.BlockSpec((1, TCout), lambda *g: (0, csel(*g)))

    def mk_out_spec():
        return pl.BlockSpec((Nb, M, TCout), lambda *g: (bsel(*g), 0, csel(*g)))

    args = [x_in, w2d, bias]
    in_specs = [x_spec, w_spec, b_spec]
    sc_off = sc_cin = 0
    if has_res:
        args.append(residual.reshape(N, M, Cout))
        in_specs.append(mk_out_spec())
    if has_sc:
        sc_cin = shortcut["cin"]
        sc_off = 3 * sc_cin                       # phase (1,1) of the s2d layout
        args += [shortcut["w_sc"], shortcut["b_sc"]]
        in_specs += [pl.BlockSpec((sc_cin, TCout), lambda *g: (0, csel(*g))),
                     pl.BlockSpec((1, TCout), lambda *g: (0, csel(*g)))]

    if has_sc:
        out_shape = (jax.ShapeDtypeStruct((N, M, Cout), jnp.bfloat16),
                     jax.ShapeDtypeStruct((N, M, Cout), jnp.bfloat16))
        out_specs = (mk_out_spec(), mk_out_spec())
    else:
        out_shape = jax.ShapeDtypeStruct((N, M, Cout), jnp.bfloat16)
        out_specs = mk_out_spec()

    kernel = _make_conv_kernel(keff, Ho, Wo, cin_p, full, relu,
                               has_res, has_sc, sc_off, sc_cin)

    flops = 2 * N * M * K_total * Cout + (2 * N * M * sc_cin * Cout if has_sc else 0)
    bytes_accessed = (2 * N * Hin * Win * cin_p + 2 * K_total * Cout
                      + 2 * N * M * Cout * (1 + int(has_res) + 2 * int(has_sc)))

    outs = pl.pallas_call(
        kernel,
        grid=grid,
        in_specs=in_specs,
        out_specs=out_specs,
        out_shape=out_shape,
        compiler_params=pltpu.CompilerParams(
            dimension_semantics=("parallel", "parallel"),
            vmem_limit_bytes=vmem_limit),
        cost_estimate=pl.CostEstimate(flops=flops, transcendentals=0,
                                      bytes_accessed=bytes_accessed),
    )(*args)

    if has_sc:
        out, out_sc = outs
        return out.reshape(N, Ho, Wo, Cout), out_sc.reshape(N, Ho, Wo, Cout)
    return outs.reshape(N, Ho, Wo, Cout)


def _space_to_depth2(x):
    """(N, H, W, C) with even H, W -> (N, H//2, W//2, 4*C); ch = (ri*2+rj)*C + c."""
    N, H, W, C = x.shape
    x = x.reshape(N, H // 2, 2, W // 2, 2, C)
    x = jnp.transpose(x, (0, 1, 3, 2, 4, 5))
    return x.reshape(N, H // 2, W // 2, 4 * C)


def conv_bn(x, cw, relu=True, residual=None, shortcut=None):
    """Fused Conv2d(bias=False) + folded eval-mode BatchNorm [+res] [+ReLU].
    BN scale/bias, weight layout and bf16 cast are pre-folded in `cw`.
    x: NHWC bf16."""
    N, H, W, _ = x.shape
    s, pad, k = cw["stride"], cw["pad"], cw["k"]
    if s == 1:
        Ho, Wo = H + 2 * pad - k + 1, W + 2 * pad - k + 1
        x_in = jnp.pad(x, ((0, 0), (pad, pad), (pad, pad), (0, 0))) if pad else x
    else:
        assert s == 2
        Ho = (H + 2 * pad - k) // 2 + 1
        Wo = (W + 2 * pad - k) // 2 + 1
        Hp, Wp = H + 2 * pad, W + 2 * pad
        # TODO(synk): gather the 2x2 phases inside the conv kernel (strided
        # pl.ds reads) instead of this JAX-level space-to-depth HBM pass.
        xp = jnp.pad(x, ((0, 0), (pad, pad + Hp % 2), (pad, pad + Wp % 2), (0, 0)))
        x_in = _space_to_depth2(xp)
    if x_in.shape[-1] != cw["cin_p"]:
        x_in = jnp.pad(x_in, ((0, 0), (0, 0), (0, 0),
                              (0, cw["cin_p"] - x_in.shape[-1])))
    return _conv_pallas(x_in, cw, Ho, Wo, relu, residual=residual, shortcut=shortcut)


def maxpool2d(x, k=3, stride=2, pad=1):
    """3x3/2 max pool.  Input must be post-ReLU (>= 0) so zero padding matches
    PyTorch's -inf padding.  The stride is handled by splitting the padded
    input into its four 2x2 phases (unit-stride slices in-kernel).
    TODO(synk): do the phase split in-kernel (strided pl.ds reads) to remove
    this extra JAX-level HBM pass."""
    assert stride == 2
    N, H, W, C = x.shape
    Ho = (H + 2 * pad - k) // 2 + 1
    Wo = (W + 2 * pad - k) // 2 + 1
    Hp, Wp = H + 2 * pad, W + 2 * pad
    xp = jnp.pad(x, ((0, 0), (pad, pad + Hp % 2), (pad, pad + Wp % 2), (0, 0)))
    phases = [xp[:, ri::2, rj::2, :] for ri in range(2) for rj in range(2)]
    H2, W2 = phases[0].shape[1], phases[0].shape[2]
    spec = pl.BlockSpec((1, H2, W2, C), lambda n: (n, 0, 0, 0))
    return pl.pallas_call(
        _make_maxpool_kernel(Ho, Wo, k),
        grid=(N,),
        in_specs=[spec, spec, spec, spec],
        out_specs=pl.BlockSpec((1, Ho, Wo, C), lambda n: (n, 0, 0, 0)),
        out_shape=jax.ShapeDtypeStruct((N, Ho, Wo, C), x.dtype),
        compiler_params=pltpu.CompilerParams(
            dimension_semantics=("parallel",), vmem_limit_bytes=_vmem_limit()),
    )(*phases)


def avgpool_fc(x, fc_w_p, fc_b_p, num_classes):
    """AdaptiveAvgPool2d((1,1)) + flatten + Linear.  fc_w_p/fc_b_p are already
    padded to a lane-dense 128-multiple class dim and cast at prep time."""
    N, H, W, C = x.shape
    ncp = fc_w_p.shape[1]
    x3 = x.reshape(N, H * W, C)
    out = pl.pallas_call(
        _avgpool_fc_kernel,
        grid=(1,),
        in_specs=[pl.BlockSpec((N, H * W, C), lambda i: (0, 0, 0)),
                  pl.BlockSpec((C, ncp), lambda i: (0, 0)),
                  pl.BlockSpec((1, ncp), lambda i: (0, 0))],
        out_specs=pl.BlockSpec((N, ncp), lambda i: (0, 0)),
        out_shape=jax.ShapeDtypeStruct((N, ncp), jnp.float32),
        compiler_params=pltpu.CompilerParams(
            dimension_semantics=("arbitrary",), vmem_limit_bytes=_vmem_limit()),
    )(x3, fc_w_p, fc_b_p)
    return out[:, :num_classes]


# ----------------------------------------------------------------------------
# Parameter prep (BN fold + matmul layout + bf16 cast, done ONCE)
# ----------------------------------------------------------------------------
def _stride1_weight(w):
    """(Cout, Cin, kh, kw) -> (kh*kw, Cin, Cout), taps (di, dj) row-major."""
    Cout, Cin, kh, kw = w.shape
    return jnp.transpose(w, (2, 3, 1, 0)).reshape(kh * kw, Cin, Cout)


def _stride2_weight(w):
    """(Cout, Cin, K, K) stride-2 weight -> (K2*K2, 4*Cin, Cout) stride-1
    weight over the space-to-depth input, K2 = ceil(K/2)."""
    Cout, Cin, K, _ = w.shape
    K2 = (K + 1) // 2
    wp = jnp.pad(w, ((0, 0), (0, 0), (0, 2 * K2 - K), (0, 2 * K2 - K)))
    wr = wp.reshape(Cout, Cin, K2, 2, K2, 2)            # di = 2*qi + ri
    w_eff = jnp.transpose(wr, (2, 4, 3, 5, 1, 0))       # (qi, qj, ri, rj, cin, cout)
    return w_eff.reshape(K2 * K2, 4 * Cin, Cout)


def _prep_conv(p, stride, pad):
    """Fold BN into the weight, convert to (K_total, Cout) matmul layout,
    pad the per-tap channel dim to a sublane multiple, cast to bf16."""
    w = p["w"] * p["scale"].reshape(-1, 1, 1, 1)
    Cout, Cin, kh, _ = w.shape
    if stride == 1:
        w3, keff, cin_g = _stride1_weight(w), kh, Cin
    else:
        w3, keff, cin_g = _stride2_weight(w), (kh + 1) // 2, 4 * Cin
    cin_p = ((cin_g + 7) // 8) * 8
    if cin_p != cin_g:
        w3 = jnp.pad(w3, ((0, 0), (0, cin_p - cin_g), (0, 0)))
    w2d = w3.reshape(keff * keff * cin_p, Cout).astype(jnp.bfloat16)
    return {"w2d": w2d, "bias": p["bias"].astype(jnp.float32),
            "keff": keff, "cin_p": cin_p, "stride": stride, "pad": pad, "k": kh}


def _prep_shortcut(p):
    """1x1/stride-2 projection shortcut, to be fused into the stride-2 conv."""
    w = p["w"] * p["scale"].reshape(-1, 1, 1, 1)        # (Cout, Cin, 1, 1)
    Cout, Cin, _, _ = w.shape
    w2d = jnp.transpose(w.reshape(Cout, Cin), (1, 0)).astype(jnp.bfloat16)
    return {"w_sc": w2d, "b_sc": p["bias"].astype(jnp.float32), "cin": Cin}


def prepare_params(raw):
    prep = {"conv1": _prep_conv(raw["conv1"], stride=2, pad=3)}
    layers = []
    for blocks in raw["layers"]:
        pblocks = []
        for blk in blocks:
            s = blk["stride"]
            pb = {"conv_a": _prep_conv(blk["conv_a"], stride=s, pad=1),
                  "conv_b": _prep_conv(blk["conv_b"], stride=1, pad=1)}
            if "shortcut" in blk:
                # In this architecture a projection shortcut always coincides
                # with the stride-2 downsample block, so it can be fused.
                assert s == 2, "projection shortcut only fused for stride-2 blocks"
                pb["shortcut"] = _prep_shortcut(blk["shortcut"])
            pblocks.append(pb)
        layers.append(pblocks)
    prep["layers"] = layers
    C, nc = raw["fc_w"].shape
    ncp = pl.cdiv(nc, 128) * 128
    prep["fc_w"] = jnp.zeros((C, ncp), jnp.bfloat16).at[:, :nc].set(
        raw["fc_w"].astype(jnp.bfloat16))
    prep["fc_b"] = jnp.zeros((1, ncp), jnp.float32).at[:, :nc].set(
        raw["fc_b"].astype(jnp.float32))
    prep["num_classes"] = nc
    return prep


# ----------------------------------------------------------------------------
# Deterministic raw parameter initialization (synthetic; eval-mode BN stats)
# ----------------------------------------------------------------------------
def _bn_fold(key, c):
    k1, k2, k3, k4 = jax.random.split(key, 4)
    gamma = jax.random.uniform(k1, (c,), minval=0.5, maxval=1.5)
    beta = jax.random.normal(k2, (c,)) * 0.1
    mean = jax.random.normal(k3, (c,)) * 0.1
    var = jax.random.uniform(k4, (c,), minval=0.5, maxval=1.5)
    scale = gamma / jnp.sqrt(var + EPS)
    bias = beta - mean * scale
    return (scale.reshape(1, c).astype(jnp.float32),
            bias.reshape(1, c).astype(jnp.float32))


def _conv_params(key, cout, cin, kh, kw):
    kw_, kb = jax.random.split(key)
    fan_in = cin * kh * kw
    w = jax.random.normal(kw_, (cout, cin, kh, kw), jnp.float32) / (fan_in ** 0.5)
    scale, bias = _bn_fold(kb, cout)
    return {"w": w, "scale": scale, "bias": bias}


def init_resnet_params(key, num_blocks=(1, 1, 1, 1), num_classes=14):
    keys = iter(jax.random.split(key, 256))
    params = {"conv1": _conv_params(next(keys), 64, 3, 7, 7)}
    inchannel = 64
    layers = []
    for outchannel, nb, stride in zip((64, 128, 256, 512), num_blocks, (1, 2, 2, 2)):
        blocks = []
        strides = [stride] + [1] * (nb - 1)
        for s in strides:
            blk = {
                "conv_a": _conv_params(next(keys), outchannel, inchannel, 3, 3),
                "conv_b": _conv_params(next(keys), outchannel, outchannel, 3, 3),
                "stride": s,
            }
            if s != 1 or inchannel != outchannel:
                blk["shortcut"] = _conv_params(next(keys), outchannel, inchannel, 1, 1)
            blocks.append(blk)
            inchannel = outchannel          # expansion = 1 (basic residual block)
        layers.append(blocks)
    params["layers"] = layers
    kf1, kf2 = jax.random.split(next(keys))
    params["fc_w"] = jax.random.normal(kf1, (512, num_classes), jnp.float32) / (512 ** 0.5)
    params["fc_b"] = jax.random.normal(kf2, (1, num_classes), jnp.float32) * 0.01
    return params


# ----------------------------------------------------------------------------
# Forward pass (mirrors PyTorch ResNet.forward with the basic block)
# ----------------------------------------------------------------------------
def block_forward(x, blk):
    # left: conv3x3(s) -> BN -> ReLU -> conv3x3(1) -> BN
    # out = ReLU(left(x) + shortcut(x)); residual add + ReLU fused into conv_b;
    # the 1x1/2 projection shortcut (if any) is fused into conv_a's kernel.
    cwa, cwb = blk["conv_a"], blk["conv_b"]
    sc = blk.get("shortcut")
    if sc is not None:
        out, res = conv_bn(x, cwa, relu=True, shortcut=sc)
    else:
        out = conv_bn(x, cwa, relu=True)
        res = x
    return conv_bn(out, cwb, relu=True, residual=res)


def resnet_forward(prep, x_nchw):
    x = jnp.transpose(x_nchw, (0, 2, 3, 1)).astype(jnp.bfloat16)    # NCHW -> NHWC
    x = conv_bn(x, prep["conv1"], relu=True)                        # 7x7/2 + BN + ReLU
    x = maxpool2d(x, k=3, stride=2, pad=1)                          # maxpool 3x3/2
    for blocks in prep["layers"]:
        for blk in blocks:
            x = block_forward(x, blk)
    return avgpool_fc(x, prep["fc_w"], prep["fc_b"], prep["num_classes"])


if __name__ == "__main__":
    key = jax.random.PRNGKey(0)
    kp, kx = jax.random.split(key)
    # small, forward-consistent shapes: batch=2, 3x32x32 input -> (2, 14) logits
    raw_params = init_resnet_params(kp, num_blocks=(1, 1, 1, 1), num_classes=14)
    params = prepare_params(raw_params)        # BN fold / layout / bf16 cast, once
    x = jax.random.normal(kx, (2, 3, 32, 32), jnp.float32)
    out = resnet_forward(params, x)
    out = jax.block_until_ready(out)
    assert out.shape == (2, 14), out.shape
    print("KERNEL_OK")
</pallas_src>

<mosaic_0001>
module attributes {stable_mosaic.version = 11 : i64} {
  func.func @kernel(%arg0: i32, %arg1: i32, %arg2: memref<1x19x19x16xbf16, #tpu.memory_space<vmem>>, %arg3: memref<256x64xbf16, #tpu.memory_space<vmem>>, %arg4: memref<1x64xf32, #tpu.memory_space<vmem>>, %arg5: memref<1x256x64xbf16, #tpu.memory_space<vmem>>) attributes {dimension_semantics = [#tpu.dimension_semantics<parallel>, #tpu.dimension_semantics<parallel>], iteration_bounds = array<i64: 1, 2>, scalar_prefetch = 0 : i64, scratch_operands = 0 : i64, tpu.core_type = #tpu.core_type<tc>, window_params = [{transform_indices = @transform_0, window_bounds = array<i64: 1, 19, 19, 16>}, {transform_indices = @transform_1, window_bounds = array<i64: 256, 64>}, {transform_indices = @transform_2, window_bounds = array<i64: 1, 64>}, {transform_indices = @transform_3, window_bounds = array<i64: 1, 256, 64>}]} {
    %c0 = arith.constant 0 : index
    %c0_0 = arith.constant 0 : index
    %c0_1 = arith.constant 0 : index
    %c0_2 = arith.constant 0 : index
    %0 = vector.load %arg2[%c0, %c0_0, %c0_1, %c0_2] : memref<1x19x19x16xbf16, #tpu.memory_space<vmem>>, vector<1x16x16x16xbf16>
    %c0_3 = arith.constant 0 : index
    %c0_4 = arith.constant 0 : index
    %c1 = arith.constant 1 : index
    %c0_5 = arith.constant 0 : index
    %1 = vector.load %arg2[%c0_3, %c0_4, %c1, %c0_5] : memref<1x19x19x16xbf16, #tpu.memory_space<vmem>>, vector<1x16x16x16xbf16>
    %c0_6 = arith.constant 0 : index
    %c0_7 = arith.constant 0 : index
    %c2 = arith.constant 2 : index
    %c0_8 = arith.constant 0 : index
    %2 = vector.load %arg2[%c0_6, %c0_7, %c2, %c0_8] : memref<1x19x19x16xbf16, #tpu.memory_space<vmem>>, vector<1x16x16x16xbf16>
    %c0_9 = arith.constant 0 : index
    %c0_10 = arith.constant 0 : index
    %c3 = arith.constant 3 : index
    %c0_11 = arith.constant 0 : index
    %3 = vector.load %arg2[%c0_9, %c0_10, %c3, %c0_11] : memref<1x19x19x16xbf16, #tpu.memory_space<vmem>>, vector<1x16x16x16xbf16>
    %c0_12 = arith.constant 0 : index
    %c1_13 = arith.constant 1 : index
    %c0_14 = arith.constant 0 : index
    %c0_15 = arith.constant 0 : index
    %4 = vector.load %arg2[%c0_12, %c1_13, %c0_14, %c0_15] : memref<1x19x19x16xbf16, #tpu.memory_space<vmem>>, vector<1x16x16x16xbf16>
    %c0_16 = arith.constant 0 : index
    %c1_17 = arith.constant 1 : index
    %c1_18 = arith.constant 1 : index
    %c0_19 = arith.constant 0 : index
    %5 = vector.load %arg2[%c0_16, %c1_17, %c1_18, %c0_19] : memref<1x19x19x16xbf16, #tpu.memory_space<vmem>>, vector<1x16x16x16xbf16>
    %c0_20 = arith.constant 0 : index
    %c1_21 = arith.constant 1 : index
    %c2_22 = arith.constant 2 : index
    %c0_23 = arith.constant 0 : index
    %6 = vector.load %arg2[%c0_20, %c1_21, %c2_22, %c0_23] : memref<1x19x19x16xbf16, #tpu.memory_space<vmem>>, vector<1x16x16x16xbf16>
    %c0_24 = arith.constant 0 : index
    %c1_25 = arith.constant 1 : index
    %c3_26 = arith.constant 3 : index
    %c0_27 = arith.constant 0 : index
    %7 = vector.load %arg2[%c0_24, %c1_25, %c3_26, %c0_27] : memref<1x19x19x16xbf16, #tpu.memory_space<vmem>>, vector<1x16x16x16xbf16>
    %c0_28 = arith.constant 0 : index
    %c2_29 = arith.constant 2 : index
    %c0_30 = arith.constant 0 : index
    %c0_31 = arith.constant 0 : index
    %8 = vector.load %arg2[%c0_28, %c2_29, %c0_30, %c0_31] : memref<1x19x19x16xbf16, #tpu.memory_space<vmem>>, vector<1x16x16x16xbf16>
    %c0_32 = arith.constant 0 : index
    %c2_33 = arith.constant 2 : index
    %c1_34 = arith.constant 1 : index
    %c0_35 = arith.constant 0 : index
    %9 = vector.load %arg2[%c0_32, %c2_33, %c1_34, %c0_35] : memref<1x19x19x16xbf16, #tpu.memory_space<vmem>>, vector<1x16x16x16xbf16>
    %c0_36 = arith.constant 0 : index
    %c2_37 = arith.constant 2 : index
    %c2_38 = arith.constant 2 : index
    %c0_39 = arith.constant 0 : index
    %10 = vector.load %arg2[%c0_36, %c2_37, %c2_38, %c0_39] : memref<1x19x19x16xbf16, #tpu.memory_space<vmem>>, vector<1x16x16x16xbf16>
    %c0_40 = arith.constant 0 : index
    %c2_41 = arith.constant 2 : index
    %c3_42 = arith.constant 3 : index
    %c0_43 = arith.constant 0 : index
    %11 = vector.load %arg2[%c0_40, %c2_41, %c3_42, %c0_43] : memref<1x19x19x16xbf16, #tpu.memory_space<vmem>>, vector<1x16x16x16xbf16>
    %c0_44 = arith.constant 0 : index
    %c3_45 = arith.constant 3 : index
    %c0_46 = arith.constant 0 : index
    %c0_47 = arith.constant 0 : index
    %12 = vector.load %arg2[%c0_44, %c3_45, %c0_46, %c0_47] : memref<1x19x19x16xbf16, #tpu.memory_space<vmem>>, vector<1x16x16x16xbf16>
    %c0_48 = arith.constant 0 : index
    %c3_49 = arith.constant 3 : index
    %c1_50 = arith.constant 1 : index
    %c0_51 = arith.constant 0 : index
    %13 = vector.load %arg2[%c0_48, %c3_49, %c1_50, %c0_51] : memref<1x19x19x16xbf16, #tpu.memory_space<vmem>>, vector<1x16x16x16xbf16>
    %c0_52 = arith.constant 0 : index
    %c3_53 = arith.constant 3 : index
    %c2_54 = arith.constant 2 : index
    %c0_55 = arith.constant 0 : index
    %14 = vector.load %arg2[%c0_52, %c3_53, %c2_54, %c0_55] : memref<1x19x19x16xbf16, #tpu.memory_space<vmem>>, vector<1x16x16x16xbf16>
    %c0_56 = arith.constant 0 : index
    %c3_57 = arith.constant 3 : index
    %c3_58 = arith.constant 3 : index
    %c0_59 = arith.constant 0 : index
    %15 = vector.load %arg2[%c0_56, %c3_57, %c3_58, %c0_59] : memref<1x19x19x16xbf16, #tpu.memory_space<vmem>>, vector<1x16x16x16xbf16>
    %16 = tpu.concatenate %0, %1, %2, %3, %4, %5, %6, %7, %8, %9, %10, %11, %12, %13, %14, %15 in 3 : vector<1x16x16x16xbf16>, vector<1x16x16x16xbf16>, vector<1x16x16x16xbf16>, vector<1x16x16x16xbf16>, vector<1x16x16x16xbf16>, vector<1x16x16x16xbf16>, vector<1x16x16x16xbf16>, vector<1x16x16x16xbf16>, vector<1x16x16x16xbf16>, vector<1x16x16x16xbf16>, vector<1x16x16x16xbf16>, vector<1x16x16x16xbf16>, vector<1x16x16x16xbf16>, vector<1x16x16x16xbf16>, vector<1x16x16x16xbf16>, vector<1x16x16x16xbf16> -> vector<1x16x16x256xbf16>
    %17 = vector.shape_cast %16 : vector<1x16x16x256xbf16> to vector<256x256xbf16>
    %c0_60 = arith.constant 0 : index
    %c0_61 = arith.constant 0 : index
    %18 = vector.load %arg3[%c0_60, %c0_61] : memref<256x64xbf16, #tpu.memory_space<vmem>>, vector<256x64xbf16>
    %cst = arith.constant dense<0.000000e+00> : vector<256x64xf32>
    %19 = tpu.matmul %17, %18, %cst {dimension_numbers = #tpu.dot_dimension_numbers<[1], [0], [0], [1], [0, 0, 1, 1], [], []>} : vector<256x256xbf16>, vector<256x64xbf16>, vector<256x64xf32> -> vector<256x64xf32>
    %c0_62 = arith.constant 0 : index
    %c0_63 = arith.constant 0 : index
    %20 = vector.load %arg4[%c0_62, %c0_63] : memref<1x64xf32, #tpu.memory_space<vmem>>, vector<1x64xf32>
    %21 = vector.broadcast %20 : vector<1x64xf32> to vector<256x64xf32>
    %22 = arith.addf %19, %21 : vector<256x64xf32>
    %cst_64 = arith.constant 0.000000e+00 : f32
    %23 = vector.broadcast %cst_64 : f32 to vector<256x64xf32>
    %24 = arith.maximumf %22, %23 : vector<256x64xf32>
    %25 = vector.shape_cast %24 : vector<256x64xf32> to vector<1x256x64xf32>
    %26 = arith.truncf %25 : vector<1x256x64xf32> to vector<1x256x64xbf16>
    %c0_65 = arith.constant 0 : index
    %c0_66 = arith.constant 0 : index
    %c0_67 = arith.constant 0 : index
    %27 = vector.load %arg5[%c0_65, %c0_66, %c0_67] : memref<1x256x64xbf16, #tpu.memory_space<vmem>>, vector<1x256x64xbf16>
    tpu.vector_store %arg5[%c0_65, %c0_66, %c0_67], %26 {strides = array<i32>} : memref<1x256x64xbf16, #tpu.memory_space<vmem>>, vector<1x256x64xbf16>,
    return
  }
  func.func @transform_0(%arg0: i32, %arg1: i32) -> (i32, i32, i32, i32) {
    %c0_i32 = arith.constant 0 : i32
    %c0_i32_0 = arith.constant 0 : i32
    %c0_i32_1 = arith.constant 0 : i32
    %c0_i32_2 = arith.constant 0 : i32
    return %arg1, %c0_i32, %c0_i32_0, %c0_i32_1 : i32, i32, i32, i32
  }
  func.func @transform_1(%arg0: i32, %arg1: i32) -> (i32, i32) {
    %c0_i32 = arith.constant 0 : i32
    %c0_i32_0 = arith.constant 0 : i32
    return %c0_i32, %arg0 : i32, i32
  }
  func.func @transform_2(%arg0: i32, %arg1: i32) -> (i32, i32) {
    %c0_i32 = arith.constant 0 : i32
    %c0_i32_0 = arith.constant 0 : i32
    return %c0_i32, %arg0 : i32, i32
  }
  func.func @transform_3(%arg0: i32, %arg1: i32) -> (i32, i32, i32) {
    %c0_i32 = arith.constant 0 : i32
    %c0_i32_0 = arith.constant 0 : i32
    return %arg1, %c0_i32, %arg0 : i32, i32, i32
  }
}

</mosaic_0001>

<llo_original>
// kernel: tpu_custom_call.1
$region0: #{tpu_custom_call.1}
  #allocation0 [shape = 'u32[]', space=smem, size = 0x4, offset = 0x4, fixed_abs, tag = 'smem constant byte address 0x4 - core index']
  #allocation1 [shape = 'u32[144,128]{1,0:T(1,128)}', space=vmem, size = 0x12000, scoped, tag = 'internal scratch']
  %s0 = inlined_call_operand.vmem [shape: bf16[2,19,19,16], index: 0, kind: input, shape index: {}]
  %s1 = inlined_call_operand.vmem [shape: bf16[256,64], index: 1, kind: input, shape index: {}]
  %s2 = inlined_call_operand.vmem [shape: f32[1,64], index: 2, kind: input, shape index: {}]
  %s3 = inlined_call_operand.vmem [shape: bf16[2,256,64], index: 3, kind: output, shape index: {}]
  %s4 = sld [smem:[#allocation0]]
  $region45: #{tpu_custom_call.1} parent=0
    _
  %s6 = ssub.s32 1, %s4
  %s7 = scalar_select 0, %s6, %s4
  loop: start=0, step=1, limit=4
  $region2: #{tpu_custom_call.1} parent=0 // loop_pre_header
    _
  $region3: #{tpu_custom_call.1} parent=0 // loop_header
    %s9 = sphi 0, %s13
    %p10 = scmp.ge.s32.totalorder %s9, 4
    %s16 = sphi 0, %s28
    %s17 = sphi 0, %s24
    %s18 = sphi 0, %s16
    %s19 = sphi 0, %s17
    %s20 = sphi 0, %s18
    %s21 = sphi 0, %s19
    %s31 = sphi 0, %s33
    %s34 = sphi 0, %s31
    %s35 = sphi 0, %s34
    %s51 = sphi 0, %s35
    %s57 = sphi 0, %s59
    %s60 = sphi 0, %s57
    %s61 = sphi 0, %s60
    %s77 = sphi 0, %s61
    %s83 = sphi 0, %s85
    %s86 = sphi 0, %s83
    %s87 = sphi 0, %s86
    %s103 = sphi 0, %s87
    %s111 = sphi 0, %s113
    %s114 = sphi 0, %s111
    %s115 = sphi 0, %s114
    %s131 = sphi 0, %s115
  $region4: #{tpu_custom_call.1} parent=0 // loop_header_branch
    %12 = sbr.rel (%p10) target = $region8
  $region5: #{tpu_custom_call.1} parent=0 // loop_body
    %s14 = ssub.s32 %s9, 1
    %s15 = ssub.s32 %s9, 2
    %s22 = sadd.s32 1, %s17
    %p23 = scmp.ge.s32.totalorder %s22, 2
    %s24 = scalar_select %p23, 0, %s22
    %s25 = sadd.s32 1, %s16
    %s26 = scalar_select %p23, %s25, %s16
    %p27 = scmp.ge.s32.totalorder %s26, 1
    %s28 = scalar_select %p27, 0, %s26
    %s29 = ssub.s32 %s17, %s24
    %p30 = scmp.eq.s32.totalorder %s29, 0
    %s32 = sadd.s32 %s31, 1
    %s33 = scalar_select %p30, %s31, %s32
    %p36 = pneg %p30
    %p37 = scmp.eq.s32.totalorder %s9, 1
    %p38 = por %p36, %p37
    %p39 = scmp.ne.s32.totalorder %s31, %s34
    %p40 = scmp.eq.s32.totalorder %s9, 0
    %p41 = por %p39, %p40
    %p42 = scmp.ne.s32.totalorder %s31, %s34
    %p43 = scmp.eq.s32.totalorder %s14, 1
    %p44 = por %p42, %p43
    %p45 = scmp.ne.s32.totalorder %s34, %s35
    %p46 = scmp.eq.s32.totalorder %s14, 0
    %p47 = por %p45, %p46
    %p48 = scmp.ne.s32.totalorder %s34, %s35
    %p49 = scmp.eq.s32.totalorder %s15, 1
    %p50 = por %p48, %p49
    %p52 = scmp.ne.s32.totalorder %s35, %s51
    %p53 = scmp.eq.s32.totalorder %s15, 0
    %p54 = por %p52, %p53
    %s55 = ssub.s32 %s16, %s28
    %p56 = scmp.eq.s32.totalorder %s55, 0
    %s58 = sadd.s32 %s57, 1
    %s59 = scalar_select %p56, %s57, %s58
    %p62 = pneg %p56
    %p63 = scmp.eq.s32.totalorder %s9, 1
    %p64 = por %p62, %p63
    %p65 = scmp.ne.s32.totalorder %s57, %s60
    %p66 = scmp.eq.s32.totalorder %s9, 0
    %p67 = por %p65, %p66
    %p68 = scmp.ne.s32.totalorder %s57, %s60
    %p69 = scmp.eq.s32.totalorder %s14, 1
    %p70 = por %p68, %p69
    %p71 = scmp.ne.s32.totalorder %s60, %s61
    %p72 = scmp.eq.s32.totalorder %s14, 0
    %p73 = por %p71, %p72
    %p74 = scmp.ne.s32.totalorder %s60, %s61
    %p75 = scmp.eq.s32.totalorder %s15, 1
    %p76 = por %p74, %p75
    %p78 = scmp.ne.s32.totalorder %s61, %s77
    %p79 = scmp.eq.s32.totalorder %s15, 0
    %p80 = por %p78, %p79
    %s81 = ssub.s32 %s16, %s28
    %p82 = scmp.eq.s32.totalorder %s81, 0
    %s84 = sadd.s32 %s83, 1
    %s85 = scalar_select %p82, %s83, %s84
    %p88 = pneg %p82
    %p89 = scmp.eq.s32.totalorder %s9, 1
    %p90 = por %p88, %p89
    %p91 = scmp.ne.s32.totalorder %s83, %s86
    %p92 = scmp.eq.s32.totalorder %s9, 0
    %p93 = por %p91, %p92
    %p94 = scmp.ne.s32.totalorder %s83, %s86
    %p95 = scmp.eq.s32.totalorder %s14, 1
    %p96 = por %p94, %p95
    %p97 = scmp.ne.s32.totalorder %s86, %s87
    %p98 = scmp.eq.s32.totalorder %s14, 0
    %p99 = por %p97, %p98
    %p100 = scmp.ne.s32.totalorder %s86, %s87
    %p101 = scmp.eq.s32.totalorder %s15, 1
    %p102 = por %p100, %p101
    %p104 = scmp.ne.s32.totalorder %s87, %s103
    %p105 = scmp.eq.s32.totalorder %s15, 0
    %p106 = por %p104, %p105
    %s107 = ssub.s32 %s17, %s24
    %s108 = ssub.s32 %s16, %s28
    %s109 = sor.u32 %s107, %s108
    %p110 = scmp.eq.s32.totalorder %s109, 0
    %s112 = sadd.s32 %s111, 1
    %s113 = scalar_select %p110, %s111, %s112
    %p116 = pneg %p110
    %p117 = scmp.eq.s32.totalorder %s9, 1
    %p118 = por %p116, %p117
    %p119 = scmp.ne.s32.totalorder %s111, %s114
    %p120 = scmp.eq.s32.totalorder %s9, 0
    %p121 = por %p119, %p120
    %p122 = scmp.ne.s32.totalorder %s111, %s114
    %p123 = scmp.eq.s32.totalorder %s14, 1
    %p124 = por %p122, %p123
    %p125 = scmp.ne.s32.totalorder %s114, %s115
    %p126 = scmp.eq.s32.totalorder %s14, 0
    %p127 = por %p125, %p126
    %p128 = scmp.ne.s32.totalorder %s114, %s115
    %p129 = scmp.eq.s32.totalorder %s15, 1
    %p130 = por %p128, %p129
    %p132 = scmp.ne.s32.totalorder %s115, %s131
    %p133 = scmp.eq.s32.totalorder %s15, 0
    %p134 = por %p132, %p133
    %p135 = scmp.le.s32.totalorder 1, %s9
    %p136 = scmp.lt.s32.totalorder %s9, 3
    %p137 = pnand %p135, %p136
    %p138 = pneg %p137
    // Predicated region
    $region9: #{tpu_custom_call.1} parent=5 // pred_check
      _
    $region10: #{tpu_custom_call.1} parent=5 // pred_check_branch
      %140 = sbr.rel (%p137) target = $region12
    $region11: #{tpu_custom_call.1} parent=5 // pred_region
      %s141 = ssub.s32 %s9, 1
      // Predicated region
      $region13: #{tpu_custom_call.1} parent=11 // pred_check
        %p142 = pneg %p73
      $region14: #{tpu_custom_call.1} parent=11 // pred_check_branch
        %144 = sbr.rel (%p142) target = $region16
      $region15: #{tpu_custom_call.1} parent=11 // pred_region
        %p145 = scmp.lt.s32.totalorder %s18, 0
        %s146 = scalar_select %p145, %s18, 0
        %s147 = smul.addr %s146, 4
        %s148 = scalar_lea.vmem %s1, %s147
      $region16: #{tpu_custom_call.1} parent=11 // pred_fallthru
        _
      // Predicated region
      $region17: #{tpu_custom_call.1} parent=11 // pred_check
        %p149 = pneg %p99
      $region18: #{tpu_custom_call.1} parent=11 // pred_check_branch
        %151 = sbr.rel (%p149) target = $region20
      $region19: #{tpu_custom_call.1} parent=11 // pred_region
        %p152 = scmp.lt.s32.totalorder %s18, 0
        %s153 = scalar_select %p152, %s18, 0
        %s154 = scalar_lea.vmem %s2, %s153
      $region20: #{tpu_custom_call.1} parent=11 // pred_fallthru
        _
    $region12: #{tpu_custom_call.1} parent=5 // pred_fallthru
      _
    %p155 = scmp.lt.s32.totalorder %s9, 2
    // Predicated region
    $region21: #{tpu_custom_call.1} parent=5 // pred_check
      %p156 = pneg %p155
    $region22: #{tpu_custom_call.1} parent=5 // pred_check_branch
      %158 = sbr.rel (%p156) target = $region24
    $region23: #{tpu_custom_call.1} parent=5 // pred_region
      // Predicated region
      $region25: #{tpu_custom_call.1} parent=23 // pred_check
        %p159 = pneg %p41
      $region26: #{tpu_custom_call.1} parent=23 // pred_check_branch
        %161 = sbr.rel (%p159) target = $region28
      $region27: #{tpu_custom_call.1} parent=23 // pred_region
        %p162 = scmp.lt.s32.totalorder %s17, 1
        %s163 = scalar_select %p162, %s17, 1
        %s164 = smul.addr %s163, 57
        %s165 = smul.addr %s164, 4
        %s166 = scalar_lea.vmem %s0, %s165
      $region28: #{tpu_custom_call.1} parent=23 // pred_fallthru
        _
    $region24: #{tpu_custom_call.1} parent=5 // pred_fallthru
      _
    %p167 = scmp.le.s32.totalorder 1, %s9
    %p168 = scmp.lt.s32.totalorder %s9, 3
    %p169 = pnand %p167, %p168
    %p170 = pneg %p169
    // Predicated region
    $region29: #{tpu_custom_call.1} parent=5 // pred_check
      _
    $region30: #{tpu_custom_call.1} parent=5 // pred_check_branch
      %172 = sbr.rel (%p169) target = $region32
    $region31: #{tpu_custom_call.1} parent=5 // pred_region
      %s173 = ssub.s32 %s9, 1
      %p174 = scmp.lt.s32.totalorder %s19, 1
      %s175 = scalar_select %p174, %s19, 1
      %s176 = smul.addr %s175, 57
      %s177 = smul.addr %s176, 4
      %s178 = scalar_lea.vmem %s0, %s177
      %p179 = pneg %p47
      %p180 = pneg %p44
      %p181 = scmp.lt.s32.totalorder %s18, 0
      %s182 = scalar_select %p181, %s18, 0
      %s183 = smul.addr %s182, 4
      %s184 = scalar_lea.vmem %s1, %s183
      %p185 = pneg %p73
      %p186 = pneg %p70
      %p187 = scmp.lt.s32.totalorder %s18, 0
      %s188 = scalar_select %p187, %s18, 0
      %s189 = scalar_lea.vmem %s2, %s188
      %p190 = pneg %p99
      %p191 = pneg %p96
      %p192 = pneg %p127
      %p193 = pneg %p124
      %p194 = scmp.lt.s32.totalorder %s19, 1
      %s195 = scalar_select %p194, %s19, 1
      %p196 = scmp.lt.s32.totalorder %s18, 0
      %s197 = scalar_select %p196, %s18, 0
      %s198 = smul.addr %s195, 32
      %s199 = sadd.s32 %s197, %s198
      %s200 = smul.addr %s199, 4
      %s201 = scalar_lea.vmem %s3, %s200
      %p202 = scmp.lt.s32.totalorder %s19, 1
      %s203 = scalar_select %p202, %s19, 1
      %s204 = smul.addr %s203, 57
      %s205 = smul.addr %s204, 4
      %s206 = scalar_lea.vmem %s0, %s205
      %p207 = scmp.lt.s32.totalorder %s18, 0
      %s208 = scalar_select %p207, %s18, 0
      %s209 = smul.addr %s208, 4
      %s210 = scalar_lea.vmem %s1, %s209
      %p211 = scmp.lt.s32.totalorder %s18, 0
      %s212 = scalar_select %p211, %s18, 0
      %s213 = scalar_lea.vmem %s2, %s212
      %p214 = scmp.lt.s32.totalorder %s19, 1
      %s215 = scalar_select %p214, %s19, 1
      %p216 = scmp.lt.s32.totalorder %s18, 0
      %s217 = scalar_select %p216, %s18, 0
      %s218 = smul.addr %s215, 32
      %s219 = sadd.s32 %s217, %s218
      %s220 = smul.addr %s219, 4
      %s221 = scalar_lea.vmem %s3, %s220
      %v223 = vld [vmem:[%s206] sm:$0xf]
      %v224 = vld [vmem:[%s206 + $0x4] sm:$0xf]
      %v225 = vld [vmem:[%s206 + $0xc] sm:$0xf]
      %v226 = vld [vmem:[%s206 + $0x10] sm:$0xf]
      %v227 = vld [vmem:[%s206 + $0x18] sm:$0xf]
      %v228 = vld [vmem:[%s206 + $0x1c] sm:$0xf]
      %v229 = vld [vmem:[%s206 + $0x24] sm:$0xf]
      %v230 = vld [vmem:[%s206 + $0x28] sm:$0xf]
      %v231 = vld [vmem:[%s206 + $0x30] sm:$0xf]
      %v232 = vld [vmem:[%s206 + $0x34] sm:$0xf]
      %v233 = vld [vmem:[%s206 + $0x3c] sm:$0xf]
      %v234 = vld [vmem:[%s206 + $0x40] sm:$0xf]
      %v235 = vld [vmem:[%s206 + $0x48] sm:$0xf]
      %v236 = vld [vmem:[%s206 + $0x4c] sm:$0xf]
      %v237 = vld [vmem:[%s206 + $0x54] sm:$0xf]
      %v238 = vld [vmem:[%s206 + $0x58] sm:$0xf]
      %v239 = vld [vmem:[%s206 + $0x60] sm:$0xf]
      %v240 = vld [vmem:[%s206 + $0x64] sm:$0xf]
      %v241 = vld [vmem:[%s206 + $0x6c] sm:$0xf]
      %v242 = vld [vmem:[%s206 + $0x70] sm:$0xf]
      %v243 = vld [vmem:[%s206 + $0x78] sm:$0xf]
      %v244 = vld [vmem:[%s206 + $0x7c] sm:$0xf]
      %v245 = vld [vmem:[%s206 + $0x84] sm:$0xf]
      %v246 = vld [vmem:[%s206 + $0x88] sm:$0xf]
      %v247 = vld [vmem:[%s206 + $0x90] sm:$0xf]
      %v248 = vld [vmem:[%s206 + $0x94] sm:$0xf]
      %v249 = vld [vmem:[%s206 + $0x9c] sm:$0xf]
      %v250 = vld [vmem:[%s206 + $0xa0] sm:$0xf]
      %v251 = vld [vmem:[%s206 + $0xa8] sm:$0xf]
      %v252 = vld [vmem:[%s206 + $0xac] sm:$0xf]
      %v253 = vld [vmem:[%s206 + $0xb4] sm:$0xf]
      %v254 = vld [vmem:[%s206 + $0xb8] sm:$0xf]
      %v255 = vld [vmem:[%s206 + $0x8] sm:$0x1]
      %v256 = vld [vmem:[%s206 + $0x14] sm:$0x1]
      %v257 = vld [vmem:[%s206 + $0x20] sm:$0x1]
      %v258 = vld [vmem:[%s206 + $0x2c] sm:$0x1]
      %v259 = vld [vmem:[%s206 + $0x38] sm:$0x1]
      %v260 = vld [vmem:[%s206 + $0x44] sm:$0x1]
      %v261 = vld [vmem:[%s206 + $0x50] sm:$0x1]
      %v262 = vld [vmem:[%s206 + $0x5c] sm:$0x1]
      %v263 = vld [vmem:[%s206 + $0x68] sm:$0x1]
      %v264 = vld [vmem:[%s206 + $0x74] sm:$0x1]
      %v265 = vld [vmem:[%s206 + $0x80] sm:$0x1]
      %v266 = vld [vmem:[%s206 + $0x8c] sm:$0x1]
      %v267 = vld [vmem:[%s206 + $0x98] sm:$0x1]
      %v268 = vld [vmem:[%s206 + $0xa4] sm:$0x1]
      %v269 = vld [vmem:[%s206 + $0xb0] sm:$0x1]
      %v270 = vld [vmem:[%s206 + $0xbc] sm:$0x1]
      %v271 = vld [vmem:[%s206] sm:$0xe]
      %v272 = vld [vmem:[%s206 + $0xc] sm:$0xe]
      %v273 = vld [vmem:[%s206 + $0x18] sm:$0xe]
      %v274 = vld [vmem:[%s206 + $0x24] sm:$0xe]
      %v275 = vld [vmem:[%s206 + $0x30] sm:$0xe]
      %v276 = vld [vmem:[%s206 + $0x3c] sm:$0xe]
      %v277 = vld [vmem:[%s206 + $0x48] sm:$0xe]
      %v278 = vld [vmem:[%s206 + $0x54] sm:$0xe]
      %v279 = vld [vmem:[%s206 + $0x60] sm:$0xe]
      %v280 = vld [vmem:[%s206 + $0x6c] sm:$0xe]
      %v281 = vld [vmem:[%s206 + $0x78] sm:$0xe]
      %v282 = vld [vmem:[%s206 + $0x84] sm:$0xe]
      %v283 = vld [vmem:[%s206 + $0x90] sm:$0xe]
      %v284 = vld [vmem:[%s206 + $0x9c] sm:$0xe]
      %v285 = vld [vmem:[%s206 + $0xa8] sm:$0xe]
      %v286 = vld [vmem:[%s206 + $0xb4] sm:$0xe]
      %v287 = vld [vmem:[%s206 + $0x8] sm:$0x3]
      %v288 = vld [vmem:[%s206 + $0x14] sm:$0x3]
      %v289 = vld [vmem:[%s206 + $0x20] sm:$0x3]
      %v290 = vld [vmem:[%s206 + $0x2c] sm:$0x3]
      %v291 = vld [vmem:[%s206 + $0x38] sm:$0x3]
      %v292 = vld [vmem:[%s206 + $0x44] sm:$0x3]
      %v293 = vld [vmem:[%s206 + $0x50] sm:$0x3]
      %v294 = vld [vmem:[%s206 + $0x5c] sm:$0x3]
      %v295 = vld [vmem:[%s206 + $0x68] sm:$0x3]
      %v296 = vld [vmem:[%s206 + $0x74] sm:$0x3]
      %v297 = vld [vmem:[%s206 + $0x80] sm:$0x3]
      %v298 = vld [vmem:[%s206 + $0x8c] sm:$0x3]
      %v299 = vld [vmem:[%s206 + $0x98] sm:$0x3]
      %v300 = vld [vmem:[%s206 + $0xa4] sm:$0x3]
      %v301 = vld [vmem:[%s206 + $0xb0] sm:$0x3]
      %v302 = vld [vmem:[%s206 + $0xbc] sm:$0x3]
      %s303 = scalar_lea.vmem %s206, 12
      %v304 = vld [vmem:[%s303] sm:$0xf]
      %v305 = vld [vmem:[%s303 + $0x4] sm:$0xf]
      %v306 = vld [vmem:[%s303 + $0xc] sm:$0xf]
      %v307 = vld [vmem:[%s303 + $0x10] sm:$0xf]
      %v308 = vld [vmem:[%s303 + $0x18] sm:$0xf]
      %v309 = vld [vmem:[%s303 + $0x1c] sm:$0xf]
      %v310 = vld [vmem:[%s303 + $0x24] sm:$0xf]
      %v311 = vld [vmem:[%s303 + $0x28] sm:$0xf]
      %v312 = vld [vmem:[%s303 + $0x30] sm:$0xf]
      %v313 = vld [vmem:[%s303 + $0x34] sm:$0xf]
      %v314 = vld [vmem:[%s303 + $0x3c] sm:$0xf]
      %v315 = vld [vmem:[%s303 + $0x40] sm:$0xf]
      %v316 = vld [vmem:[%s303 + $0x48] sm:$0xf]
      %v317 = vld [vmem:[%s303 + $0x4c] sm:$0xf]
      %v318 = vld [vmem:[%s303 + $0x54] sm:$0xf]
      %v319 = vld [vmem:[%s303 + $0x58] sm:$0xf]
      %v320 = vld [vmem:[%s303 + $0x60] sm:$0xf]
      %v321 = vld [vmem:[%s303 + $0x64] sm:$0xf]
      %v322 = vld [vmem:[%s303 + $0x6c] sm:$0xf]
      %v323 = vld [vmem:[%s303 + $0x70] sm:$0xf]
      %v324 = vld [vmem:[%s303 + $0x78] sm:$0xf]
      %v325 = vld [vmem:[%s303 + $0x7c] sm:$0xf]
      %v326 = vld [vmem:[%s303 + $0x84] sm:$0xf]
      %v327 = vld [vmem:[%s303 + $0x88] sm:$0xf]
      %v328 = vld [vmem:[%s303 + $0x90] sm:$0xf]
      %v329 = vld [vmem:[%s303 + $0x94] sm:$0xf]
      %v330 = vld [vmem:[%s303 + $0x9c] sm:$0xf]
      %v331 = vld [vmem:[%s303 + $0xa0] sm:$0xf]
      %v332 = vld [vmem:[%s303 + $0xa8] sm:$0xf]
      %v333 = vld [vmem:[%s303 + $0xac] sm:$0xf]
      %v334 = vld [vmem:[%s303 + $0xb4] sm:$0xf]
      %v335 = vld [vmem:[%s303 + $0xb8] sm:$0xf]
      %v336 = vld [vmem:[%s303 + $0x8] sm:$0x1]
      %v337 = vld [vmem:[%s303 + $0x14] sm:$0x1]
      %v338 = vld [vmem:[%s303 + $0x20] sm:$0x1]
      %v339 = vld [vmem:[%s303 + $0x2c] sm:$0x1]
      %v340 = vld [vmem:[%s303 + $0x38] sm:$0x1]
      %v341 = vld [vmem:[%s303 + $0x44] sm:$0x1]
      %v342 = vld [vmem:[%s303 + $0x50] sm:$0x1]
      %v343 = vld [vmem:[%s303 + $0x5c] sm:$0x1]
      %v344 = vld [vmem:[%s303 + $0x68] sm:$0x1]
      %v345 = vld [vmem:[%s303 + $0x74] sm:$0x1]
      %v346 = vld [vmem:[%s303 + $0x80] sm:$0x1]
      %v347 = vld [vmem:[%s303 + $0x8c] sm:$0x1]
      %v348 = vld [vmem:[%s303 + $0x98] sm:$0x1]
      %v349 = vld [vmem:[%s303 + $0xa4] sm:$0x1]
      %v350 = vld [vmem:[%s303 + $0xb0] sm:$0x1]
      %v351 = vld [vmem:[%s303 + $0xbc] sm:$0x1]
      %v352 = vld [vmem:[%s303] sm:$0xe]
      %v353 = vld [vmem:[%s303 + $0xc] sm:$0xe]
      %v354 = vld [vmem:[%s303 + $0x18] sm:$0xe]
      %v355 = vld [vmem:[%s303 + $0x24] sm:$0xe]
      %v356 = vld [vmem:[%s303 + $0x30] sm:$0xe]
      %v357 = vld [vmem:[%s303 + $0x3c] sm:$0xe]
      %v358 = vld [vmem:[%s303 + $0x48] sm:$0xe]
      %v359 = vld [vmem:[%s303 + $0x54] sm:$0xe]
      %v360 = vld [vmem:[%s303 + $0x60] sm:$0xe]
      %v361 = vld [vmem:[%s303 + $0x6c] sm:$0xe]
      %v362 = vld [vmem:[%s303 + $0x78] sm:$0xe]
      %v363 = vld [vmem:[%s303 + $0x84] sm:$0xe]
      %v364 = vld [vmem:[%s303 + $0x90] sm:$0xe]
      %v365 = vld [vmem:[%s303 + $0x9c] sm:$0xe]
      %v366 = vld [vmem:[%s303 + $0xa8] sm:$0xe]
      %v367 = vld [vmem:[%s303 + $0xb4] sm:$0xe]
      %v368 = vld [vmem:[%s303 + $0x8] sm:$0x3]
      %v369 = vld [vmem:[%s303 + $0x14] sm:$0x3]
      %v370 = vld [vmem:[%s303 + $0x20] sm:$0x3]
      %v371 = vld [vmem:[%s303 + $0x2c] sm:$0x3]
      %v372 = vld [vmem:[%s303 + $0x38] sm:$0x3]
      %v373 = vld [vmem:[%s303 + $0x44] sm:$0x3]
      %v374 = vld [vmem:[%s303 + $0x50] sm:$0x3]
      %v375 = vld [vmem:[%s303 + $0x5c] sm:$0x3]
      %v376 = vld [vmem:[%s303 + $0x68] sm:$0x3]
      %v377 = vld [vmem:[%s303 + $0x74] sm:$0x3]
      %v378 = vld [vmem:[%s303 + $0x80] sm:$0x3]
      %v379 = vld [vmem:[%s303 + $0x8c] sm:$0x3]
      %v380 = vld [vmem:[%s303 + $0x98] sm:$0x3]
      %v381 = vld [vmem:[%s303 + $0xa4] sm:$0x3]
      %v382 = vld [vmem:[%s303 + $0xb0] sm:$0x3]
      %v383 = vld [vmem:[%s303 + $0xbc] sm:$0x3]
      %s384 = scalar_lea.vmem %s206, 24
      %v385 = vld [vmem:[%s384] sm:$0xf]
      %v386 = vld [vmem:[%s384 + $0x4] sm:$0xf]
      %v387 = vld [vmem:[%s384 + $0xc] sm:$0xf]
      %v388 = vld [vmem:[%s384 + $0x10] sm:$0xf]
      %v389 = vld [vmem:[%s384 + $0x18] sm:$0xf]
      %v390 = vld [vmem:[%s384 + $0x1c] sm:$0xf]
      %v391 = vld [vmem:[%s384 + $0x24] sm:$0xf]
      %v392 = vld [vmem:[%s384 + $0x28] sm:$0xf]
      %v393 = vld [vmem:[%s384 + $0x30] sm:$0xf]
      %v394 = vld [vmem:[%s384 + $0x34] sm:$0xf]
      %v395 = vld [vmem:[%s384 + $0x3c] sm:$0xf]
      %v396 = vld [vmem:[%s384 + $0x40] sm:$0xf]
      %v397 = vld [vmem:[%s384 + $0x48] sm:$0xf]
      %v398 = vld [vmem:[%s384 + $0x4c] sm:$0xf]
      %v399 = vld [vmem:[%s384 + $0x54] sm:$0xf]
      %v400 = vld [vmem:[%s384 + $0x58] sm:$0xf]
      %v401 = vld [vmem:[%s384 + $0x60] sm:$0xf]
      %v402 = vld [vmem:[%s384 + $0x64] sm:$0xf]
      %v403 = vld [vmem:[%s384 + $0x6c] sm:$0xf]
      %v404 = vld [vmem:[%s384 + $0x70] sm:$0xf]
      %v405 = vld [vmem:[%s384 + $0x78] sm:$0xf]
      %v406 = vld [vmem:[%s384 + $0x7c] sm:$0xf]
      %v407 = vld [vmem:[%s384 + $0x84] sm:$0xf]
      %v408 = vld [vmem:[%s384 + $0x88] sm:$0xf]
      %v409 = vld [vmem:[%s384 + $0x90] sm:$0xf]
      %v410 = vld [vmem:[%s384 + $0x94] sm:$0xf]
      %v411 = vld [vmem:[%s384 + $0x9c] sm:$0xf]
      %v412 = vld [vmem:[%s384 + $0xa0] sm:$0xf]
      %v413 = vld [vmem:[%s384 + $0xa8] sm:$0xf]
      %v414 = vld [vmem:[%s384 + $0xac] sm:$0xf]
      %v415 = vld [vmem:[%s384 + $0xb4] sm:$0xf]
      %v416 = vld [vmem:[%s384 + $0xb8] sm:$0xf]
      %v417 = vld [vmem:[%s384 + $0x8] sm:$0x1]
      %v418 = vld [vmem:[%s384 + $0x14] sm:$0x1]
      %v419 = vld [vmem:[%s384 + $0x20] sm:$0x1]
      %v420 = vld [vmem:[%s384 + $0x2c] sm:$0x1]
      %v421 = vld [vmem:[%s384 + $0x38] sm:$0x1]
      %v422 = vld [vmem:[%s384 + $0x44] sm:$0x1]
      %v423 = vld [vmem:[%s384 + $0x50] sm:$0x1]
      %v424 = vld [vmem:[%s384 + $0x5c] sm:$0x1]
      %v425 = vld [vmem:[%s384 + $0x68] sm:$0x1]
      %v426 = vld [vmem:[%s384 + $0x74] sm:$0x1]
      %v427 = vld [vmem:[%s384 + $0x80] sm:$0x1]
      %v428 = vld [vmem:[%s384 + $0x8c] sm:$0x1]
      %v429 = vld [vmem:[%s384 + $0x98] sm:$0x1]
      %v430 = vld [vmem:[%s384 + $0xa4] sm:$0x1]
      %v431 = vld [vmem:[%s384 + $0xb0] sm:$0x1]
      %v432 = vld [vmem:[%s384 + $0xbc] sm:$0x1]
      %v433 = vld [vmem:[%s384] sm:$0xe]
      %v434 = vld [vmem:[%s384 + $0xc] sm:$0xe]
      %v435 = vld [vmem:[%s384 + $0x18] sm:$0xe]
      %v436 = vld [vmem:[%s384 + $0x24] sm:$0xe]
      %v437 = vld [vmem:[%s384 + $0x30] sm:$0xe]
      %v438 = vld [vmem:[%s384 + $0x3c] sm:$0xe]
      %v439 = vld [vmem:[%s384 + $0x48] sm:$0xe]
      %v440 = vld [vmem:[%s384 + $0x54] sm:$0xe]
      %v441 = vld [vmem:[%s384 + $0x60] sm:$0xe]
      %v442 = vld [vmem:[%s384 + $0x6c] sm:$0xe]
      %v443 = vld [vmem:[%s384 + $0x78] sm:$0xe]
      %v444 = vld [vmem:[%s384 + $0x84] sm:$0xe]
      %v445 = vld [vmem:[%s384 + $0x90] sm:$0xe]
      %v446 = vld [vmem:[%s384 + $0x9c] sm:$0xe]
      %v447 = vld [vmem:[%s384 + $0xa8] sm:$0xe]
      %v448 = vld [vmem:[%s384 + $0xb4] sm:$0xe]
      %v449 = vld [vmem:[%s384 + $0x8] sm:$0x3]
      %v450 = vld [vmem:[%s384 + $0x14] sm:$0x3]
      %v451 = vld [vmem:[%s384 + $0x20] sm:$0x3]
      %v452 = vld [vmem:[%s384 + $0x2c] sm:$0x3]
      %v453 = vld [vmem:[%s384 + $0x38] sm:$0x3]
      %v454 = vld [vmem:[%s384 + $0x44] sm:$0x3]
      %v455 = vld [vmem:[%s384 + $0x50] sm:$0x3]
      %v456 = vld [vmem:[%s384 + $0x5c] sm:$0x3]
      %v457 = vld [vmem:[%s384 + $0x68] sm:$0x3]
      %v458 = vld [vmem:[%s384 + $0x74] sm:$0x3]
      %v459 = vld [vmem:[%s384 + $0x80] sm:$0x3]
      %v460 = vld [vmem:[%s384 + $0x8c] sm:$0x3]
      %v461 = vld [vmem:[%s384 + $0x98] sm:$0x3]
      %v462 = vld [vmem:[%s384 + $0xa4] sm:$0x3]
      %v463 = vld [vmem:[%s384 + $0xb0] sm:$0x3]
      %v464 = vld [vmem:[%s384 + $0xbc] sm:$0x3]
      %s465 = scalar_lea.vmem %s206, 36
      %v466 = vld [vmem:[%s465] sm:$0xf]
      %v467 = vld [vmem:[%s465 + $0x4] sm:$0xf]
      %v468 = vld [vmem:[%s465 + $0xc] sm:$0xf]
      %v469 = vld [vmem:[%s465 + $0x10] sm:$0xf]
      %v470 = vld [vmem:[%s465 + $0x18] sm:$0xf]
      %v471 = vld [vmem:[%s465 + $0x1c] sm:$0xf]
      %v472 = vld [vmem:[%s465 + $0x24] sm:$0xf]
      %v473 = vld [vmem:[%s465 + $0x28] sm:$0xf]
      %v474 = vld [vmem:[%s465 + $0x30] sm:$0xf]
      %v475 = vld [vmem:[%s465 + $0x34] sm:$0xf]
      %v476 = vld [vmem:[%s465 + $0x3c] sm:$0xf]
      %v477 = vld [vmem:[%s465 + $0x40] sm:$0xf]
      %v478 = vld [vmem:[%s465 + $0x48] sm:$0xf]
      %v479 = vld [vmem:[%s465 + $0x4c] sm:$0xf]
      %v480 = vld [vmem:[%s465 + $0x54] sm:$0xf]
      %v481 = vld [vmem:[%s465 + $0x58] sm:$0xf]
      %v482 = vld [vmem:[%s465 + $0x60] sm:$0xf]
      %v483 = vld [vmem:[%s465 + $0x64] sm:$0xf]
      %v484 = vld [vmem:[%s465 + $0x6c] sm:$0xf]
      %v485 = vld [vmem:[%s465 + $0x70] sm:$0xf]
      %v486 = vld [vmem:[%s465 + $0x78] sm:$0xf]
      %v487 = vld [vmem:[%s465 + $0x7c] sm:$0xf]
      %v488 = vld [vmem:[%s465 + $0x84] sm:$0xf]
      %v489 = vld [vmem:[%s465 + $0x88] sm:$0xf]
      %v490 = vld [vmem:[%s465 + $0x90] sm:$0xf]
      %v491 = vld [vmem:[%s465 + $0x94] sm:$0xf]
      %v492 = vld [vmem:[%s465 + $0x9c] sm:$0xf]
      %v493 = vld [vmem:[%s465 + $0xa0] sm:$0xf]
      %v494 = vld [vmem:[%s465 + $0xa8] sm:$0xf]
      %v495 = vld [vmem:[%s465 + $0xac] sm:$0xf]
      %v496 = vld [vmem:[%s465 + $0xb4] sm:$0xf]
      %v497 = vld [vmem:[%s465 + $0xb8] sm:$0xf]
      %v498 = vld [vmem:[%s465 + $0x8] sm:$0x1]
      %v499 = vld [vmem:[%s465 + $0x14] sm:$0x1]
      %v500 = vld [vmem:[%s465 + $0x20] sm:$0x1]
      %v501 = vld [vmem:[%s465 + $0x2c] sm:$0x1]
      %v502 = vld [vmem:[%s465 + $0x38] sm:$0x1]
      %v503 = vld [vmem:[%s465 + $0x44] sm:$0x1]
      %v504 = vld [vmem:[%s465 + $0x50] sm:$0x1]
      %v505 = vld [vmem:[%s465 + $0x5c] sm:$0x1]
      %v506 = vld [vmem:[%s465 + $0x68] sm:$0x1]
      %v507 = vld [vmem:[%s465 + $0x74] sm:$0x1]
      %v508 = vld [vmem:[%s465 + $0x80] sm:$0x1]
      %v509 = vld [vmem:[%s465 + $0x8c] sm:$0x1]
      %v510 = vld [vmem:[%s465 + $0x98] sm:$0x1]
      %v511 = vld [vmem:[%s465 + $0xa4] sm:$0x1]
      %v512 = vld [vmem:[%s465 + $0xb0] sm:$0x1]
      %v513 = vld [vmem:[%s465 + $0xbc] sm:$0x1]
      %v514 = vld [vmem:[%s465] sm:$0xe]
      %v515 = vld [vmem:[%s465 + $0xc] sm:$0xe]
      %v516 = vld [vmem:[%s465 + $0x18] sm:$0xe]
      %v517 = vld [vmem:[%s465 + $0x24] sm:$0xe]
      %v518 = vld [vmem:[%s465 + $0x30] sm:$0xe]
      %v519 = vld [vmem:[%s465 + $0x3c] sm:$0xe]
      %v520 = vld [vmem:[%s465 + $0x48] sm:$0xe]
      %v521 = vld [vmem:[%s465 + $0x54] sm:$0xe]
      %v522 = vld [vmem:[%s465 + $0x60] sm:$0xe]
      %v523 = vld [vmem:[%s465 + $0x6c] sm:$0xe]
      %v524 = vld [vmem:[%s465 + $0x78] sm:$0xe]
      %v525 = vld [vmem:[%s465 + $0x84] sm:$0xe]
      %v526 = vld [vmem:[%s465 + $0x90] sm:$0xe]
      %v527 = vld [vmem:[%s465 + $0x9c] sm:$0xe]
      %v528 = vld [vmem:[%s465 + $0xa8] sm:$0xe]
      %v529 = vld [vmem:[%s465 + $0xb4] sm:$0xe]
      %v530 = vld [vmem:[%s465 + $0x8] sm:$0x3]
      %v531 = vld [vmem:[%s465 + $0x14] sm:$0x3]
      %v532 = vld [vmem:[%s465 + $0x20] sm:$0x3]
      %v533 = vld [vmem:[%s465 + $0x2c] sm:$0x3]
      %v534 = vld [vmem:[%s465 + $0x38] sm:$0x3]
      %v535 = vld [vmem:[%s465 + $0x44] sm:$0x3]
      %v536 = vld [vmem:[%s465 + $0x50] sm:$0x3]
      %v537 = vld [vmem:[%s465 + $0x5c] sm:$0x3]
      %v538 = vld [vmem:[%s465 + $0x68] sm:$0x3]
      %v539 = vld [vmem:[%s465 + $0x74] sm:$0x3]
      %v540 = vld [vmem:[%s465 + $0x80] sm:$0x3]
      %v541 = vld [vmem:[%s465 + $0x8c] sm:$0x3]
      %v542 = vld [vmem:[%s465 + $0x98] sm:$0x3]
      %v543 = vld [vmem:[%s465 + $0xa4] sm:$0x3]
      %v544 = vld [vmem:[%s465 + $0xb0] sm:$0x3]
      %v545 = vld [vmem:[%s465 + $0xbc] sm:$0x3]
      %v578 = vunpack.c.l.b16 %v223
      %v579 = vunpack.c.l.b16 %v224
      %v580 = vunpack.c.l.b16 %v225
      %v581 = vunpack.c.l.b16 %v226
      %v582 = vunpack.c.l.b16 %v227
      %v583 = vunpack.c.l.b16 %v228
      %v584 = vunpack.c.l.b16 %v229
      %v585 = vunpack.c.l.b16 %v230
      %v586 = vunpack.c.l.b16 %v231
      %v587 = vunpack.c.l.b16 %v232
      %v588 = vunpack.c.l.b16 %v233
      %v589 = vunpack.c.l.b16 %v234
      %v590 = vunpack.c.l.b16 %v235
      %v591 = vunpack.c.l.b16 %v236
      %v592 = vunpack.c.l.b16 %v237
      %v593 = vunpack.c.l.b16 %v238
      %v594 = vunpack.c.l.b16 %v239
      %v595 = vunpack.c.l.b16 %v240
      %v596 = vunpack.c.l.b16 %v241
      %v597 = vunpack.c.l.b16 %v242
      %v598 = vunpack.c.l.b16 %v243
      %v599 = vunpack.c.l.b16 %v244
      %v600 = vunpack.c.l.b16 %v245
      %v601 = vunpack.c.l.b16 %v246
      %v602 = vunpack.c.l.b16 %v247
      %v603 = vunpack.c.l.b16 %v248
      %v604 = vunpack.c.l.b16 %v249
      %v605 = vunpack.c.l.b16 %v250
      %v606 = vunpack.c.l.b16 %v251
      %v607 = vunpack.c.l.b16 %v252
      %v608 = vunpack.c.l.b16 %v253
      %v609 = vunpack.c.l.b16 %v254
      %v610 = vpack.c.b16 %v579, %v578
      %v611 = vpack.c.b16 %v581, %v580
      %v612 = vpack.c.b16 %v583, %v582
      %v613 = vpack.c.b16 %v585, %v584
      %v614 = vpack.c.b16 %v587, %v586
      %v615 = vpack.c.b16 %v589, %v588
      %v616 = vpack.c.b16 %v591, %v590
      %v617 = vpack.c.b16 %v593, %v592
      %v618 = vpack.c.b16 %v595, %v594
      %v619 = vpack.c.b16 %v597, %v596
      %v620 = vpack.c.b16 %v599, %v598
      %v621 = vpack.c.b16 %v601, %v600
      %v622 = vpack.c.b16 %v603, %v602
      %v623 = vpack.c.b16 %v605, %v604
      %v624 = vpack.c.b16 %v607, %v606
      %v625 = vpack.c.b16 %v609, %v608
      %v642 = vunpack.c.l.b16 %v255
      %v643 = vunpack.c.l.b16 %v256
      %v644 = vunpack.c.l.b16 %v257
      %v645 = vunpack.c.l.b16 %v258
      %v646 = vunpack.c.l.b16 %v259
      %v647 = vunpack.c.l.b16 %v260
      %v648 = vunpack.c.l.b16 %v261
      %v649 = vunpack.c.l.b16 %v262
      %v650 = vunpack.c.l.b16 %v263
      %v651 = vunpack.c.l.b16 %v264
      %v652 = vunpack.c.l.b16 %v265
      %v653 = vunpack.c.l.b16 %v266
      %v654 = vunpack.c.l.b16 %v267
      %v655 = vunpack.c.l.b16 %v268
      %v656 = vunpack.c.l.b16 %v269
      %v657 = vunpack.c.l.b16 %v270
      %v658 = vpack.c.b16 %v642, %v642
      %v659 = vpack.c.b16 %v643, %v643
      %v660 = vpack.c.b16 %v644, %v644
      %v661 = vpack.c.b16 %v645, %v645
      %v662 = vpack.c.b16 %v646, %v646
      %v663 = vpack.c.b16 %v647, %v647
      %v664 = vpack.c.b16 %v648, %v648
      %v665 = vpack.c.b16 %v649, %v649
      %v666 = vpack.c.b16 %v650, %v650
      %v667 = vpack.c.b16 %v651, %v651
      %v668 = vpack.c.b16 %v652, %v652
      %v669 = vpack.c.b16 %v653, %v653
      %v670 = vpack.c.b16 %v654, %v654
      %v671 = vpack.c.b16 %v655, %v655
      %v672 = vpack.c.b16 %v656, %v656
      %v673 = vpack.c.b16 %v657, %v657
      %vm674 = vsmask.f32 7424
      %v676 = vshrl.u32 %v610, 16
      %v678 = vshll.u32 %v610, 16
      %v680 = vrot.slane %v678, 1
      %v681 = vor.u32 %v676, %v680
      %v683 = vshll.u32 %v658, 16
      %v685 = vrot.slane %v683, 1
      %v686 = vsel %vm674, %v681, %v685
      %v688 = vshrl.u32 %v611, 16
      %v690 = vshll.u32 %v611, 16
      %v692 = vrot.slane %v690, 1
      %v693 = vor.u32 %v688, %v692
      %v695 = vshll.u32 %v659, 16
      %v697 = vrot.slane %v695, 1
      %v698 = vsel %vm674, %v693, %v697
      %v700 = vshrl.u32 %v612, 16
      %v702 = vshll.u32 %v612, 16
      %v704 = vrot.slane %v702, 1
      %v705 = vor.u32 %v700, %v704
      %v707 = vshll.u32 %v660, 16
      %v709 = vrot.slane %v707, 1
      %v710 = vsel %vm674, %v705, %v709
      %v712 = vshrl.u32 %v613, 16
      %v714 = vshll.u32 %v613, 16
      %v716 = vrot.slane %v714, 1
      %v717 = vor.u32 %v712, %v716
      %v719 = vshll.u32 %v661, 16
      %v721 = vrot.slane %v719, 1
      %v722 = vsel %vm674, %v717, %v721
      %v724 = vshrl.u32 %v614, 16
      %v726 = vshll.u32 %v614, 16
      %v728 = vrot.slane %v726, 1
      %v729 = vor.u32 %v724, %v728
      %v731 = vshll.u32 %v662, 16
      %v733 = vrot.slane %v731, 1
      %v734 = vsel %vm674, %v729, %v733
      %v736 = vshrl.u32 %v615, 16
      %v738 = vshll.u32 %v615, 16
      %v740 = vrot.slane %v738, 1
      %v741 = vor.u32 %v736, %v740
      %v743 = vshll.u32 %v663, 16
      %v745 = vrot.slane %v743, 1
      %v746 = vsel %vm674, %v741, %v745
      %v748 = vshrl.u32 %v616, 16
      %v750 = vshll.u32 %v616, 16
      %v752 = vrot.slane %v750, 1
      %v753 = vor.u32 %v748, %v752
      %v755 = vshll.u32 %v664, 16
      %v757 = vrot.slane %v755, 1
      %v758 = vsel %vm674, %v753, %v757
      %v760 = vshrl.u32 %v617, 16
      %v762 = vshll.u32 %v617, 16
      %v764 = vrot.slane %v762, 1
      %v765 = vor.u32 %v760, %v764
      %v767 = vshll.u32 %v665, 16
      %v769 = vrot.slane %v767, 1
      %v770 = vsel %vm674, %v765, %v769
      %v772 = vshrl.u32 %v618, 16
      %v774 = vshll.u32 %v618, 16
      %v776 = vrot.slane %v774, 1
      %v777 = vor.u32 %v772, %v776
      %v779 = vshll.u32 %v666, 16
      %v781 = vrot.slane %v779, 1
      %v782 = vsel %vm674, %v777, %v781
      %v784 = vshrl.u32 %v619, 16
      %v786 = vshll.u32 %v619, 16
      %v788 = vrot.slane %v786, 1
      %v789 = vor.u32 %v784, %v788
      %v791 = vshll.u32 %v667, 16
      %v793 = vrot.slane %v791, 1
      %v794 = vsel %vm674, %v789, %v793
      %v796 = vshrl.u32 %v620, 16
      %v798 = vshll.u32 %v620, 16
      %v800 = vrot.slane %v798, 1
      %v801 = vor.u32 %v796, %v800
      %v803 = vshll.u32 %v668, 16
      %v805 = vrot.slane %v803, 1
      %v806 = vsel %vm674, %v801, %v805
      %v808 = vshrl.u32 %v621, 16
      %v810 = vshll.u32 %v621, 16
      %v812 = vrot.slane %v810, 1
      %v813 = vor.u32 %v808, %v812
      %v815 = vshll.u32 %v669, 16
      %v817 = vrot.slane %v815, 1
      %v818 = vsel %vm674, %v813, %v817
      %v820 = vshrl.u32 %v622, 16
      %v822 = vshll.u32 %v622, 16
      %v824 = vrot.slane %v822, 1
      %v825 = vor.u32 %v820, %v824
      %v827 = vshll.u32 %v670, 16
      %v829 = vrot.slane %v827, 1
      %v830 = vsel %vm674, %v825, %v829
      %v832 = vshrl.u32 %v623, 16
      %v834 = vshll.u32 %v623, 16
      %v836 = vrot.slane %v834, 1
      %v837 = vor.u32 %v832, %v836
      %v839 = vshll.u32 %v671, 16
      %v841 = vrot.slane %v839, 1
      %v842 = vsel %vm674, %v837, %v841
      %v844 = vshrl.u32 %v624, 16
      %v846 = vshll.u32 %v624, 16
      %v848 = vrot.slane %v846, 1
      %v849 = vor.u32 %v844, %v848
      %v851 = vshll.u32 %v672, 16
      %v853 = vrot.slane %v851, 1
      %v854 = vsel %vm674, %v849, %v853
      %v856 = vshrl.u32 %v625, 16
      %v858 = vshll.u32 %v625, 16
      %v860 = vrot.slane %v858, 1
      %v861 = vor.u32 %v856, %v860
      %v863 = vshll.u32 %v673, 16
      %v865 = vrot.slane %v863, 1
      %v866 = vsel %vm674, %v861, %v865
      %867 = vrot.lane.b32.xlu0 %v686, 16
      %v868 = vpop.permute.xlu0 %867
      %869 = vrot.lane.b32.xlu0 %v698, 16
      %v870 = vpop.permute.xlu0 %869
      %871 = vrot.lane.b32.xlu0 %v710, 16
      %v872 = vpop.permute.xlu0 %871
      %873 = vrot.lane.b32.xlu0 %v722, 16
      %v874 = vpop.permute.xlu0 %873
      %875 = vrot.lane.b32.xlu0 %v734, 16
      %v876 = vpop.permute.xlu0 %875
      %877 = vrot.lane.b32.xlu0 %v746, 16
      %v878 = vpop.permute.xlu0 %877
      %879 = vrot.lane.b32.xlu0 %v758, 16
      %v880 = vpop.permute.xlu0 %879
      %881 = vrot.lane.b32.xlu0 %v770, 16
      %v882 = vpop.permute.xlu0 %881
      %883 = vrot.lane.b32.xlu0 %v782, 16
      %v884 = vpop.permute.xlu0 %883
      %885 = vrot.lane.b32.xlu0 %v794, 16
      %v886 = vpop.permute.xlu0 %885
      %887 = vrot.lane.b32.xlu0 %v806, 16
      %v888 = vpop.permute.xlu0 %887
      %889 = vrot.lane.b32.xlu0 %v818, 16
      %v890 = vpop.permute.xlu0 %889
      %891 = vrot.lane.b32.xlu0 %v830, 16
      %v892 = vpop.permute.xlu0 %891
      %893 = vrot.lane.b32.xlu0 %v842, 16
      %v894 = vpop.permute.xlu0 %893
      %895 = vrot.lane.b32.xlu0 %v854, 16
      %v896 = vpop.permute.xlu0 %895
      %897 = vrot.lane.b32.xlu0 %v866, 16
      %v898 = vpop.permute.xlu0 %897
      %v915 = vunpack.c.l.b16 %v271
      %v916 = vunpack.c.l.b16 %v272
      %v917 = vunpack.c.l.b16 %v273
      %v918 = vunpack.c.l.b16 %v274
      %v919 = vunpack.c.l.b16 %v275
      %v920 = vunpack.c.l.b16 %v276
      %v921 = vunpack.c.l.b16 %v277
      %v922 = vunpack.c.l.b16 %v278
      %v923 = vunpack.c.l.b16 %v279
      %v924 = vunpack.c.l.b16 %v280
      %v925 = vunpack.c.l.b16 %v281
      %v926 = vunpack.c.l.b16 %v282
      %v927 = vunpack.c.l.b16 %v283
      %v928 = vunpack.c.l.b16 %v284
      %v929 = vunpack.c.l.b16 %v285
      %v930 = vunpack.c.l.b16 %v286
      %v931 = vpack.c.b16 %v579, %v915
      %v932 = vpack.c.b16 %v581, %v916
      %v933 = vpack.c.b16 %v583, %v917
      %v934 = vpack.c.b16 %v585, %v918
      %v935 = vpack.c.b16 %v587, %v919
      %v936 = vpack.c.b16 %v589, %v920
      %v937 = vpack.c.b16 %v591, %v921
      %v938 = vpack.c.b16 %v593, %v922
      %v939 = vpack.c.b16 %v595, %v923
      %v940 = vpack.c.b16 %v597, %v924
      %v941 = vpack.c.b16 %v599, %v925
      %v942 = vpack.c.b16 %v601, %v926
      %v943 = vpack.c.b16 %v603, %v927
      %v944 = vpack.c.b16 %v605, %v928
      %v945 = vpack.c.b16 %v607, %v929
      %v946 = vpack.c.b16 %v609, %v930
      %vm947 = vcmask 1046528
      %v948 = vrot.slane %v931, 1
      %v949 = vrot.slane %v658, 1
      %v950 = vsel %vm947, %v948, %v949
      %v951 = vrot.slane %v932, 1
      %v952 = vrot.slane %v659, 1
      %v953 = vsel %vm947, %v951, %v952
      %v954 = vrot.slane %v933, 1
      %v955 = vrot.slane %v660, 1
      %v956 = vsel %vm947, %v954, %v955
      %v957 = vrot.slane %v934, 1
      %v958 = vrot.slane %v661, 1
      %v959 = vsel %vm947, %v957, %v958
      %v960 = vrot.slane %v935, 1
      %v961 = vrot.slane %v662, 1
      %v962 = vsel %vm947, %v960, %v961
      %v963 = vrot.slane %v936, 1
      %v964 = vrot.slane %v663, 1
      %v965 = vsel %vm947, %v963, %v964
      %v966 = vrot.slane %v937, 1
      %v967 = vrot.slane %v664, 1
      %v968 = vsel %vm947, %v966, %v967
      %v969 = vrot.slane %v938, 1
      %v970 = vrot.slane %v665, 1
      %v971 = vsel %vm947, %v969, %v970
      %v972 = vrot.slane %v939, 1
      %v973 = vrot.slane %v666, 1
      %v974 = vsel %vm947, %v972, %v973
      %v975 = vrot.slane %v940, 1
      %v976 = vrot.slane %v667, 1
      %v977 = vsel %vm947, %v975, %v976
      %v978 = vrot.slane %v941, 1
      %v979 = vrot.slane %v668, 1
      %v980 = vsel %vm947, %v978, %v979
      %v981 = vrot.slane %v942, 1
      %v982 = vrot.slane %v669, 1
      %v983 = vsel %vm947, %v981, %v982
      %v984 = vrot.slane %v943, 1
      %v985 = vrot.slane %v670, 1
      %v986 = vsel %vm947, %v984, %v985
      %v987 = vrot.slane %v944, 1
      %v988 = vrot.slane %v671, 1
      %v989 = vsel %vm947, %v987, %v988
      %v990 = vrot.slane %v945, 1
      %v991 = vrot.slane %v672, 1
      %v992 = vsel %vm947, %v990, %v991
      %v993 = vrot.slane %v946, 1
      %v994 = vrot.slane %v673, 1
      %v995 = vsel %vm947, %v993, %v994
      %996 = vrot.lane.b32.xlu0 %v950, 32
      %v997 = vpop.permute.xlu0 %996
      %998 = vrot.lane.b32.xlu0 %v953, 32
      %v999 = vpop.permute.xlu0 %998
      %1000 = vrot.lane.b32.xlu0 %v956, 32
      %v1001 = vpop.permute.xlu0 %1000
      %1002 = vrot.lane.b32.xlu0 %v959, 32
      %v1003 = vpop.permute.xlu0 %1002
      %1004 = vrot.lane.b32.xlu0 %v962, 32
      %v1005 = vpop.permute.xlu0 %1004
      %1006 = vrot.lane.b32.xlu0 %v965, 32
      %v1007 = vpop.permute.xlu0 %1006
      %1008 = vrot.lane.b32.xlu0 %v968, 32
      %v1009 = vpop.permute.xlu0 %1008
      %1010 = vrot.lane.b32.xlu0 %v971, 32
      %v1011 = vpop.permute.xlu0 %1010
      %1012 = vrot.lane.b32.xlu0 %v974, 32
      %v1013 = vpop.permute.xlu0 %1012
      %1014 = vrot.lane.b32.xlu0 %v977, 32
      %v1015 = vpop.permute.xlu0 %1014
      %1016 = vrot.lane.b32.xlu0 %v980, 32
      %v1017 = vpop.permute.xlu0 %1016
      %1018 = vrot.lane.b32.xlu0 %v983, 32
      %v1019 = vpop.permute.xlu0 %1018
      %1020 = vrot.lane.b32.xlu0 %v986, 32
      %v1021 = vpop.permute.xlu0 %1020
      %1022 = vrot.lane.b32.xlu0 %v989, 32
      %v1023 = vpop.permute.xlu0 %1022
      %1024 = vrot.lane.b32.xlu0 %v992, 32
      %v1025 = vpop.permute.xlu0 %1024
      %1026 = vrot.lane.b32.xlu0 %v995, 32
      %v1027 = vpop.permute.xlu0 %1026
      %v1044 = vunpack.c.l.b16 %v287
      %v1045 = vunpack.c.l.b16 %v288
      %v1046 = vunpack.c.l.b16 %v289
      %v1047 = vunpack.c.l.b16 %v290
      %v1048 = vunpack.c.l.b16 %v291
      %v1049 = vunpack.c.l.b16 %v292
      %v1050 = vunpack.c.l.b16 %v293
      %v1051 = vunpack.c.l.b16 %v294
      %v1052 = vunpack.c.l.b16 %v295
      %v1053 = vunpack.c.l.b16 %v296
      %v1054 = vunpack.c.l.b16 %v297
      %v1055 = vunpack.c.l.b16 %v298
      %v1056 = vunpack.c.l.b16 %v299
      %v1057 = vunpack.c.l.b16 %v300
      %v1058 = vunpack.c.l.b16 %v301
      %v1059 = vunpack.c.l.b16 %v302
      %v1060 = vpack.c.b16 %v1044, %v1044
      %v1061 = vpack.c.b16 %v1045, %v1045
      %v1062 = vpack.c.b16 %v1046, %v1046
      %v1063 = vpack.c.b16 %v1047, %v1047
      %v1064 = vpack.c.b16 %v1048, %v1048
      %v1065 = vpack.c.b16 %v1049, %v1049
      %v1066 = vpack.c.b16 %v1050, %v1050
      %v1067 = vpack.c.b16 %v1051, %v1051
      %v1068 = vpack.c.b16 %v1052, %v1052
      %v1069 = vpack.c.b16 %v1053, %v1053
      %v1070 = vpack.c.b16 %v1054, %v1054
      %v1071 = vpack.c.b16 %v1055, %v1055
      %v1072 = vpack.c.b16 %v1056, %v1056
      %v1073 = vpack.c.b16 %v1057, %v1057
      %v1074 = vpack.c.b16 %v1058, %v1058
      %v1075 = vpack.c.b16 %v1059, %v1059
      %vm1076 = vsmask.f32 6400
      %v1078 = vshrl.u32 %v931, 16
      %v1080 = vrot.slane %v1078, 1
      %v1081 = vshll.u32 %v931, 16
      %v1083 = vrot.slane %v1081, 2
      %v1084 = vor.u32 %v1080, %v1083
      %v1086 = vshrl.u32 %v1060, 16
      %v1088 = vrot.slane %v1086, 1
      %v1089 = vshll.u32 %v1060, 16
      %v1091 = vrot.slane %v1089, 2
      %v1092 = vor.u32 %v1088, %v1091
      %v1093 = vsel %vm1076, %v1084, %v1092
      %v1095 = vshrl.u32 %v932, 16
      %v1097 = vrot.slane %v1095, 1
      %v1098 = vshll.u32 %v932, 16
      %v1100 = vrot.slane %v1098, 2
      %v1101 = vor.u32 %v1097, %v1100
      %v1103 = vshrl.u32 %v1061, 16
      %v1105 = vrot.slane %v1103, 1
      %v1106 = vshll.u32 %v1061, 16
      %v1108 = vrot.slane %v1106, 2
      %v1109 = vor.u32 %v1105, %v1108
      %v1110 = vsel %vm1076, %v1101, %v1109
      %v1112 = vshrl.u32 %v933, 16
      %v1114 = vrot.slane %v1112, 1
      %v1115 = vshll.u32 %v933, 16
      %v1117 = vrot.slane %v1115, 2
      %v1118 = vor.u32 %v1114, %v1117
      %v1120 = vshrl.u32 %v1062, 16
      %v1122 = vrot.slane %v1120, 1
      %v1123 = vshll.u32 %v1062, 16
      %v1125 = vrot.slane %v1123, 2
      %v1126 = vor.u32 %v1122, %v1125
      %v1127 = vsel %vm1076, %v1118, %v1126
      %v1129 = vshrl.u32 %v934, 16
      %v1131 = vrot.slane %v1129, 1
      %v1132 = vshll.u32 %v934, 16
      %v1134 = vrot.slane %v1132, 2
      %v1135 = vor.u32 %v1131, %v1134
      %v1137 = vshrl.u32 %v1063, 16
      %v1139 = vrot.slane %v1137, 1
      %v1140 = vshll.u32 %v1063, 16
      %v1142 = vrot.slane %v1140, 2
      %v1143 = vor.u32 %v1139, %v1142
      %v1144 = vsel %vm1076, %v1135, %v1143
      %v1146 = vshrl.u32 %v935, 16
      %v1148 = vrot.slane %v1146, 1
      %v1149 = vshll.u32 %v935, 16
      %v1151 = vrot.slane %v1149, 2
      %v1152 = vor.u32 %v1148, %v1151
      %v1154 = vshrl.u32 %v1064, 16
      %v1156 = vrot.slane %v1154, 1
      %v1157 = vshll.u32 %v1064, 16
      %v1159 = vrot.slane %v1157, 2
      %v1160 = vor.u32 %v1156, %v1159
      %v1161 = vsel %vm1076, %v1152, %v1160
      %v1163 = vshrl.u32 %v936, 16
      %v1165 = vrot.slane %v1163, 1
      %v1166 = vshll.u32 %v936, 16
      %v1168 = vrot.slane %v1166, 2
      %v1169 = vor.u32 %v1165, %v1168
      %v1171 = vshrl.u32 %v1065, 16
      %v1173 = vrot.slane %v1171, 1
      %v1174 = vshll.u32 %v1065, 16
      %v1176 = vrot.slane %v1174, 2
      %v1177 = vor.u32 %v1173, %v1176
      %v1178 = vsel %vm1076, %v1169, %v1177
      %v1180 = vshrl.u32 %v937, 16
      %v1182 = vrot.slane %v1180, 1
      %v1183 = vshll.u32 %v937, 16
      %v1185 = vrot.slane %v1183, 2
      %v1186 = vor.u32 %v1182, %v1185
      %v1188 = vshrl.u32 %v1066, 16
      %v1190 = vrot.slane %v1188, 1
      %v1191 = vshll.u32 %v1066, 16
      %v1193 = vrot.slane %v1191, 2
      %v1194 = vor.u32 %v1190, %v1193
      %v1195 = vsel %vm1076, %v1186, %v1194
      %v1197 = vshrl.u32 %v938, 16
      %v1199 = vrot.slane %v1197, 1
      %v1200 = vshll.u32 %v938, 16
      %v1202 = vrot.slane %v1200, 2
      %v1203 = vor.u32 %v1199, %v1202
      %v1205 = vshrl.u32 %v1067, 16
      %v1207 = vrot.slane %v1205, 1
      %v1208 = vshll.u32 %v1067, 16
      %v1210 = vrot.slane %v1208, 2
      %v1211 = vor.u32 %v1207, %v1210
      %v1212 = vsel %vm1076, %v1203, %v1211
      %v1214 = vshrl.u32 %v939, 16
      %v1216 = vrot.slane %v1214, 1
      %v1217 = vshll.u32 %v939, 16
      %v1219 = vrot.slane %v1217, 2
      %v1220 = vor.u32 %v1216, %v1219
      %v1222 = vshrl.u32 %v1068, 16
      %v1224 = vrot.slane %v1222, 1
      %v1225 = vshll.u32 %v1068, 16
      %v1227 = vrot.slane %v1225, 2
      %v1228 = vor.u32 %v1224, %v1227
      %v1229 = vsel %vm1076, %v1220, %v1228
      %v1231 = vshrl.u32 %v940, 16
      %v1233 = vrot.slane %v1231, 1
      %v1234 = vshll.u32 %v940, 16
      %v1236 = vrot.slane %v1234, 2
      %v1237 = vor.u32 %v1233, %v1236
      %v1239 = vshrl.u32 %v1069, 16
      %v1241 = vrot.slane %v1239, 1
      %v1242 = vshll.u32 %v1069, 16
      %v1244 = vrot.slane %v1242, 2
      %v1245 = vor.u32 %v1241, %v1244
      %v1246 = vsel %vm1076, %v1237, %v1245
      %v1248 = vshrl.u32 %v941, 16
      %v1250 = vrot.slane %v1248, 1
      %v1251 = vshll.u32 %v941, 16
      %v1253 = vrot.slane %v1251, 2
      %v1254 = vor.u32 %v1250, %v1253
      %v1256 = vshrl.u32 %v1070, 16
      %v1258 = vrot.slane %v1256, 1
      %v1259 = vshll.u32 %v1070, 16
      %v1261 = vrot.slane %v1259, 2
      %v1262 = vor.u32 %v1258, %v1261
      %v1263 = vsel %vm1076, %v1254, %v1262
      %v1265 = vshrl.u32 %v942, 16
      %v1267 = vrot.slane %v1265, 1
      %v1268 = vshll.u32 %v942, 16
      %v1270 = vrot.slane %v1268, 2
      %v1271 = vor.u32 %v1267, %v1270
      %v1273 = vshrl.u32 %v1071, 16
      %v1275 = vrot.slane %v1273, 1
      %v1276 = vshll.u32 %v1071, 16
      %v1278 = vrot.slane %v1276, 2
      %v1279 = vor.u32 %v1275, %v1278
      %v1280 = vsel %vm1076, %v1271, %v1279
      %v1282 = vshrl.u32 %v943, 16
      %v1284 = vrot.slane %v1282, 1
      %v1285 = vshll.u32 %v943, 16
      %v1287 = vrot.slane %v1285, 2
      %v1288 = vor.u32 %v1284, %v1287
      %v1290 = vshrl.u32 %v1072, 16
      %v1292 = vrot.slane %v1290, 1
      %v1293 = vshll.u32 %v1072, 16
      %v1295 = vrot.slane %v1293, 2
      %v1296 = vor.u32 %v1292, %v1295
      %v1297 = vsel %vm1076, %v1288, %v1296
      %v1299 = vshrl.u32 %v944, 16
      %v1301 = vrot.slane %v1299, 1
      %v1302 = vshll.u32 %v944, 16
      %v1304 = vrot.slane %v1302, 2
      %v1305 = vor.u32 %v1301, %v1304
      %v1307 = vshrl.u32 %v1073, 16
      %v1309 = vrot.slane %v1307, 1
      %v1310 = vshll.u32 %v1073, 16
      %v1312 = vrot.slane %v1310, 2
      %v1313 = vor.u32 %v1309, %v1312
      %v1314 = vsel %vm1076, %v1305, %v1313
      %v1316 = vshrl.u32 %v945, 16
      %v1318 = vrot.slane %v1316, 1
      %v1319 = vshll.u32 %v945, 16
      %v1321 = vrot.slane %v1319, 2
      %v1322 = vor.u32 %v1318, %v1321
      %v1324 = vshrl.u32 %v1074, 16
      %v1326 = vrot.slane %v1324, 1
      %v1327 = vshll.u32 %v1074, 16
      %v1329 = vrot.slane %v1327, 2
      %v1330 = vor.u32 %v1326, %v1329
      %v1331 = vsel %vm1076, %v1322, %v1330
      %v1333 = vshrl.u32 %v946, 16
      %v1335 = vrot.slane %v1333, 1
      %v1336 = vshll.u32 %v946, 16
      %v1338 = vrot.slane %v1336, 2
      %v1339 = vor.u32 %v1335, %v1338
      %v1341 = vshrl.u32 %v1075, 16
      %v1343 = vrot.slane %v1341, 1
      %v1344 = vshll.u32 %v1075, 16
      %v1346 = vrot.slane %v1344, 2
      %v1347 = vor.u32 %v1343, %v1346
      %v1348 = vsel %vm1076, %v1339, %v1347
      %1349 = vrot.lane.b32.xlu0 %v1093, 48
      %v1350 = vpop.permute.xlu0 %1349
      %1351 = vrot.lane.b32.xlu0 %v1110, 48
      %v1352 = vpop.permute.xlu0 %1351
      %1353 = vrot.lane.b32.xlu0 %v1127, 48
      %v1354 = vpop.permute.xlu0 %1353
      %1355 = vrot.lane.b32.xlu0 %v1144, 48
      %v1356 = vpop.permute.xlu0 %1355
      %1357 = vrot.lane.b32.xlu0 %v1161, 48
      %v1358 = vpop.permute.xlu0 %1357
      %1359 = vrot.lane.b32.xlu0 %v1178, 48
      %v1360 = vpop.permute.xlu0 %1359
      %1361 = vrot.lane.b32.xlu0 %v1195, 48
      %v1362 = vpop.permute.xlu0 %1361
      %1363 = vrot.lane.b32.xlu0 %v1212, 48
      %v1364 = vpop.permute.xlu0 %1363
      %1365 = vrot.lane.b32.xlu0 %v1229, 48
      %v1366 = vpop.permute.xlu0 %1365
      %1367 = vrot.lane.b32.xlu0 %v1246, 48
      %v1368 = vpop.permute.xlu0 %1367
      %1369 = vrot.lane.b32.xlu0 %v1263, 48
      %v1370 = vpop.permute.xlu0 %1369
      %1371 = vrot.lane.b32.xlu0 %v1280, 48
      %v1372 = vpop.permute.xlu0 %1371
      %1373 = vrot.lane.b32.xlu0 %v1297, 48
      %v1374 = vpop.permute.xlu0 %1373
      %1375 = vrot.lane.b32.xlu0 %v1314, 48
      %v1376 = vpop.permute.xlu0 %1375
      %1377 = vrot.lane.b32.xlu0 %v1331, 48
      %v1378 = vpop.permute.xlu0 %1377
      %1379 = vrot.lane.b32.xlu0 %v1348, 48
      %v1380 = vpop.permute.xlu0 %1379
      %v1413 = vunpack.c.l.b16 %v304
      %v1414 = vunpack.c.l.b16 %v305
      %v1415 = vunpack.c.l.b16 %v306
      %v1416 = vunpack.c.l.b16 %v307
      %v1417 = vunpack.c.l.b16 %v308
      %v1418 = vunpack.c.l.b16 %v309
      %v1419 = vunpack.c.l.b16 %v310
      %v1420 = vunpack.c.l.b16 %v311
      %v1421 = vunpack.c.l.b16 %v312
      %v1422 = vunpack.c.l.b16 %v313
      %v1423 = vunpack.c.l.b16 %v314
      %v1424 = vunpack.c.l.b16 %v315
      %v1425 = vunpack.c.l.b16 %v316
      %v1426 = vunpack.c.l.b16 %v317
      %v1427 = vunpack.c.l.b16 %v318
      %v1428 = vunpack.c.l.b16 %v319
      %v1429 = vunpack.c.l.b16 %v320
      %v1430 = vunpack.c.l.b16 %v321
      %v1431 = vunpack.c.l.b16 %v322
      %v1432 = vunpack.c.l.b16 %v323
      %v1433 = vunpack.c.l.b16 %v324
      %v1434 = vunpack.c.l.b16 %v325
      %v1435 = vunpack.c.l.b16 %v326
      %v1436 = vunpack.c.l.b16 %v327
      %v1437 = vunpack.c.l.b16 %v328
      %v1438 = vunpack.c.l.b16 %v329
      %v1439 = vunpack.c.l.b16 %v330
      %v1440 = vunpack.c.l.b16 %v331
      %v1441 = vunpack.c.l.b16 %v332
      %v1442 = vunpack.c.l.b16 %v333
      %v1443 = vunpack.c.l.b16 %v334
      %v1444 = vunpack.c.l.b16 %v335
      %v1445 = vpack.c.b16 %v1414, %v1413
      %v1446 = vpack.c.b16 %v1416, %v1415
      %v1447 = vpack.c.b16 %v1418, %v1417
      %v1448 = vpack.c.b16 %v1420, %v1419
      %v1449 = vpack.c.b16 %v1422, %v1421
      %v1450 = vpack.c.b16 %v1424, %v1423
      %v1451 = vpack.c.b16 %v1426, %v1425
      %v1452 = vpack.c.b16 %v1428, %v1427
      %v1453 = vpack.c.b16 %v1430, %v1429
      %v1454 = vpack.c.b16 %v1432, %v1431
      %v1455 = vpack.c.b16 %v1434, %v1433
      %v1456 = vpack.c.b16 %v1436, %v1435
      %v1457 = vpack.c.b16 %v1438, %v1437
      %v1458 = vpack.c.b16 %v1440, %v1439
      %v1459 = vpack.c.b16 %v1442, %v1441
      %v1460 = vpack.c.b16 %v1444, %v1443
      %1461 = vrot.lane.b32.xlu0 %v1445, 64
      %v1462 = vpop.permute.xlu0 %1461
      %1463 = vrot.lane.b32.xlu0 %v1446, 64
      %v1464 = vpop.permute.xlu0 %1463
      %1465 = vrot.lane.b32.xlu0 %v1447, 64
      %v1466 = vpop.permute.xlu0 %1465
      %1467 = vrot.lane.b32.xlu0 %v1448, 64
      %v1468 = vpop.permute.xlu0 %1467
      %1469 = vrot.lane.b32.xlu0 %v1449, 64
      %v1470 = vpop.permute.xlu0 %1469
      %1471 = vrot.lane.b32.xlu0 %v1450, 64
      %v1472 = vpop.permute.xlu0 %1471
      %1473 = vrot.lane.b32.xlu0 %v1451, 64
      %v1474 = vpop.permute.xlu0 %1473
      %1475 = vrot.lane.b32.xlu0 %v1452, 64
      %v1476 = vpop.permute.xlu0 %1475
      %1477 = vrot.lane.b32.xlu0 %v1453, 64
      %v1478 = vpop.permute.xlu0 %1477
      %1479 = vrot.lane.b32.xlu0 %v1454, 64
      %v1480 = vpop.permute.xlu0 %1479
      %1481 = vrot.lane.b32.xlu0 %v1455, 64
      %v1482 = vpop.permute.xlu0 %1481
      %1483 = vrot.lane.b32.xlu0 %v1456, 64
      %v1484 = vpop.permute.xlu0 %1483
      %1485 = vrot.lane.b32.xlu0 %v1457, 64
      %v1486 = vpop.permute.xlu0 %1485
      %1487 = vrot.lane.b32.xlu0 %v1458, 64
      %v1488 = vpop.permute.xlu0 %1487
      %1489 = vrot.lane.b32.xlu0 %v1459, 64
      %v1490 = vpop.permute.xlu0 %1489
      %1491 = vrot.lane.b32.xlu0 %v1460, 64
      %v1492 = vpop.permute.xlu0 %1491
      %v1509 = vunpack.c.l.b16 %v336
      %v1510 = vunpack.c.l.b16 %v337
      %v1511 = vunpack.c.l.b16 %v338
      %v1512 = vunpack.c.l.b16 %v339
      %v1513 = vunpack.c.l.b16 %v340
      %v1514 = vunpack.c.l.b16 %v341
      %v1515 = vunpack.c.l.b16 %v342
      %v1516 = vunpack.c.l.b16 %v343
      %v1517 = vunpack.c.l.b16 %v344
      %v1518 = vunpack.c.l.b16 %v345
      %v1519 = vunpack.c.l.b16 %v346
      %v1520 = vunpack.c.l.b16 %v347
      %v1521 = vunpack.c.l.b16 %v348
      %v1522 = vunpack.c.l.b16 %v349
      %v1523 = vunpack.c.l.b16 %v350
      %v1524 = vunpack.c.l.b16 %v351
      %v1525 = vpack.c.b16 %v1509, %v1509
      %v1526 = vpack.c.b16 %v1510, %v1510
      %v1527 = vpack.c.b16 %v1511, %v1511
      %v1528 = vpack.c.b16 %v1512, %v1512
      %v1529 = vpack.c.b16 %v1513, %v1513
      %v1530 = vpack.c.b16 %v1514, %v1514
      %v1531 = vpack.c.b16 %v1515, %v1515
      %v1532 = vpack.c.b16 %v1516, %v1516
      %v1533 = vpack.c.b16 %v1517, %v1517
      %v1534 = vpack.c.b16 %v1518, %v1518
      %v1535 = vpack.c.b16 %v1519, %v1519
      %v1536 = vpack.c.b16 %v1520, %v1520
      %v1537 = vpack.c.b16 %v1521, %v1521
      %v1538 = vpack.c.b16 %v1522, %v1522
      %v1539 = vpack.c.b16 %v1523, %v1523
      %v1540 = vpack.c.b16 %v1524, %v1524
      %v1542 = vshrl.u32 %v1445, 16
      %v1544 = vshll.u32 %v1445, 16
      %v1546 = vrot.slane %v1544, 1
      %v1547 = vor.u32 %v1542, %v1546
      %v1549 = vshll.u32 %v1525, 16
      %v1551 = vrot.slane %v1549, 1
      %v1552 = vsel %vm674, %v1547, %v1551
      %v1554 = vshrl.u32 %v1446, 16
      %v1556 = vshll.u32 %v1446, 16
      %v1558 = vrot.slane %v1556, 1
      %v1559 = vor.u32 %v1554, %v1558
      %v1561 = vshll.u32 %v1526, 16
      %v1563 = vrot.slane %v1561, 1
      %v1564 = vsel %vm674, %v1559, %v1563
      %v1566 = vshrl.u32 %v1447, 16
      %v1568 = vshll.u32 %v1447, 16
      %v1570 = vrot.slane %v1568, 1
      %v1571 = vor.u32 %v1566, %v1570
      %v1573 = vshll.u32 %v1527, 16
      %v1575 = vrot.slane %v1573, 1
      %v1576 = vsel %vm674, %v1571, %v1575
      %v1578 = vshrl.u32 %v1448, 16
      %v1580 = vshll.u32 %v1448, 16
      %v1582 = vrot.slane %v1580, 1
      %v1583 = vor.u32 %v1578, %v1582
      %v1585 = vshll.u32 %v1528, 16
      %v1587 = vrot.slane %v1585, 1
      %v1588 = vsel %vm674, %v1583, %v1587
      %v1590 = vshrl.u32 %v1449, 16
      %v1592 = vshll.u32 %v1449, 16
      %v1594 = vrot.slane %v1592, 1
      %v1595 = vor.u32 %v1590, %v1594
      %v1597 = vshll.u32 %v1529, 16
      %v1599 = vrot.slane %v1597, 1
      %v1600 = vsel %vm674, %v1595, %v1599
      %v1602 = vshrl.u32 %v1450, 16
      %v1604 = vshll.u32 %v1450, 16
      %v1606 = vrot.slane %v1604, 1
      %v1607 = vor.u32 %v1602, %v1606
      %v1609 = vshll.u32 %v1530, 16
      %v1611 = vrot.slane %v1609, 1
      %v1612 = vsel %vm674, %v1607, %v1611
      %v1614 = vshrl.u32 %v1451, 16
      %v1616 = vshll.u32 %v1451, 16
      %v1618 = vrot.slane %v1616, 1
      %v1619 = vor.u32 %v1614, %v1618
      %v1621 = vshll.u32 %v1531, 16
      %v1623 = vrot.slane %v1621, 1
      %v1624 = vsel %vm674, %v1619, %v1623
      %v1626 = vshrl.u32 %v1452, 16
      %v1628 = vshll.u32 %v1452, 16
      %v1630 = vrot.slane %v1628, 1
      %v1631 = vor.u32 %v1626, %v1630
      %v1633 = vshll.u32 %v1532, 16
      %v1635 = vrot.slane %v1633, 1
      %v1636 = vsel %vm674, %v1631, %v1635
      %v1638 = vshrl.u32 %v1453, 16
      %v1640 = vshll.u32 %v1453, 16
      %v1642 = vrot.slane %v1640, 1
      %v1643 = vor.u32 %v1638, %v1642
      %v1645 = vshll.u32 %v1533, 16
      %v1647 = vrot.slane %v1645, 1
      %v1648 = vsel %vm674, %v1643, %v1647
      %v1650 = vshrl.u32 %v1454, 16
      %v1652 = vshll.u32 %v1454, 16
      %v1654 = vrot.slane %v1652, 1
      %v1655 = vor.u32 %v1650, %v1654
      %v1657 = vshll.u32 %v1534, 16
      %v1659 = vrot.slane %v1657, 1
      %v1660 = vsel %vm674, %v1655, %v1659
      %v1662 = vshrl.u32 %v1455, 16
      %v1664 = vshll.u32 %v1455, 16
      %v1666 = vrot.slane %v1664, 1
      %v1667 = vor.u32 %v1662, %v1666
      %v1669 = vshll.u32 %v1535, 16
      %v1671 = vrot.slane %v1669, 1
      %v1672 = vsel %vm674, %v1667, %v1671
      %v1674 = vshrl.u32 %v1456, 16
      %v1676 = vshll.u32 %v1456, 16
      %v1678 = vrot.slane %v1676, 1
      %v1679 = vor.u32 %v1674, %v1678
      %v1681 = vshll.u32 %v1536, 16
      %v1683 = vrot.slane %v1681, 1
      %v1684 = vsel %vm674, %v1679, %v1683
      %v1686 = vshrl.u32 %v1457, 16
      %v1688 = vshll.u32 %v1457, 16
      %v1690 = vrot.slane %v1688, 1
      %v1691 = vor.u32 %v1686, %v1690
      %v1693 = vshll.u32 %v1537, 16
      %v1695 = vrot.slane %v1693, 1
      %v1696 = vsel %vm674, %v1691, %v1695
      %v1698 = vshrl.u32 %v1458, 16
      %v1700 = vshll.u32 %v1458, 16
      %v1702 = vrot.slane %v1700, 1
      %v1703 = vor.u32 %v1698, %v1702
      %v1705 = vshll.u32 %v1538, 16
      %v1707 = vrot.slane %v1705, 1
      %v1708 = vsel %vm674, %v1703, %v1707
      %v1710 = vshrl.u32 %v1459, 16
      %v1712 = vshll.u32 %v1459, 16
      %v1714 = vrot.slane %v1712, 1
      %v1715 = vor.u32 %v1710, %v1714
      %v1717 = vshll.u32 %v1539, 16
      %v1719 = vrot.slane %v1717, 1
      %v1720 = vsel %vm674, %v1715, %v1719
      %v1722 = vshrl.u32 %v1460, 16
      %v1724 = vshll.u32 %v1460, 16
      %v1726 = vrot.slane %v1724, 1
      %v1727 = vor.u32 %v1722, %v1726
      %v1729 = vshll.u32 %v1540, 16
      %v1731 = vrot.slane %v1729, 1
      %v1732 = vsel %vm674, %v1727, %v1731
      %1733 = vrot.lane.b32.xlu0 %v1552, 80
      %v1734 = vpop.permute.xlu0 %1733
      %1735 = vrot.lane.b32.xlu0 %v1564, 80
      %v1736 = vpop.permute.xlu0 %1735
      %1737 = vrot.lane.b32.xlu0 %v1576, 80
      %v1738 = vpop.permute.xlu0 %1737
      %1739 = vrot.lane.b32.xlu0 %v1588, 80
      %v1740 = vpop.permute.xlu0 %1739
      %1741 = vrot.lane.b32.xlu0 %v1600, 80
      %v1742 = vpop.permute.xlu0 %1741
      %1743 = vrot.lane.b32.xlu0 %v1612, 80
      %v1744 = vpop.permute.xlu0 %1743
      %1745 = vrot.lane.b32.xlu0 %v1624, 80
      %v1746 = vpop.permute.xlu0 %1745
      %1747 = vrot.lane.b32.xlu0 %v1636, 80
      %v1748 = vpop.permute.xlu0 %1747
      %1749 = vrot.lane.b32.xlu0 %v1648, 80
      %v1750 = vpop.permute.xlu0 %1749
      %1751 = vrot.lane.b32.xlu0 %v1660, 80
      %v1752 = vpop.permute.xlu0 %1751
      %1753 = vrot.lane.b32.xlu0 %v1672, 80
      %v1754 = vpop.permute.xlu0 %1753
      %1755 = vrot.lane.b32.xlu0 %v1684, 80
      %v1756 = vpop.permute.xlu0 %1755
      %1757 = vrot.lane.b32.xlu0 %v1696, 80
      %v1758 = vpop.permute.xlu0 %1757
      %1759 = vrot.lane.b32.xlu0 %v1708, 80
      %v1760 = vpop.permute.xlu0 %1759
      %1761 = vrot.lane.b32.xlu0 %v1720, 80
      %v1762 = vpop.permute.xlu0 %1761
      %1763 = vrot.lane.b32.xlu0 %v1732, 80
      %v1764 = vpop.permute.xlu0 %1763
      %v1781 = vunpack.c.l.b16 %v352
      %v1782 = vunpack.c.l.b16 %v353
      %v1783 = vunpack.c.l.b16 %v354
      %v1784 = vunpack.c.l.b16 %v355
      %v1785 = vunpack.c.l.b16 %v356
      %v1786 = vunpack.c.l.b16 %v357
      %v1787 = vunpack.c.l.b16 %v358
      %v1788 = vunpack.c.l.b16 %v359
      %v1789 = vunpack.c.l.b16 %v360
      %v1790 = vunpack.c.l.b16 %v361
      %v1791 = vunpack.c.l.b16 %v362
      %v1792 = vunpack.c.l.b16 %v363
      %v1793 = vunpack.c.l.b16 %v364
      %v1794 = vunpack.c.l.b16 %v365
      %v1795 = vunpack.c.l.b16 %v366
      %v1796 = vunpack.c.l.b16 %v367
      %v1797 = vpack.c.b16 %v1414, %v1781
      %v1798 = vpack.c.b16 %v1416, %v1782
      %v1799 = vpack.c.b16 %v1418, %v1783
      %v1800 = vpack.c.b16 %v1420, %v1784
      %v1801 = vpack.c.b16 %v1422, %v1785
      %v1802 = vpack.c.b16 %v1424, %v1786
      %v1803 = vpack.c.b16 %v1426, %v1787
      %v1804 = vpack.c.b16 %v1428, %v1788
      %v1805 = vpack.c.b16 %v1430, %v1789
      %v1806 = vpack.c.b16 %v1432, %v1790
      %v1807 = vpack.c.b16 %v1434, %v1791
      %v1808 = vpack.c.b16 %v1436, %v1792
      %v1809 = vpack.c.b16 %v1438, %v1793
      %v1810 = vpack.c.b16 %v1440, %v1794
      %v1811 = vpack.c.b16 %v1442, %v1795
      %v1812 = vpack.c.b16 %v1444, %v1796
      %v1813 = vrot.slane %v1797, 1
      %v1814 = vrot.slane %v1525, 1
      %v1815 = vsel %vm947, %v1813, %v1814
      %v1816 = vrot.slane %v1798, 1
      %v1817 = vrot.slane %v1526, 1
      %v1818 = vsel %vm947, %v1816, %v1817
      %v1819 = vrot.slane %v1799, 1
      %v1820 = vrot.slane %v1527, 1
      %v1821 = vsel %vm947, %v1819, %v1820
      %v1822 = vrot.slane %v1800, 1
      %v1823 = vrot.slane %v1528, 1
      %v1824 = vsel %vm947, %v1822, %v1823
      %v1825 = vrot.slane %v1801, 1
      %v1826 = vrot.slane %v1529, 1
      %v1827 = vsel %vm947, %v1825, %v1826
      %v1828 = vrot.slane %v1802, 1
      %v1829 = vrot.slane %v1530, 1
      %v1830 = vsel %vm947, %v1828, %v1829
      %v1831 = vrot.slane %v1803, 1
      %v1832 = vrot.slane %v1531, 1
      %v1833 = vsel %vm947, %v1831, %v1832
      %v1834 = vrot.slane %v1804, 1
      %v1835 = vrot.slane %v1532, 1
      %v1836 = vsel %vm947, %v1834, %v1835
      %v1837 = vrot.slane %v1805, 1
      %v1838 = vrot.slane %v1533, 1
      %v1839 = vsel %vm947, %v1837, %v1838
      %v1840 = vrot.slane %v1806, 1
      %v1841 = vrot.slane %v1534, 1
      %v1842 = vsel %vm947, %v1840, %v1841
      %v1843 = vrot.slane %v1807, 1
      %v1844 = vrot.slane %v1535, 1
      %v1845 = vsel %vm947, %v1843, %v1844
      %v1846 = vrot.slane %v1808, 1
      %v1847 = vrot.slane %v1536, 1
      %v1848 = vsel %vm947, %v1846, %v1847
      %v1849 = vrot.slane %v1809, 1
      %v1850 = vrot.slane %v1537, 1
      %v1851 = vsel %vm947, %v1849, %v1850
      %v1852 = vrot.slane %v1810, 1
      %v1853 = vrot.slane %v1538, 1
      %v1854 = vsel %vm947, %v1852, %v1853
      %v1855 = vrot.slane %v1811, 1
      %v1856 = vrot.slane %v1539, 1
      %v1857 = vsel %vm947, %v1855, %v1856
      %v1858 = vrot.slane %v1812, 1
      %v1859 = vrot.slane %v1540, 1
      %v1860 = vsel %vm947, %v1858, %v1859
      %1861 = vrot.lane.b32.xlu0 %v1815, 96
      %v1862 = vpop.permute.xlu0 %1861
      %1863 = vrot.lane.b32.xlu0 %v1818, 96
      %v1864 = vpop.permute.xlu0 %1863
      %1865 = vrot.lane.b32.xlu0 %v1821, 96
      %v1866 = vpop.permute.xlu0 %1865
      %1867 = vrot.lane.b32.xlu0 %v1824, 96
      %v1868 = vpop.permute.xlu0 %1867
      %1869 = vrot.lane.b32.xlu0 %v1827, 96
      %v1870 = vpop.permute.xlu0 %1869
      %1871 = vrot.lane.b32.xlu0 %v1830, 96
      %v1872 = vpop.permute.xlu0 %1871
      %1873 = vrot.lane.b32.xlu0 %v1833, 96
      %v1874 = vpop.permute.xlu0 %1873
      %1875 = vrot.lane.b32.xlu0 %v1836, 96
      %v1876 = vpop.permute.xlu0 %1875
      %1877 = vrot.lane.b32.xlu0 %v1839, 96
      %v1878 = vpop.permute.xlu0 %1877
      %1879 = vrot.lane.b32.xlu0 %v1842, 96
      %v1880 = vpop.permute.xlu0 %1879
      %1881 = vrot.lane.b32.xlu0 %v1845, 96
      %v1882 = vpop.permute.xlu0 %1881
      %1883 = vrot.lane.b32.xlu0 %v1848, 96
      %v1884 = vpop.permute.xlu0 %1883
      %1885 = vrot.lane.b32.xlu0 %v1851, 96
      %v1886 = vpop.permute.xlu0 %1885
      %1887 = vrot.lane.b32.xlu0 %v1854, 96
      %v1888 = vpop.permute.xlu0 %1887
      %1889 = vrot.lane.b32.xlu0 %v1857, 96
      %v1890 = vpop.permute.xlu0 %1889
      %1891 = vrot.lane.b32.xlu0 %v1860, 96
      %v1892 = vpop.permute.xlu0 %1891
      %v1909 = vunpack.c.l.b16 %v368
      %v1910 = vunpack.c.l.b16 %v369
      %v1911 = vunpack.c.l.b16 %v370
      %v1912 = vunpack.c.l.b16 %v371
      %v1913 = vunpack.c.l.b16 %v372
      %v1914 = vunpack.c.l.b16 %v373
      %v1915 = vunpack.c.l.b16 %v374
      %v1916 = vunpack.c.l.b16 %v375
      %v1917 = vunpack.c.l.b16 %v376
      %v1918 = vunpack.c.l.b16 %v377
      %v1919 = vunpack.c.l.b16 %v378
      %v1920 = vunpack.c.l.b16 %v379
      %v1921 = vunpack.c.l.b16 %v380
      %v1922 = vunpack.c.l.b16 %v381
      %v1923 = vunpack.c.l.b16 %v382
      %v1924 = vunpack.c.l.b16 %v383
      %v1925 = vpack.c.b16 %v1909, %v1909
      %v1926 = vpack.c.b16 %v1910, %v1910
      %v1927 = vpack.c.b16 %v1911, %v1911
      %v1928 = vpack.c.b16 %v1912, %v1912
      %v1929 = vpack.c.b16 %v1913, %v1913
      %v1930 = vpack.c.b16 %v1914, %v1914
      %v1931 = vpack.c.b16 %v1915, %v1915
      %v1932 = vpack.c.b16 %v1916, %v1916
      %v1933 = vpack.c.b16 %v1917, %v1917
      %v1934 = vpack.c.b16 %v1918, %v1918
      %v1935 = vpack.c.b16 %v1919, %v1919
      %v1936 = vpack.c.b16 %v1920, %v1920
      %v1937 = vpack.c.b16 %v1921, %v1921
      %v1938 = vpack.c.b16 %v1922, %v1922
      %v1939 = vpack.c.b16 %v1923, %v1923
      %v1940 = vpack.c.b16 %v1924, %v1924
      %v1942 = vshrl.u32 %v1797, 16
      %v1944 = vrot.slane %v1942, 1
      %v1945 = vshll.u32 %v1797, 16
      %v1947 = vrot.slane %v1945, 2
      %v1948 = vor.u32 %v1944, %v1947
      %v1950 = vshrl.u32 %v1925, 16
      %v1952 = vrot.slane %v1950, 1
      %v1953 = vshll.u32 %v1925, 16
      %v1955 = vrot.slane %v1953, 2
      %v1956 = vor.u32 %v1952, %v1955
      %v1957 = vsel %vm1076, %v1948, %v1956
      %v1959 = vshrl.u32 %v1798, 16
      %v1961 = vrot.slane %v1959, 1
      %v1962 = vshll.u32 %v1798, 16
      %v1964 = vrot.slane %v1962, 2
      %v1965 = vor.u32 %v1961, %v1964
      %v1967 = vshrl.u32 %v1926, 16
      %v1969 = vrot.slane %v1967, 1
      %v1970 = vshll.u32 %v1926, 16
      %v1972 = vrot.slane %v1970, 2
      %v1973 = vor.u32 %v1969, %v1972
      %v1974 = vsel %vm1076, %v1965, %v1973
      %v1976 = vshrl.u32 %v1799, 16
      %v1978 = vrot.slane %v1976, 1
      %v1979 = vshll.u32 %v1799, 16
      %v1981 = vrot.slane %v1979, 2
      %v1982 = vor.u32 %v1978, %v1981
      %v1984 = vshrl.u32 %v1927, 16
      %v1986 = vrot.slane %v1984, 1
      %v1987 = vshll.u32 %v1927, 16
      %v1989 = vrot.slane %v1987, 2
      %v1990 = vor.u32 %v1986, %v1989
      %v1991 = vsel %vm1076, %v1982, %v1990
      %v1993 = vshrl.u32 %v1800, 16
      %v1995 = vrot.slane %v1993, 1
      %v1996 = vshll.u32 %v1800, 16
      %v1998 = vrot.slane %v1996, 2
      %v1999 = vor.u32 %v1995, %v1998
      %v2001 = vshrl.u32 %v1928, 16
      %v2003 = vrot.slane %v2001, 1
      %v2004 = vshll.u32 %v1928, 16
      %v2006 = vrot.slane %v2004, 2
      %v2007 = vor.u32 %v2003, %v2006
      %v2008 = vsel %vm1076, %v1999, %v2007
      %v2010 = vshrl.u32 %v1801, 16
      %v2012 = vrot.slane %v2010, 1
      %v2013 = vshll.u32 %v1801, 16
      %v2015 = vrot.slane %v2013, 2
      %v2016 = vor.u32 %v2012, %v2015
      %v2018 = vshrl.u32 %v1929, 16
      %v2020 = vrot.slane %v2018, 1
      %v2021 = vshll.u32 %v1929, 16
      %v2023 = vrot.slane %v2021, 2
      %v2024 = vor.u32 %v2020, %v2023
      %v2025 = vsel %vm1076, %v2016, %v2024
      %v2027 = vshrl.u32 %v1802, 16
      %v2029 = vrot.slane %v2027, 1
      %v2030 = vshll.u32 %v1802, 16
      %v2032 = vrot.slane %v2030, 2
      %v2033 = vor.u32 %v2029, %v2032
      %v2035 = vshrl.u32 %v1930, 16
      %v2037 = vrot.slane %v2035, 1
      %v2038 = vshll.u32 %v1930, 16
      %v2040 = vrot.slane %v2038, 2
      %v2041 = vor.u32 %v2037, %v2040
      %v2042 = vsel %vm1076, %v2033, %v2041
      %v2044 = vshrl.u32 %v1803, 16
      %v2046 = vrot.slane %v2044, 1
      %v2047 = vshll.u32 %v1803, 16
      %v2049 = vrot.slane %v2047, 2
      %v2050 = vor.u32 %v2046, %v2049
      %v2052 = vshrl.u32 %v1931, 16
      %v2054 = vrot.slane %v2052, 1
      %v2055 = vshll.u32 %v1931, 16
      %v2057 = vrot.slane %v2055, 2
      %v2058 = vor.u32 %v2054, %v2057
      %v2059 = vsel %vm1076, %v2050, %v2058
      %v2061 = vshrl.u32 %v1804, 16
      %v2063 = vrot.slane %v2061, 1
      %v2064 = vshll.u32 %v1804, 16
      %v2066 = vrot.slane %v2064, 2
      %v2067 = vor.u32 %v2063, %v2066
      %v2069 = vshrl.u32 %v1932, 16
      %v2071 = vrot.slane %v2069, 1
      %v2072 = vshll.u32 %v1932, 16
      %v2074 = vrot.slane %v2072, 2
      %v2075 = vor.u32 %v2071, %v2074
      %v2076 = vsel %vm1076, %v2067, %v2075
      %v2078 = vshrl.u32 %v1805, 16
      %v2080 = vrot.slane %v2078, 1
      %v2081 = vshll.u32 %v1805, 16
      %v2083 = vrot.slane %v2081, 2
      %v2084 = vor.u32 %v2080, %v2083
      %v2086 = vshrl.u32 %v1933, 16
      %v2088 = vrot.slane %v2086, 1
      %v2089 = vshll.u32 %v1933, 16
      %v2091 = vrot.slane %v2089, 2
      %v2092 = vor.u32 %v2088, %v2091
      %v2093 = vsel %vm1076, %v2084, %v2092
      %v2095 = vshrl.u32 %v1806, 16
      %v2097 = vrot.slane %v2095, 1
      %v2098 = vshll.u32 %v1806, 16
      %v2100 = vrot.slane %v2098, 2
      %v2101 = vor.u32 %v2097, %v2100
      %v2103 = vshrl.u32 %v1934, 16
      %v2105 = vrot.slane %v2103, 1
      %v2106 = vshll.u32 %v1934, 16
      %v2108 = vrot.slane %v2106, 2
      %v2109 = vor.u32 %v2105, %v2108
      %v2110 = vsel %vm1076, %v2101, %v2109
      %v2112 = vshrl.u32 %v1807, 16
      %v2114 = vrot.slane %v2112, 1
      %v2115 = vshll.u32 %v1807, 16
      %v2117 = vrot.slane %v2115, 2
      %v2118 = vor.u32 %v2114, %v2117
      %v2120 = vshrl.u32 %v1935, 16
      %v2122 = vrot.slane %v2120, 1
      %v2123 = vshll.u32 %v1935, 16
      %v2125 = vrot.slane %v2123, 2
      %v2126 = vor.u32 %v2122, %v2125
      %v2127 = vsel %vm1076, %v2118, %v2126
      %v2129 = vshrl.u32 %v1808, 16
      %v2131 = vrot.slane %v2129, 1
      %v2132 = vshll.u32 %v1808, 16
      %v2134 = vrot.slane %v2132, 2
      %v2135 = vor.u32 %v2131, %v2134
      %v2137 = vshrl.u32 %v1936, 16
      %v2139 = vrot.slane %v2137, 1
      %v2140 = vshll.u32 %v1936, 16
      %v2142 = vrot.slane %v2140, 2
      %v2143 = vor.u32 %v2139, %v2142
      %v2144 = vsel %vm1076, %v2135, %v2143
      %v2146 = vshrl.u32 %v1809, 16
      %v2148 = vrot.slane %v2146, 1
      %v2149 = vshll.u32 %v1809, 16
      %v2151 = vrot.slane %v2149, 2
      %v2152 = vor.u32 %v2148, %v2151
      %v2154 = vshrl.u32 %v1937, 16
      %v2156 = vrot.slane %v2154, 1
      %v2157 = vshll.u32 %v1937, 16
      %v2159 = vrot.slane %v2157, 2
      %v2160 = vor.u32 %v2156, %v2159
      %v2161 = vsel %vm1076, %v2152, %v2160
      %v2163 = vshrl.u32 %v1810, 16
      %v2165 = vrot.slane %v2163, 1
      %v2166 = vshll.u32 %v1810, 16
      %v2168 = vrot.slane %v2166, 2
      %v2169 = vor.u32 %v2165, %v2168
      %v2171 = vshrl.u32 %v1938, 16
      %v2173 = vrot.slane %v2171, 1
      %v2174 = vshll.u32 %v1938, 16
      %v2176 = vrot.slane %v2174, 2
      %v2177 = vor.u32 %v2173, %v2176
      %v2178 = vsel %vm1076, %v2169, %v2177
      %v2180 = vshrl.u32 %v1811, 16
      %v2182 = vrot.slane %v2180, 1
      %v2183 = vshll.u32 %v1811, 16
      %v2185 = vrot.slane %v2183, 2
      %v2186 = vor.u32 %v2182, %v2185
      %v2188 = vshrl.u32 %v1939, 16
      %v2190 = vrot.slane %v2188, 1
      %v2191 = vshll.u32 %v1939, 16
      %v2193 = vrot.slane %v2191, 2
      %v2194 = vor.u32 %v2190, %v2193
      %v2195 = vsel %vm1076, %v2186, %v2194
      %v2197 = vshrl.u32 %v1812, 16
      %v2199 = vrot.slane %v2197, 1
      %v2200 = vshll.u32 %v1812, 16
      %v2202 = vrot.slane %v2200, 2
      %v2203 = vor.u32 %v2199, %v2202
      %v2205 = vshrl.u32 %v1940, 16
      %v2207 = vrot.slane %v2205, 1
      %v2208 = vshll.u32 %v1940, 16
      %v2210 = vrot.slane %v2208, 2
      %v2211 = vor.u32 %v2207, %v2210
      %v2212 = vsel %vm1076, %v2203, %v2211
      %2213 = vrot.lane.b32.xlu0 %v1957, 112
      %v2214 = vpop.permute.xlu0 %2213
      %2215 = vrot.lane.b32.xlu0 %v1974, 112
      %v2216 = vpop.permute.xlu0 %2215
      %2217 = vrot.lane.b32.xlu0 %v1991, 112
      %v2218 = vpop.permute.xlu0 %2217
      %2219 = vrot.lane.b32.xlu0 %v2008, 112
      %v2220 = vpop.permute.xlu0 %2219
      %2221 = vrot.lane.b32.xlu0 %v2025, 112
      %v2222 = vpop.permute.xlu0 %2221
      %2223 = vrot.lane.b32.xlu0 %v2042, 112
      %v2224 = vpop.permute.xlu0 %2223
      %2225 = vrot.lane.b32.xlu0 %v2059, 112
      %v2226 = vpop.permute.xlu0 %2225
      %2227 = vrot.lane.b32.xlu0 %v2076, 112
      %v2228 = vpop.permute.xlu0 %2227
      %2229 = vrot.lane.b32.xlu0 %v2093, 112
      %v2230 = vpop.permute.xlu0 %2229
      %2231 = vrot.lane.b32.xlu0 %v2110, 112
      %v2232 = vpop.permute.xlu0 %2231
      %2233 = vrot.lane.b32.xlu0 %v2127, 112
      %v2234 = vpop.permute.xlu0 %2233
      %2235 = vrot.lane.b32.xlu0 %v2144, 112
      %v2236 = vpop.permute.xlu0 %2235
      %2237 = vrot.lane.b32.xlu0 %v2161, 112
      %v2238 = vpop.permute.xlu0 %2237
      %2239 = vrot.lane.b32.xlu0 %v2178, 112
      %v2240 = vpop.permute.xlu0 %2239
      %2241 = vrot.lane.b32.xlu0 %v2195, 112
      %v2242 = vpop.permute.xlu0 %2241
      %2243 = vrot.lane.b32.xlu0 %v2212, 112
      %v2244 = vpop.permute.xlu0 %2243
      %v2277 = vunpack.c.l.b16 %v385
      %v2278 = vunpack.c.l.b16 %v386
      %v2279 = vunpack.c.l.b16 %v387
      %v2280 = vunpack.c.l.b16 %v388
      %v2281 = vunpack.c.l.b16 %v389
      %v2282 = vunpack.c.l.b16 %v390
      %v2283 = vunpack.c.l.b16 %v391
      %v2284 = vunpack.c.l.b16 %v392
      %v2285 = vunpack.c.l.b16 %v393
      %v2286 = vunpack.c.l.b16 %v394
      %v2287 = vunpack.c.l.b16 %v395
      %v2288 = vunpack.c.l.b16 %v396
      %v2289 = vunpack.c.l.b16 %v397
      %v2290 = vunpack.c.l.b16 %v398
      %v2291 = vunpack.c.l.b16 %v399
      %v2292 = vunpack.c.l.b16 %v400
      %v2293 = vunpack.c.l.b16 %v401
      %v2294 = vunpack.c.l.b16 %v402
      %v2295 = vunpack.c.l.b16 %v403
      %v2296 = vunpack.c.l.b16 %v404
      %v2297 = vunpack.c.l.b16 %v405
      %v2298 = vunpack.c.l.b16 %v406
      %v2299 = vunpack.c.l.b16 %v407
      %v2300 = vunpack.c.l.b16 %v408
      %v2301 = vunpack.c.l.b16 %v409
      %v2302 = vunpack.c.l.b16 %v410
      %v2303 = vunpack.c.l.b16 %v411
      %v2304 = vunpack.c.l.b16 %v412
      %v2305 = vunpack.c.l.b16 %v413
      %v2306 = vunpack.c.l.b16 %v414
      %v2307 = vunpack.c.l.b16 %v415
      %v2308 = vunpack.c.l.b16 %v416
      %v2309 = vpack.c.b16 %v2278, %v2277
      %v2310 = vpack.c.b16 %v2280, %v2279
      %v2311 = vpack.c.b16 %v2282, %v2281
      %v2312 = vpack.c.b16 %v2284, %v2283
      %v2313 = vpack.c.b16 %v2286, %v2285
      %v2314 = vpack.c.b16 %v2288, %v2287
      %v2315 = vpack.c.b16 %v2290, %v2289
      %v2316 = vpack.c.b16 %v2292, %v2291
      %v2317 = vpack.c.b16 %v2294, %v2293
      %v2318 = vpack.c.b16 %v2296, %v2295
      %v2319 = vpack.c.b16 %v2298, %v2297
      %v2320 = vpack.c.b16 %v2300, %v2299
      %v2321 = vpack.c.b16 %v2302, %v2301
      %v2322 = vpack.c.b16 %v2304, %v2303
      %v2323 = vpack.c.b16 %v2306, %v2305
      %v2324 = vpack.c.b16 %v2308, %v2307
      %v2341 = vunpack.c.l.b16 %v417
      %v2342 = vunpack.c.l.b16 %v418
      %v2343 = vunpack.c.l.b16 %v419
      %v2344 = vunpack.c.l.b16 %v420
      %v2345 = vunpack.c.l.b16 %v421
      %v2346 = vunpack.c.l.b16 %v422
      %v2347 = vunpack.c.l.b16 %v423
      %v2348 = vunpack.c.l.b16 %v424
      %v2349 = vunpack.c.l.b16 %v425
      %v2350 = vunpack.c.l.b16 %v426
      %v2351 = vunpack.c.l.b16 %v427
      %v2352 = vunpack.c.l.b16 %v428
      %v2353 = vunpack.c.l.b16 %v429
      %v2354 = vunpack.c.l.b16 %v430
      %v2355 = vunpack.c.l.b16 %v431
      %v2356 = vunpack.c.l.b16 %v432
      %v2357 = vpack.c.b16 %v2341, %v2341
      %v2358 = vpack.c.b16 %v2342, %v2342
      %v2359 = vpack.c.b16 %v2343, %v2343
      %v2360 = vpack.c.b16 %v2344, %v2344
      %v2361 = vpack.c.b16 %v2345, %v2345
      %v2362 = vpack.c.b16 %v2346, %v2346
      %v2363 = vpack.c.b16 %v2347, %v2347
      %v2364 = vpack.c.b16 %v2348, %v2348
      %v2365 = vpack.c.b16 %v2349, %v2349
      %v2366 = vpack.c.b16 %v2350, %v2350
      %v2367 = vpack.c.b16 %v2351, %v2351
      %v2368 = vpack.c.b16 %v2352, %v2352
      %v2369 = vpack.c.b16 %v2353, %v2353
      %v2370 = vpack.c.b16 %v2354, %v2354
      %v2371 = vpack.c.b16 %v2355, %v2355
      %v2372 = vpack.c.b16 %v2356, %v2356
      %v2374 = vshrl.u32 %v2309, 16
      %v2376 = vshll.u32 %v2309, 16
      %v2378 = vrot.slane %v2376, 1
      %v2379 = vor.u32 %v2374, %v2378
      %v2381 = vshll.u32 %v2357, 16
      %v2383 = vrot.slane %v2381, 1
      %v2384 = vsel %vm674, %v2379, %v2383
      %v2386 = vshrl.u32 %v2310, 16
      %v2388 = vshll.u32 %v2310, 16
      %v2390 = vrot.slane %v2388, 1
      %v2391 = vor.u32 %v2386, %v2390
      %v2393 = vshll.u32 %v2358, 16
      %v2395 = vrot.slane %v2393, 1
      %v2396 = vsel %vm674, %v2391, %v2395
      %v2398 = vshrl.u32 %v2311, 16
      %v2400 = vshll.u32 %v2311, 16
      %v2402 = vrot.slane %v2400, 1
      %v2403 = vor.u32 %v2398, %v2402
      %v2405 = vshll.u32 %v2359, 16
      %v2407 = vrot.slane %v2405, 1
      %v2408 = vsel %vm674, %v2403, %v2407
      %v2410 = vshrl.u32 %v2312, 16
      %v2412 = vshll.u32 %v2312, 16
      %v2414 = vrot.slane %v2412, 1
      %v2415 = vor.u32 %v2410, %v2414
      %v2417 = vshll.u32 %v2360, 16
      %v2419 = vrot.slane %v2417, 1
      %v2420 = vsel %vm674, %v2415, %v2419
      %v2422 = vshrl.u32 %v2313, 16
      %v2424 = vshll.u32 %v2313, 16
      %v2426 = vrot.slane %v2424, 1
      %v2427 = vor.u32 %v2422, %v2426
      %v2429 = vshll.u32 %v2361, 16
      %v2431 = vrot.slane %v2429, 1
      %v2432 = vsel %vm674, %v2427, %v2431
      %v2434 = vshrl.u32 %v2314, 16
      %v2436 = vshll.u32 %v2314, 16
      %v2438 = vrot.slane %v2436, 1
      %v2439 = vor.u32 %v2434, %v2438
      %v2441 = vshll.u32 %v2362, 16
      %v2443 = vrot.slane %v2441, 1
      %v2444 = vsel %vm674, %v2439, %v2443
      %v2446 = vshrl.u32 %v2315, 16
      %v2448 = vshll.u32 %v2315, 16
      %v2450 = vrot.slane %v2448, 1
      %v2451 = vor.u32 %v2446, %v2450
      %v2453 = vshll.u32 %v2363, 16
      %v2455 = vrot.slane %v2453, 1
      %v2456 = vsel %vm674, %v2451, %v2455
      %v2458 = vshrl.u32 %v2316, 16
      %v2460 = vshll.u32 %v2316, 16
      %v2462 = vrot.slane %v2460, 1
      %v2463 = vor.u32 %v2458, %v2462
      %v2465 = vshll.u32 %v2364, 16
      %v2467 = vrot.slane %v2465, 1
      %v2468 = vsel %vm674, %v2463, %v2467
      %v2470 = vshrl.u32 %v2317, 16
      %v2472 = vshll.u32 %v2317, 16
      %v2474 = vrot.slane %v2472, 1
      %v2475 = vor.u32 %v2470, %v2474
      %v2477 = vshll.u32 %v2365, 16
      %v2479 = vrot.slane %v2477, 1
      %v2480 = vsel %vm674, %v2475, %v2479
      %v2482 = vshrl.u32 %v2318, 16
      %v2484 = vshll.u32 %v2318, 16
      %v2486 = vrot.slane %v2484, 1
      %v2487 = vor.u32 %v2482, %v2486
      %v2489 = vshll.u32 %v2366, 16
      %v2491 = vrot.slane %v2489, 1
      %v2492 = vsel %vm674, %v2487, %v2491
      %v2494 = vshrl.u32 %v2319, 16
      %v2496 = vshll.u32 %v2319, 16
      %v2498 = vrot.slane %v2496, 1
      %v2499 = vor.u32 %v2494, %v2498
      %v2501 = vshll.u32 %v2367, 16
      %v2503 = vrot.slane %v2501, 1
      %v2504 = vsel %vm674, %v2499, %v2503
      %v2506 = vshrl.u32 %v2320, 16
      %v2508 = vshll.u32 %v2320, 16
      %v2510 = vrot.slane %v2508, 1
      %v2511 = vor.u32 %v2506, %v2510
      %v2513 = vshll.u32 %v2368, 16
      %v2515 = vrot.slane %v2513, 1
      %v2516 = vsel %vm674, %v2511, %v2515
      %v2518 = vshrl.u32 %v2321, 16
      %v2520 = vshll.u32 %v2321, 16
      %v2522 = vrot.slane %v2520, 1
      %v2523 = vor.u32 %v2518, %v2522
      %v2525 = vshll.u32 %v2369, 16
      %v2527 = vrot.slane %v2525, 1
      %v2528 = vsel %vm674, %v2523, %v2527
      %v2530 = vshrl.u32 %v2322, 16
      %v2532 = vshll.u32 %v2322, 16
      %v2534 = vrot.slane %v2532, 1
      %v2535 = vor.u32 %v2530, %v2534
      %v2537 = vshll.u32 %v2370, 16
      %v2539 = vrot.slane %v2537, 1
      %v2540 = vsel %vm674, %v2535, %v2539
      %v2542 = vshrl.u32 %v2323, 16
      %v2544 = vshll.u32 %v2323, 16
      %v2546 = vrot.slane %v2544, 1
      %v2547 = vor.u32 %v2542, %v2546
      %v2549 = vshll.u32 %v2371, 16
      %v2551 = vrot.slane %v2549, 1
      %v2552 = vsel %vm674, %v2547, %v2551
      %v2554 = vshrl.u32 %v2324, 16
      %v2556 = vshll.u32 %v2324, 16
      %v2558 = vrot.slane %v2556, 1
      %v2559 = vor.u32 %v2554, %v2558
      %v2561 = vshll.u32 %v2372, 16
      %v2563 = vrot.slane %v2561, 1
      %v2564 = vsel %vm674, %v2559, %v2563
      %2565 = vrot.lane.b32.xlu0 %v2384, 16
      %v2566 = vpop.permute.xlu0 %2565
      %2567 = vrot.lane.b32.xlu0 %v2396, 16
      %v2568 = vpop.permute.xlu0 %2567
      %2569 = vrot.lane.b32.xlu0 %v2408, 16
      %v2570 = vpop.permute.xlu0 %2569
      %2571 = vrot.lane.b32.xlu0 %v2420, 16
      %v2572 = vpop.permute.xlu0 %2571
      %2573 = vrot.lane.b32.xlu0 %v2432, 16
      %v2574 = vpop.permute.xlu0 %2573
      %2575 = vrot.lane.b32.xlu0 %v2444, 16
      %v2576 = vpop.permute.xlu0 %2575
      %2577 = vrot.lane.b32.xlu0 %v2456, 16
      %v2578 = vpop.permute.xlu0 %2577
      %2579 = vrot.lane.b32.xlu0 %v2468, 16
      %v2580 = vpop.permute.xlu0 %2579
      %2581 = vrot.lane.b32.xlu0 %v2480, 16
      %v2582 = vpop.permute.xlu0 %2581
      %2583 = vrot.lane.b32.xlu0 %v2492, 16
      %v2584 = vpop.permute.xlu0 %2583
      %2585 = vrot.lane.b32.xlu0 %v2504, 16
      %v2586 = vpop.permute.xlu0 %2585
      %2587 = vrot.lane.b32.xlu0 %v2516, 16
      %v2588 = vpop.permute.xlu0 %2587
      %2589 = vrot.lane.b32.xlu0 %v2528, 16
      %v2590 = vpop.permute.xlu0 %2589
      %2591 = vrot.lane.b32.xlu0 %v2540, 16
      %v2592 = vpop.permute.xlu0 %2591
      %2593 = vrot.lane.b32.xlu0 %v2552, 16
      %v2594 = vpop.permute.xlu0 %2593
      %2595 = vrot.lane.b32.xlu0 %v2564, 16
      %v2596 = vpop.permute.xlu0 %2595
      %v2613 = vunpack.c.l.b16 %v433
      %v2614 = vunpack.c.l.b16 %v434
      %v2615 = vunpack.c.l.b16 %v435
      %v2616 = vunpack.c.l.b16 %v436
      %v2617 = vunpack.c.l.b16 %v437
      %v2618 = vunpack.c.l.b16 %v438
      %v2619 = vunpack.c.l.b16 %v439
      %v2620 = vunpack.c.l.b16 %v440
      %v2621 = vunpack.c.l.b16 %v441
      %v2622 = vunpack.c.l.b16 %v442
      %v2623 = vunpack.c.l.b16 %v443
      %v2624 = vunpack.c.l.b16 %v444
      %v2625 = vunpack.c.l.b16 %v445
      %v2626 = vunpack.c.l.b16 %v446
      %v2627 = vunpack.c.l.b16 %v447
      %v2628 = vunpack.c.l.b16 %v448
      %v2629 = vpack.c.b16 %v2278, %v2613
      %v2630 = vpack.c.b16 %v2280, %v2614
      %v2631 = vpack.c.b16 %v2282, %v2615
      %v2632 = vpack.c.b16 %v2284, %v2616
      %v2633 = vpack.c.b16 %v2286, %v2617
      %v2634 = vpack.c.b16 %v2288, %v2618
      %v2635 = vpack.c.b16 %v2290, %v2619
      %v2636 = vpack.c.b16 %v2292, %v2620
      %v2637 = vpack.c.b16 %v2294, %v2621
      %v2638 = vpack.c.b16 %v2296, %v2622
      %v2639 = vpack.c.b16 %v2298, %v2623
      %v2640 = vpack.c.b16 %v2300, %v2624
      %v2641 = vpack.c.b16 %v2302, %v2625
      %v2642 = vpack.c.b16 %v2304, %v2626
      %v2643 = vpack.c.b16 %v2306, %v2627
      %v2644 = vpack.c.b16 %v2308, %v2628
      %v2645 = vrot.slane %v2629, 1
      %v2646 = vrot.slane %v2357, 1
      %v2647 = vsel %vm947, %v2645, %v2646
      %v2648 = vrot.slane %v2630, 1
      %v2649 = vrot.slane %v2358, 1
      %v2650 = vsel %vm947, %v2648, %v2649
      %v2651 = vrot.slane %v2631, 1
      %v2652 = vrot.slane %v2359, 1
      %v2653 = vsel %vm947, %v2651, %v2652
      %v2654 = vrot.slane %v2632, 1
      %v2655 = vrot.slane %v2360, 1
      %v2656 = vsel %vm947, %v2654, %v2655
      %v2657 = vrot.slane %v2633, 1
      %v2658 = vrot.slane %v2361, 1
      %v2659 = vsel %vm947, %v2657, %v2658
      %v2660 = vrot.slane %v2634, 1
      %v2661 = vrot.slane %v2362, 1
      %v2662 = vsel %vm947, %v2660, %v2661
      %v2663 = vrot.slane %v2635, 1
      %v2664 = vrot.slane %v2363, 1
      %v2665 = vsel %vm947, %v2663, %v2664
      %v2666 = vrot.slane %v2636, 1
      %v2667 = vrot.slane %v2364, 1
      %v2668 = vsel %vm947, %v2666, %v2667
      %v2669 = vrot.slane %v2637, 1
      %v2670 = vrot.slane %v2365, 1
      %v2671 = vsel %vm947, %v2669, %v2670
      %v2672 = vrot.slane %v2638, 1
      %v2673 = vrot.slane %v2366, 1
      %v2674 = vsel %vm947, %v2672, %v2673
      %v2675 = vrot.slane %v2639, 1
      %v2676 = vrot.slane %v2367, 1
      %v2677 = vsel %vm947, %v2675, %v2676
      %v2678 = vrot.slane %v2640, 1
      %v2679 = vrot.slane %v2368, 1
      %v2680 = vsel %vm947, %v2678, %v2679
      %v2681 = vrot.slane %v2641, 1
      %v2682 = vrot.slane %v2369, 1
      %v2683 = vsel %vm947, %v2681, %v2682
      %v2684 = vrot.slane %v2642, 1
      %v2685 = vrot.slane %v2370, 1
      %v2686 = vsel %vm947, %v2684, %v2685
      %v2687 = vrot.slane %v2643, 1
      %v2688 = vrot.slane %v2371, 1
      %v2689 = vsel %vm947, %v2687, %v2688
      %v2690 = vrot.slane %v2644, 1
      %v2691 = vrot.slane %v2372, 1
      %v2692 = vsel %vm947, %v2690, %v2691
      %2693 = vrot.lane.b32.xlu0 %v2647, 32
      %v2694 = vpop.permute.xlu0 %2693
      %2695 = vrot.lane.b32.xlu0 %v2650, 32
      %v2696 = vpop.permute.xlu0 %2695
      %2697 = vrot.lane.b32.xlu0 %v2653, 32
      %v2698 = vpop.permute.xlu0 %2697
      %2699 = vrot.lane.b32.xlu0 %v2656, 32
      %v2700 = vpop.permute.xlu0 %2699
      %2701 = vrot.lane.b32.xlu0 %v2659, 32
      %v2702 = vpop.permute.xlu0 %2701
      %2703 = vrot.lane.b32.xlu0 %v2662, 32
      %v2704 = vpop.permute.xlu0 %2703
      %2705 = vrot.lane.b32.xlu0 %v2665, 32
      %v2706 = vpop.permute.xlu0 %2705
      %2707 = vrot.lane.b32.xlu0 %v2668, 32
      %v2708 = vpop.permute.xlu0 %2707
      %2709 = vrot.lane.b32.xlu0 %v2671, 32
      %v2710 = vpop.permute.xlu0 %2709
      %2711 = vrot.lane.b32.xlu0 %v2674, 32
      %v2712 = vpop.permute.xlu0 %2711
      %2713 = vrot.lane.b32.xlu0 %v2677, 32
      %v2714 = vpop.permute.xlu0 %2713
      %2715 = vrot.lane.b32.xlu0 %v2680, 32
      %v2716 = vpop.permute.xlu0 %2715
      %2717 = vrot.lane.b32.xlu0 %v2683, 32
      %v2718 = vpop.permute.xlu0 %2717
      %2719 = vrot.lane.b32.xlu0 %v2686, 32
      %v2720 = vpop.permute.xlu0 %2719
      %2721 = vrot.lane.b32.xlu0 %v2689, 32
      %v2722 = vpop.permute.xlu0 %2721
      %2723 = vrot.lane.b32.xlu0 %v2692, 32
      %v2724 = vpop.permute.xlu0 %2723
      %v2741 = vunpack.c.l.b16 %v449
      %v2742 = vunpack.c.l.b16 %v450
      %v2743 = vunpack.c.l.b16 %v451
      %v2744 = vunpack.c.l.b16 %v452
      %v2745 = vunpack.c.l.b16 %v453
      %v2746 = vunpack.c.l.b16 %v454
      %v2747 = vunpack.c.l.b16 %v455
      %v2748 = vunpack.c.l.b16 %v456
      %v2749 = vunpack.c.l.b16 %v457
      %v2750 = vunpack.c.l.b16 %v458
      %v2751 = vunpack.c.l.b16 %v459
      %v2752 = vunpack.c.l.b16 %v460
      %v2753 = vunpack.c.l.b16 %v461
      %v2754 = vunpack.c.l.b16 %v462
      %v2755 = vunpack.c.l.b16 %v463
      %v2756 = vunpack.c.l.b16 %v464
      %v2757 = vpack.c.b16 %v2741, %v2741
      %v2758 = vpack.c.b16 %v2742, %v2742
      %v2759 = vpack.c.b16 %v2743, %v2743
      %v2760 = vpack.c.b16 %v2744, %v2744
      %v2761 = vpack.c.b16 %v2745, %v2745
      %v2762 = vpack.c.b16 %v2746, %v2746
      %v2763 = vpack.c.b16 %v2747, %v2747
      %v2764 = vpack.c.b16 %v2748, %v2748
      %v2765 = vpack.c.b16 %v2749, %v2749
      %v2766 = vpack.c.b16 %v2750, %v2750
      %v2767 = vpack.c.b16 %v2751, %v2751
      %v2768 = vpack.c.b16 %v2752, %v2752
      %v2769 = vpack.c.b16 %v2753, %v2753
      %v2770 = vpack.c.b16 %v2754, %v2754
      %v2771 = vpack.c.b16 %v2755, %v2755
      %v2772 = vpack.c.b16 %v2756, %v2756
      %v2774 = vshrl.u32 %v2629, 16
      %v2776 = vrot.slane %v2774, 1
      %v2777 = vshll.u32 %v2629, 16
      %v2779 = vrot.slane %v2777, 2
      %v2780 = vor.u32 %v2776, %v2779
      %v2782 = vshrl.u32 %v2757, 16
      %v2784 = vrot.slane %v2782, 1
      %v2785 = vshll.u32 %v2757, 16
      %v2787 = vrot.slane %v2785, 2
      %v2788 = vor.u32 %v2784, %v2787
      %v2789 = vsel %vm1076, %v2780, %v2788
      %v2791 = vshrl.u32 %v2630, 16
      %v2793 = vrot.slane %v2791, 1
      %v2794 = vshll.u32 %v2630, 16
      %v2796 = vrot.slane %v2794, 2
      %v2797 = vor.u32 %v2793, %v2796
      %v2799 = vshrl.u32 %v2758, 16
      %v2801 = vrot.slane %v2799, 1
      %v2802 = vshll.u32 %v2758, 16
      %v2804 = vrot.slane %v2802, 2
      %v2805 = vor.u32 %v2801, %v2804
      %v2806 = vsel %vm1076, %v2797, %v2805
      %v2808 = vshrl.u32 %v2631, 16
      %v2810 = vrot.slane %v2808, 1
      %v2811 = vshll.u32 %v2631, 16
      %v2813 = vrot.slane %v2811, 2
      %v2814 = vor.u32 %v2810, %v2813
      %v2816 = vshrl.u32 %v2759, 16
      %v2818 = vrot.slane %v2816, 1
      %v2819 = vshll.u32 %v2759, 16
      %v2821 = vrot.slane %v2819, 2
      %v2822 = vor.u32 %v2818, %v2821
      %v2823 = vsel %vm1076, %v2814, %v2822
      %v2825 = vshrl.u32 %v2632, 16
      %v2827 = vrot.slane %v2825, 1
      %v2828 = vshll.u32 %v2632, 16
      %v2830 = vrot.slane %v2828, 2
      %v2831 = vor.u32 %v2827, %v2830
      %v2833 = vshrl.u32 %v2760, 16
      %v2835 = vrot.slane %v2833, 1
      %v2836 = vshll.u32 %v2760, 16
      %v2838 = vrot.slane %v2836, 2
      %v2839 = vor.u32 %v2835, %v2838
      %v2840 = vsel %vm1076, %v2831, %v2839
      %v2842 = vshrl.u32 %v2633, 16
      %v2844 = vrot.slane %v2842, 1
      %v2845 = vshll.u32 %v2633, 16
      %v2847 = vrot.slane %v2845, 2
      %v2848 = vor.u32 %v2844, %v2847
      %v2850 = vshrl.u32 %v2761, 16
      %v2852 = vrot.slane %v2850, 1
      %v2853 = vshll.u32 %v2761, 16
      %v2855 = vrot.slane %v2853, 2
      %v2856 = vor.u32 %v2852, %v2855
      %v2857 = vsel %vm1076, %v2848, %v2856
      %v2859 = vshrl.u32 %v2634, 16
      %v2861 = vrot.slane %v2859, 1
      %v2862 = vshll.u32 %v2634, 16
      %v2864 = vrot.slane %v2862, 2
      %v2865 = vor.u32 %v2861, %v2864
      %v2867 = vshrl.u32 %v2762, 16
      %v2869 = vrot.slane %v2867, 1
      %v2870 = vshll.u32 %v2762, 16
      %v2872 = vrot.slane %v2870, 2
      %v2873 = vor.u32 %v2869, %v2872
      %v2874 = vsel %vm1076, %v2865, %v2873
      %v2876 = vshrl.u32 %v2635, 16
      %v2878 = vrot.slane %v2876, 1
      %v2879 = vshll.u32 %v2635, 16
      %v2881 = vrot.slane %v2879, 2
      %v2882 = vor.u32 %v2878, %v2881
      %v2884 = vshrl.u32 %v2763, 16
      %v2886 = vrot.slane %v2884, 1
      %v2887 = vshll.u32 %v2763, 16
      %v2889 = vrot.slane %v2887, 2
      %v2890 = vor.u32 %v2886, %v2889
      %v2891 = vsel %vm1076, %v2882, %v2890
      %v2893 = vshrl.u32 %v2636, 16
      %v2895 = vrot.slane %v2893, 1
      %v2896 = vshll.u32 %v2636, 16
      %v2898 = vrot.slane %v2896, 2
      %v2899 = vor.u32 %v2895, %v2898
      %v2901 = vshrl.u32 %v2764, 16
      %v2903 = vrot.slane %v2901, 1
      %v2904 = vshll.u32 %v2764, 16
      %v2906 = vrot.slane %v2904, 2
      %v2907 = vor.u32 %v2903, %v2906
      %v2908 = vsel %vm1076, %v2899, %v2907
      %v2910 = vshrl.u32 %v2637, 16
      %v2912 = vrot.slane %v2910, 1
      %v2913 = vshll.u32 %v2637, 16
      %v2915 = vrot.slane %v2913, 2
      %v2916 = vor.u32 %v2912, %v2915
      %v2918 = vshrl.u32 %v2765, 16
      %v2920 = vrot.slane %v2918, 1
      %v2921 = vshll.u32 %v2765, 16
      %v2923 = vrot.slane %v2921, 2
      %v2924 = vor.u32 %v2920, %v2923
      %v2925 = vsel %vm1076, %v2916, %v2924
      %v2927 = vshrl.u32 %v2638, 16
      %v2929 = vrot.slane %v2927, 1
      %v2930 = vshll.u32 %v2638, 16
      %v2932 = vrot.slane %v2930, 2
      %v2933 = vor.u32 %v2929, %v2932
      %v2935 = vshrl.u32 %v2766, 16
      %v2937 = vrot.slane %v2935, 1
      %v2938 = vshll.u32 %v2766, 16
      %v2940 = vrot.slane %v2938, 2
      %v2941 = vor.u32 %v2937, %v2940
      %v2942 = vsel %vm1076, %v2933, %v2941
      %v2944 = vshrl.u32 %v2639, 16
      %v2946 = vrot.slane %v2944, 1
      %v2947 = vshll.u32 %v2639, 16
      %v2949 = vrot.slane %v2947, 2
      %v2950 = vor.u32 %v2946, %v2949
      %v2952 = vshrl.u32 %v2767, 16
      %v2954 = vrot.slane %v2952, 1
      %v2955 = vshll.u32 %v2767, 16
      %v2957 = vrot.slane %v2955, 2
      %v2958 = vor.u32 %v2954, %v2957
      %v2959 = vsel %vm1076, %v2950, %v2958
      %v2961 = vshrl.u32 %v2640, 16
      %v2963 = vrot.slane %v2961, 1
      %v2964 = vshll.u32 %v2640, 16
      %v2966 = vrot.slane %v2964, 2
      %v2967 = vor.u32 %v2963, %v2966
      %v2969 = vshrl.u32 %v2768, 16
      %v2971 = vrot.slane %v2969, 1
      %v2972 = vshll.u32 %v2768, 16
      %v2974 = vrot.slane %v2972, 2
      %v2975 = vor.u32 %v2971, %v2974
      %v2976 = vsel %vm1076, %v2967, %v2975
      %v2978 = vshrl.u32 %v2641, 16
      %v2980 = vrot.slane %v2978, 1
      %v2981 = vshll.u32 %v2641, 16
      %v2983 = vrot.slane %v2981, 2
      %v2984 = vor.u32 %v2980, %v2983
      %v2986 = vshrl.u32 %v2769, 16
      %v2988 = vrot.slane %v2986, 1
      %v2989 = vshll.u32 %v2769, 16
      %v2991 = vrot.slane %v2989, 2
      %v2992 = vor.u32 %v2988, %v2991
      %v2993 = vsel %vm1076, %v2984, %v2992
      %v2995 = vshrl.u32 %v2642, 16
      %v2997 = vrot.slane %v2995, 1
      %v2998 = vshll.u32 %v2642, 16
      %v3000 = vrot.slane %v2998, 2
      %v3001 = vor.u32 %v2997, %v3000
      %v3003 = vshrl.u32 %v2770, 16
      %v3005 = vrot.slane %v3003, 1
      %v3006 = vshll.u32 %v2770, 16
      %v3008 = vrot.slane %v3006, 2
      %v3009 = vor.u32 %v3005, %v3008
      %v3010 = vsel %vm1076, %v3001, %v3009
      %v3012 = vshrl.u32 %v2643, 16
      %v3014 = vrot.slane %v3012, 1
      %v3015 = vshll.u32 %v2643, 16
      %v3017 = vrot.slane %v3015, 2
      %v3018 = vor.u32 %v3014, %v3017
      %v3020 = vshrl.u32 %v2771, 16
      %v3022 = vrot.slane %v3020, 1
      %v3023 = vshll.u32 %v2771, 16
      %v3025 = vrot.slane %v3023, 2
      %v3026 = vor.u32 %v3022, %v3025
      %v3027 = vsel %vm1076, %v3018, %v3026
      %v3029 = vshrl.u32 %v2644, 16
      %v3031 = vrot.slane %v3029, 1
      %v3032 = vshll.u32 %v2644, 16
      %v3034 = vrot.slane %v3032, 2
      %v3035 = vor.u32 %v3031, %v3034
      %v3037 = vshrl.u32 %v2772, 16
      %v3039 = vrot.slane %v3037, 1
      %v3040 = vshll.u32 %v2772, 16
      %v3042 = vrot.slane %v3040, 2
      %v3043 = vor.u32 %v3039, %v3042
      %v3044 = vsel %vm1076, %v3035, %v3043
      %3045 = vrot.lane.b32.xlu0 %v2789, 48
      %v3046 = vpop.permute.xlu0 %3045
      %3047 = vrot.lane.b32.xlu0 %v2806, 48
      %v3048 = vpop.permute.xlu0 %3047
      %3049 = vrot.lane.b32.xlu0 %v2823, 48
      %v3050 = vpop.permute.xlu0 %3049
      %3051 = vrot.lane.b32.xlu0 %v2840, 48
      %v3052 = vpop.permute.xlu0 %3051
      %3053 = vrot.lane.b32.xlu0 %v2857, 48
      %v3054 = vpop.permute.xlu0 %3053
      %3055 = vrot.lane.b32.xlu0 %v2874, 48
      %v3056 = vpop.permute.xlu0 %3055
      %3057 = vrot.lane.b32.xlu0 %v2891, 48
      %v3058 = vpop.permute.xlu0 %3057
      %3059 = vrot.lane.b32.xlu0 %v2908, 48
      %v3060 = vpop.permute.xlu0 %3059
      %3061 = vrot.lane.b32.xlu0 %v2925, 48
      %v3062 = vpop.permute.xlu0 %3061
      %3063 = vrot.lane.b32.xlu0 %v2942, 48
      %v3064 = vpop.permute.xlu0 %3063
      %3065 = vrot.lane.b32.xlu0 %v2959, 48
      %v3066 = vpop.permute.xlu0 %3065
      %3067 = vrot.lane.b32.xlu0 %v2976, 48
      %v3068 = vpop.permute.xlu0 %3067
      %3069 = vrot.lane.b32.xlu0 %v2993, 48
      %v3070 = vpop.permute.xlu0 %3069
      %3071 = vrot.lane.b32.xlu0 %v3010, 48
      %v3072 = vpop.permute.xlu0 %3071
      %3073 = vrot.lane.b32.xlu0 %v3027, 48
      %v3074 = vpop.permute.xlu0 %3073
      %3075 = vrot.lane.b32.xlu0 %v3044, 48
      %v3076 = vpop.permute.xlu0 %3075
      %v3109 = vunpack.c.l.b16 %v466
      %v3110 = vunpack.c.l.b16 %v467
      %v3111 = vunpack.c.l.b16 %v468
      %v3112 = vunpack.c.l.b16 %v469
      %v3113 = vunpack.c.l.b16 %v470
      %v3114 = vunpack.c.l.b16 %v471
      %v3115 = vunpack.c.l.b16 %v472
      %v3116 = vunpack.c.l.b16 %v473
      %v3117 = vunpack.c.l.b16 %v474
      %v3118 = vunpack.c.l.b16 %v475
      %v3119 = vunpack.c.l.b16 %v476
      %v3120 = vunpack.c.l.b16 %v477
      %v3121 = vunpack.c.l.b16 %v478
      %v3122 = vunpack.c.l.b16 %v479
      %v3123 = vunpack.c.l.b16 %v480
      %v3124 = vunpack.c.l.b16 %v481
      %v3125 = vunpack.c.l.b16 %v482
      %v3126 = vunpack.c.l.b16 %v483
      %v3127 = vunpack.c.l.b16 %v484
      %v3128 = vunpack.c.l.b16 %v485
      %v3129 = vunpack.c.l.b16 %v486
      %v3130 = vunpack.c.l.b16 %v487
      %v3131 = vunpack.c.l.b16 %v488
      %v3132 = vunpack.c.l.b16 %v489
      %v3133 = vunpack.c.l.b16 %v490
      %v3134 = vunpack.c.l.b16 %v491
      %v3135 = vunpack.c.l.b16 %v492
      %v3136 = vunpack.c.l.b16 %v493
      %v3137 = vunpack.c.l.b16 %v494
      %v3138 = vunpack.c.l.b16 %v495
      %v3139 = vunpack.c.l.b16 %v496
      %v3140 = vunpack.c.l.b16 %v497
      %v3141 = vpack.c.b16 %v3110, %v3109
      %v3142 = vpack.c.b16 %v3112, %v3111
      %v3143 = vpack.c.b16 %v3114, %v3113
      %v3144 = vpack.c.b16 %v3116, %v3115
      %v3145 = vpack.c.b16 %v3118, %v3117
      %v3146 = vpack.c.b16 %v3120, %v3119
      %v3147 = vpack.c.b16 %v3122, %v3121
      %v3148 = vpack.c.b16 %v3124, %v3123
      %v3149 = vpack.c.b16 %v3126, %v3125
      %v3150 = vpack.c.b16 %v3128, %v3127
      %v3151 = vpack.c.b16 %v3130, %v3129
      %v3152 = vpack.c.b16 %v3132, %v3131
      %v3153 = vpack.c.b16 %v3134, %v3133
      %v3154 = vpack.c.b16 %v3136, %v3135
      %v3155 = vpack.c.b16 %v3138, %v3137
      %v3156 = vpack.c.b16 %v3140, %v3139
      %3157 = vrot.lane.b32.xlu0 %v3141, 64
      %v3158 = vpop.permute.xlu0 %3157
      %3159 = vrot.lane.b32.xlu0 %v3142, 64
      %v3160 = vpop.permute.xlu0 %3159
      %3161 = vrot.lane.b32.xlu0 %v3143, 64
      %v3162 = vpop.permute.xlu0 %3161
      %3163 = vrot.lane.b32.xlu0 %v3144, 64
      %v3164 = vpop.permute.xlu0 %3163
      %3165 = vrot.lane.b32.xlu0 %v3145, 64
      %v3166 = vpop.permute.xlu0 %3165
      %3167 = vrot.lane.b32.xlu0 %v3146, 64
      %v3168 = vpop.permute.xlu0 %3167
      %3169 = vrot.lane.b32.xlu0 %v3147, 64
      %v3170 = vpop.permute.xlu0 %3169
      %3171 = vrot.lane.b32.xlu0 %v3148, 64
      %v3172 = vpop.permute.xlu0 %3171
      %3173 = vrot.lane.b32.xlu0 %v3149, 64
      %v3174 = vpop.permute.xlu0 %3173
      %3175 = vrot.lane.b32.xlu0 %v3150, 64
      %v3176 = vpop.permute.xlu0 %3175
      %3177 = vrot.lane.b32.xlu0 %v3151, 64
      %v3178 = vpop.permute.xlu0 %3177
      %3179 = vrot.lane.b32.xlu0 %v3152, 64
      %v3180 = vpop.permute.xlu0 %3179
      %3181 = vrot.lane.b32.xlu0 %v3153, 64
      %v3182 = vpop.permute.xlu0 %3181
      %3183 = vrot.lane.b32.xlu0 %v3154, 64
      %v3184 = vpop.permute.xlu0 %3183
      %3185 = vrot.lane.b32.xlu0 %v3155, 64
      %v3186 = vpop.permute.xlu0 %3185
      %3187 = vrot.lane.b32.xlu0 %v3156, 64
      %v3188 = vpop.permute.xlu0 %3187
      %v3205 = vunpack.c.l.b16 %v498
      %v3206 = vunpack.c.l.b16 %v499
      %v3207 = vunpack.c.l.b16 %v500
      %v3208 = vunpack.c.l.b16 %v501
      %v3209 = vunpack.c.l.b16 %v502
      %v3210 = vunpack.c.l.b16 %v503
      %v3211 = vunpack.c.l.b16 %v504
      %v3212 = vunpack.c.l.b16 %v505
      %v3213 = vunpack.c.l.b16 %v506
      %v3214 = vunpack.c.l.b16 %v507
      %v3215 = vunpack.c.l.b16 %v508
      %v3216 = vunpack.c.l.b16 %v509
      %v3217 = vunpack.c.l.b16 %v510
      %v3218 = vunpack.c.l.b16 %v511
      %v3219 = vunpack.c.l.b16 %v512
      %v3220 = vunpack.c.l.b16 %v513
      %v3221 = vpack.c.b16 %v3205, %v3205
      %v3222 = vpack.c.b16 %v3206, %v3206
      %v3223 = vpack.c.b16 %v3207, %v3207
      %v3224 = vpack.c.b16 %v3208, %v3208
      %v3225 = vpack.c.b16 %v3209, %v3209
      %v3226 = vpack.c.b16 %v3210, %v3210
      %v3227 = vpack.c.b16 %v3211, %v3211
      %v3228 = vpack.c.b16 %v3212, %v3212
      %v3229 = vpack.c.b16 %v3213, %v3213
      %v3230 = vpack.c.b16 %v3214, %v3214
      %v3231 = vpack.c.b16 %v3215, %v3215
      %v3232 = vpack.c.b16 %v3216, %v3216
      %v3233 = vpack.c.b16 %v3217, %v3217
      %v3234 = vpack.c.b16 %v3218, %v3218
      %v3235 = vpack.c.b16 %v3219, %v3219
      %v3236 = vpack.c.b16 %v3220, %v3220
      %v3238 = vshrl.u32 %v3141, 16
      %v3240 = vshll.u32 %v3141, 16
      %v3242 = vrot.slane %v3240, 1
      %v3243 = vor.u32 %v3238, %v3242
      %v3245 = vshll.u32 %v3221, 16
      %v3247 = vrot.slane %v3245, 1
      %v3248 = vsel %vm674, %v3243, %v3247
      %v3250 = vshrl.u32 %v3142, 16
      %v3252 = vshll.u32 %v3142, 16
      %v3254 = vrot.slane %v3252, 1
      %v3255 = vor.u32 %v3250, %v3254
      %v3257 = vshll.u32 %v3222, 16
      %v3259 = vrot.slane %v3257, 1
      %v3260 = vsel %vm674, %v3255, %v3259
      %v3262 = vshrl.u32 %v3143, 16
      %v3264 = vshll.u32 %v3143, 16
      %v3266 = vrot.slane %v3264, 1
      %v3267 = vor.u32 %v3262, %v3266
      %v3269 = vshll.u32 %v3223, 16
      %v3271 = vrot.slane %v3269, 1
      %v3272 = vsel %vm674, %v3267, %v3271
      %v3274 = vshrl.u32 %v3144, 16
      %v3276 = vshll.u32 %v3144, 16
      %v3278 = vrot.slane %v3276, 1
      %v3279 = vor.u32 %v3274, %v3278
      %v3281 = vshll.u32 %v3224, 16
      %v3283 = vrot.slane %v3281, 1
      %v3284 = vsel %vm674, %v3279, %v3283
      %v3286 = vshrl.u32 %v3145, 16
      %v3288 = vshll.u32 %v3145, 16
      %v3290 = vrot.slane %v3288, 1
      %v3291 = vor.u32 %v3286, %v3290
      %v3293 = vshll.u32 %v3225, 16
      %v3295 = vrot.slane %v3293, 1
      %v3296 = vsel %vm674, %v3291, %v3295
      %v3298 = vshrl.u32 %v3146, 16
      %v3300 = vshll.u32 %v3146, 16
      %v3302 = vrot.slane %v3300, 1
      %v3303 = vor.u32 %v3298, %v3302
      %v3305 = vshll.u32 %v3226, 16
      %v3307 = vrot.slane %v3305, 1
      %v3308 = vsel %vm674, %v3303, %v3307
      %v3310 = vshrl.u32 %v3147, 16
      %v3312 = vshll.u32 %v3147, 16
      %v3314 = vrot.slane %v3312, 1
      %v3315 = vor.u32 %v3310, %v3314
      %v3317 = vshll.u32 %v3227, 16
      %v3319 = vrot.slane %v3317, 1
      %v3320 = vsel %vm674, %v3315, %v3319
      %v3322 = vshrl.u32 %v3148, 16
      %v3324 = vshll.u32 %v3148, 16
      %v3326 = vrot.slane %v3324, 1
      %v3327 = vor.u32 %v3322, %v3326
      %v3329 = vshll.u32 %v3228, 16
      %v3331 = vrot.slane %v3329, 1
      %v3332 = vsel %vm674, %v3327, %v3331
      %v3334 = vshrl.u32 %v3149, 16
      %v3336 = vshll.u32 %v3149, 16
      %v3338 = vrot.slane %v3336, 1
      %v3339 = vor.u32 %v3334, %v3338
      %v3341 = vshll.u32 %v3229, 16
      %v3343 = vrot.slane %v3341, 1
      %v3344 = vsel %vm674, %v3339, %v3343
      %v3346 = vshrl.u32 %v3150, 16
      %v3348 = vshll.u32 %v3150, 16
      %v3350 = vrot.slane %v3348, 1
      %v3351 = vor.u32 %v3346, %v3350
      %v3353 = vshll.u32 %v3230, 16
      %v3355 = vrot.slane %v3353, 1
      %v3356 = vsel %vm674, %v3351, %v3355
      %v3358 = vshrl.u32 %v3151, 16
      %v3360 = vshll.u32 %v3151, 16
      %v3362 = vrot.slane %v3360, 1
      %v3363 = vor.u32 %v3358, %v3362
      %v3365 = vshll.u32 %v3231, 16
      %v3367 = vrot.slane %v3365, 1
      %v3368 = vsel %vm674, %v3363, %v3367
      %v3370 = vshrl.u32 %v3152, 16
      %v3372 = vshll.u32 %v3152, 16
      %v3374 = vrot.slane %v3372, 1
      %v3375 = vor.u32 %v3370, %v3374
      %v3377 = vshll.u32 %v3232, 16
      %v3379 = vrot.slane %v3377, 1
      %v3380 = vsel %vm674, %v3375, %v3379
      %v3382 = vshrl.u32 %v3153, 16
      %v3384 = vshll.u32 %v3153, 16
      %v3386 = vrot.slane %v3384, 1
      %v3387 = vor.u32 %v3382, %v3386
      %v3389 = vshll.u32 %v3233, 16
      %v3391 = vrot.slane %v3389, 1
      %v3392 = vsel %vm674, %v3387, %v3391
      %v3394 = vshrl.u32 %v3154, 16
      %v3396 = vshll.u32 %v3154, 16
      %v3398 = vrot.slane %v3396, 1
      %v3399 = vor.u32 %v3394, %v3398
      %v3401 = vshll.u32 %v3234, 16
      %v3403 = vrot.slane %v3401, 1
      %v3404 = vsel %vm674, %v3399, %v3403
      %v3406 = vshrl.u32 %v3155, 16
      %v3408 = vshll.u32 %v3155, 16
      %v3410 = vrot.slane %v3408, 1
      %v3411 = vor.u32 %v3406, %v3410
      %v3413 = vshll.u32 %v3235, 16
      %v3415 = vrot.slane %v3413, 1
      %v3416 = vsel %vm674, %v3411, %v3415
      %v3418 = vshrl.u32 %v3156, 16
      %v3420 = vshll.u32 %v3156, 16
      %v3422 = vrot.slane %v3420, 1
      %v3423 = vor.u32 %v3418, %v3422
      %v3425 = vshll.u32 %v3236, 16
      %v3427 = vrot.slane %v3425, 1
      %v3428 = vsel %vm674, %v3423, %v3427
      %3429 = vrot.lane.b32.xlu0 %v3248, 80
      %v3430 = vpop.permute.xlu0 %3429
      %3431 = vrot.lane.b32.xlu0 %v3260, 80
      %v3432 = vpop.permute.xlu0 %3431
      %3433 = vrot.lane.b32.xlu0 %v3272, 80
      %v3434 = vpop.permute.xlu0 %3433
      %3435 = vrot.lane.b32.xlu0 %v3284, 80
      %v3436 = vpop.permute.xlu0 %3435
      %3437 = vrot.lane.b32.xlu0 %v3296, 80
      %v3438 = vpop.permute.xlu0 %3437
      %3439 = vrot.lane.b32.xlu0 %v3308, 80
      %v3440 = vpop.permute.xlu0 %3439
      %3441 = vrot.lane.b32.xlu0 %v3320, 80
      %v3442 = vpop.permute.xlu0 %3441
      %3443 = vrot.lane.b32.xlu0 %v3332, 80
      %v3444 = vpop.permute.xlu0 %3443
      %3445 = vrot.lane.b32.xlu0 %v3344, 80
      %v3446 = vpop.permute.xlu0 %3445
      %3447 = vrot.lane.b32.xlu0 %v3356, 80
      %v3448 = vpop.permute.xlu0 %3447
      %3449 = vrot.lane.b32.xlu0 %v3368, 80
      %v3450 = vpop.permute.xlu0 %3449
      %3451 = vrot.lane.b32.xlu0 %v3380, 80
      %v3452 = vpop.permute.xlu0 %3451
      %3453 = vrot.lane.b32.xlu0 %v3392, 80
      %v3454 = vpop.permute.xlu0 %3453
      %3455 = vrot.lane.b32.xlu0 %v3404, 80
      %v3456 = vpop.permute.xlu0 %3455
      %3457 = vrot.lane.b32.xlu0 %v3416, 80
      %v3458 = vpop.permute.xlu0 %3457
      %3459 = vrot.lane.b32.xlu0 %v3428, 80
      %v3460 = vpop.permute.xlu0 %3459
      %v3477 = vunpack.c.l.b16 %v514
      %v3478 = vunpack.c.l.b16 %v515
      %v3479 = vunpack.c.l.b16 %v516
      %v3480 = vunpack.c.l.b16 %v517
      %v3481 = vunpack.c.l.b16 %v518
      %v3482 = vunpack.c.l.b16 %v519
      %v3483 = vunpack.c.l.b16 %v520
      %v3484 = vunpack.c.l.b16 %v521
      %v3485 = vunpack.c.l.b16 %v522
      %v3486 = vunpack.c.l.b16 %v523
      %v3487 = vunpack.c.l.b16 %v524
      %v3488 = vunpack.c.l.b16 %v525
      %v3489 = vunpack.c.l.b16 %v526
      %v3490 = vunpack.c.l.b16 %v527
      %v3491 = vunpack.c.l.b16 %v528
      %v3492 = vunpack.c.l.b16 %v529
      %v3493 = vpack.c.b16 %v3110, %v3477
      %v3494 = vpack.c.b16 %v3112, %v3478
      %v3495 = vpack.c.b16 %v3114, %v3479
      %v3496 = vpack.c.b16 %v3116, %v3480
      %v3497 = vpack.c.b16 %v3118, %v3481
      %v3498 = vpack.c.b16 %v3120, %v3482
      %v3499 = vpack.c.b16 %v3122, %v3483
      %v3500 = vpack.c.b16 %v3124, %v3484
      %v3501 = vpack.c.b16 %v3126, %v3485
      %v3502 = vpack.c.b16 %v3128, %v3486
      %v3503 = vpack.c.b16 %v3130, %v3487
      %v3504 = vpack.c.b16 %v3132, %v3488
      %v3505 = vpack.c.b16 %v3134, %v3489
      %v3506 = vpack.c.b16 %v3136, %v3490
      %v3507 = vpack.c.b16 %v3138, %v3491
      %v3508 = vpack.c.b16 %v3140, %v3492
      %v3509 = vrot.slane %v3493, 1
      %v3510 = vrot.slane %v3221, 1
      %v3511 = vsel %vm947, %v3509, %v3510
      %v3512 = vrot.slane %v3494, 1
      %v3513 = vrot.slane %v3222, 1
      %v3514 = vsel %vm947, %v3512, %v3513
      %v3515 = vrot.slane %v3495, 1
      %v3516 = vrot.slane %v3223, 1
      %v3517 = vsel %vm947, %v3515, %v3516
      %v3518 = vrot.slane %v3496, 1
      %v3519 = vrot.slane %v3224, 1
      %v3520 = vsel %vm947, %v3518, %v3519
      %v3521 = vrot.slane %v3497, 1
      %v3522 = vrot.slane %v3225, 1
      %v3523 = vsel %vm947, %v3521, %v3522
      %v3524 = vrot.slane %v3498, 1
      %v3525 = vrot.slane %v3226, 1
      %v3526 = vsel %vm947, %v3524, %v3525
      %v3527 = vrot.slane %v3499, 1
      %v3528 = vrot.slane %v3227, 1
      %v3529 = vsel %vm947, %v3527, %v3528
      %v3530 = vrot.slane %v3500, 1
      %v3531 = vrot.slane %v3228, 1
      %v3532 = vsel %vm947, %v3530, %v3531
      %v3533 = vrot.slane %v3501, 1
      %v3534 = vrot.slane %v3229, 1
      %v3535 = vsel %vm947, %v3533, %v3534
      %v3536 = vrot.slane %v3502, 1
      %v3537 = vrot.slane %v3230, 1
      %v3538 = vsel %vm947, %v3536, %v3537
      %v3539 = vrot.slane %v3503, 1
      %v3540 = vrot.slane %v3231, 1
      %v3541 = vsel %vm947, %v3539, %v3540
      %v3542 = vrot.slane %v3504, 1
      %v3543 = vrot.slane %v3232, 1
      %v3544 = vsel %vm947, %v3542, %v3543
      %v3545 = vrot.slane %v3505, 1
      %v3546 = vrot.slane %v3233, 1
      %v3547 = vsel %vm947, %v3545, %v3546
      %v3548 = vrot.slane %v3506, 1
      %v3549 = vrot.slane %v3234, 1
      %v3550 = vsel %vm947, %v3548, %v3549
      %v3551 = vrot.slane %v3507, 1
      %v3552 = vrot.slane %v3235, 1
      %v3553 = vsel %vm947, %v3551, %v3552
      %v3554 = vrot.slane %v3508, 1
      %v3555 = vrot.slane %v3236, 1
      %v3556 = vsel %vm947, %v3554, %v3555
      %3557 = vrot.lane.b32.xlu0 %v3511, 96
      %v3558 = vpop.permute.xlu0 %3557
      %3559 = vrot.lane.b32.xlu0 %v3514, 96
      %v3560 = vpop.permute.xlu0 %3559
      %3561 = vrot.lane.b32.xlu0 %v3517, 96
      %v3562 = vpop.permute.xlu0 %3561
      %3563 = vrot.lane.b32.xlu0 %v3520, 96
      %v3564 = vpop.permute.xlu0 %3563
      %3565 = vrot.lane.b32.xlu0 %v3523, 96
      %v3566 = vpop.permute.xlu0 %3565
      %3567 = vrot.lane.b32.xlu0 %v3526, 96
      %v3568 = vpop.permute.xlu0 %3567
      %3569 = vrot.lane.b32.xlu0 %v3529, 96
      %v3570 = vpop.permute.xlu0 %3569
      %3571 = vrot.lane.b32.xlu0 %v3532, 96
      %v3572 = vpop.permute.xlu0 %3571
      %3573 = vrot.lane.b32.xlu0 %v3535, 96
      %v3574 = vpop.permute.xlu0 %3573
      %3575 = vrot.lane.b32.xlu0 %v3538, 96
      %v3576 = vpop.permute.xlu0 %3575
      %3577 = vrot.lane.b32.xlu0 %v3541, 96
      %v3578 = vpop.permute.xlu0 %3577
      %3579 = vrot.lane.b32.xlu0 %v3544, 96
      %v3580 = vpop.permute.xlu0 %3579
      %3581 = vrot.lane.b32.xlu0 %v3547, 96
      %v3582 = vpop.permute.xlu0 %3581
      %3583 = vrot.lane.b32.xlu0 %v3550, 96
      %v3584 = vpop.permute.xlu0 %3583
      %3585 = vrot.lane.b32.xlu0 %v3553, 96
      %v3586 = vpop.permute.xlu0 %3585
      %3587 = vrot.lane.b32.xlu0 %v3556, 96
      %v3588 = vpop.permute.xlu0 %3587
      %v3605 = vunpack.c.l.b16 %v530
      %v3606 = vunpack.c.l.b16 %v531
      %v3607 = vunpack.c.l.b16 %v532
      %v3608 = vunpack.c.l.b16 %v533
      %v3609 = vunpack.c.l.b16 %v534
      %v3610 = vunpack.c.l.b16 %v535
      %v3611 = vunpack.c.l.b16 %v536
      %v3612 = vunpack.c.l.b16 %v537
      %v3613 = vunpack.c.l.b16 %v538
      %v3614 = vunpack.c.l.b16 %v539
      %v3615 = vunpack.c.l.b16 %v540
      %v3616 = vunpack.c.l.b16 %v541
      %v3617 = vunpack.c.l.b16 %v542
      %v3618 = vunpack.c.l.b16 %v543
      %v3619 = vunpack.c.l.b16 %v544
      %v3620 = vunpack.c.l.b16 %v545
      %v3621 = vpack.c.b16 %v3605, %v3605
      %v3622 = vpack.c.b16 %v3606, %v3606
      %v3623 = vpack.c.b16 %v3607, %v3607
      %v3624 = vpack.c.b16 %v3608, %v3608
      %v3625 = vpack.c.b16 %v3609, %v3609
      %v3626 = vpack.c.b16 %v3610, %v3610
      %v3627 = vpack.c.b16 %v3611, %v3611
      %v3628 = vpack.c.b16 %v3612, %v3612
      %v3629 = vpack.c.b16 %v3613, %v3613
      %v3630 = vpack.c.b16 %v3614, %v3614
      %v3631 = vpack.c.b16 %v3615, %v3615
      %v3632 = vpack.c.b16 %v3616, %v3616
      %v3633 = vpack.c.b16 %v3617, %v3617
      %v3634 = vpack.c.b16 %v3618, %v3618
      %v3635 = vpack.c.b16 %v3619, %v3619
      %v3636 = vpack.c.b16 %v3620, %v3620
      %v3638 = vshrl.u32 %v3493, 16
      %v3640 = vrot.slane %v3638, 1
      %v3641 = vshll.u32 %v3493, 16
      %v3643 = vrot.slane %v3641, 2
      %v3644 = vor.u32 %v3640, %v3643
      %v3646 = vshrl.u32 %v3621, 16
      %v3648 = vrot.slane %v3646, 1
      %v3649 = vshll.u32 %v3621, 16
      %v3651 = vrot.slane %v3649, 2
      %v3652 = vor.u32 %v3648, %v3651
      %v3653 = vsel %vm1076, %v3644, %v3652
      %v3655 = vshrl.u32 %v3494, 16
      %v3657 = vrot.slane %v3655, 1
      %v3658 = vshll.u32 %v3494, 16
      %v3660 = vrot.slane %v3658, 2
      %v3661 = vor.u32 %v3657, %v3660
      %v3663 = vshrl.u32 %v3622, 16
      %v3665 = vrot.slane %v3663, 1
      %v3666 = vshll.u32 %v3622, 16
      %v3668 = vrot.slane %v3666, 2
      %v3669 = vor.u32 %v3665, %v3668
      %v3670 = vsel %vm1076, %v3661, %v3669
      %v3672 = vshrl.u32 %v3495, 16
      %v3674 = vrot.slane %v3672, 1
      %v3675 = vshll.u32 %v3495, 16
      %v3677 = vrot.slane %v3675, 2
      %v3678 = vor.u32 %v3674, %v3677
      %v3680 = vshrl.u32 %v3623, 16
      %v3682 = vrot.slane %v3680, 1
      %v3683 = vshll.u32 %v3623, 16
      %v3685 = vrot.slane %v3683, 2
      %v3686 = vor.u32 %v3682, %v3685
      %v3687 = vsel %vm1076, %v3678, %v3686
      %v3689 = vshrl.u32 %v3496, 16
      %v3691 = vrot.slane %v3689, 1
      %v3692 = vshll.u32 %v3496, 16
      %v3694 = vrot.slane %v3692, 2
      %v3695 = vor.u32 %v3691, %v3694
      %v3697 = vshrl.u32 %v3624, 16
      %v3699 = vrot.slane %v3697, 1
      %v3700 = vshll.u32 %v3624, 16
      %v3702 = vrot.slane %v3700, 2
      %v3703 = vor.u32 %v3699, %v3702
      %v3704 = vsel %vm1076, %v3695, %v3703
      %v3706 = vshrl.u32 %v3497, 16
      %v3708 = vrot.slane %v3706, 1
      %v3709 = vshll.u32 %v3497, 16
      %v3711 = vrot.slane %v3709, 2
      %v3712 = vor.u32 %v3708, %v3711
      %v3714 = vshrl.u32 %v3625, 16
      %v3716 = vrot.slane %v3714, 1
      %v3717 = vshll.u32 %v3625, 16
      %v3719 = vrot.slane %v3717, 2
      %v3720 = vor.u32 %v3716, %v3719
      %v3721 = vsel %vm1076, %v3712, %v3720
      %v3723 = vshrl.u32 %v3498, 16
      %v3725 = vrot.slane %v3723, 1
      %v3726 = vshll.u32 %v3498, 16
      %v3728 = vrot.slane %v3726, 2
      %v3729 = vor.u32 %v3725, %v3728
      %v3731 = vshrl.u32 %v3626, 16
      %v3733 = vrot.slane %v3731, 1
      %v3734 = vshll.u32 %v3626, 16
      %v3736 = vrot.slane %v3734, 2
      %v3737 = vor.u32 %v3733, %v3736
      %v3738 = vsel %vm1076, %v3729, %v3737
      %v3740 = vshrl.u32 %v3499, 16
      %v3742 = vrot.slane %v3740, 1
      %v3743 = vshll.u32 %v3499, 16
      %v3745 = vrot.slane %v3743, 2
      %v3746 = vor.u32 %v3742, %v3745
      %v3748 = vshrl.u32 %v3627, 16
      %v3750 = vrot.slane %v3748, 1
      %v3751 = vshll.u32 %v3627, 16
      %v3753 = vrot.slane %v3751, 2
      %v3754 = vor.u32 %v3750, %v3753
      %v3755 = vsel %vm1076, %v3746, %v3754
      %v3757 = vshrl.u32 %v3500, 16
      %v3759 = vrot.slane %v3757, 1
      %v3760 = vshll.u32 %v3500, 16
      %v3762 = vrot.slane %v3760, 2
      %v3763 = vor.u32 %v3759, %v3762
      %v3765 = vshrl.u32 %v3628, 16
      %v3767 = vrot.slane %v3765, 1
      %v3768 = vshll.u32 %v3628, 16
      %v3770 = vrot.slane %v3768, 2
      %v3771 = vor.u32 %v3767, %v3770
      %v3772 = vsel %vm1076, %v3763, %v3771
      %v3774 = vshrl.u32 %v3501, 16
      %v3776 = vrot.slane %v3774, 1
      %v3777 = vshll.u32 %v3501, 16
      %v3779 = vrot.slane %v3777, 2
      %v3780 = vor.u32 %v3776, %v3779
      %v3782 = vshrl.u32 %v3629, 16
      %v3784 = vrot.slane %v3782, 1
      %v3785 = vshll.u32 %v3629, 16
      %v3787 = vrot.slane %v3785, 2
      %v3788 = vor.u32 %v3784, %v3787
      %v3789 = vsel %vm1076, %v3780, %v3788
      %v3791 = vshrl.u32 %v3502, 16
      %v3793 = vrot.slane %v3791, 1
      %v3794 = vshll.u32 %v3502, 16
      %v3796 = vrot.slane %v3794, 2
      %v3797 = vor.u32 %v3793, %v3796
      %v3799 = vshrl.u32 %v3630, 16
      %v3801 = vrot.slane %v3799, 1
      %v3802 = vshll.u32 %v3630, 16
      %v3804 = vrot.slane %v3802, 2
      %v3805 = vor.u32 %v3801, %v3804
      %v3806 = vsel %vm1076, %v3797, %v3805
      %v3808 = vshrl.u32 %v3503, 16
      %v3810 = vrot.slane %v3808, 1
      %v3811 = vshll.u32 %v3503, 16
      %v3813 = vrot.slane %v3811, 2
      %v3814 = vor.u32 %v3810, %v3813
      %v3816 = vshrl.u32 %v3631, 16
      %v3818 = vrot.slane %v3816, 1
      %v3819 = vshll.u32 %v3631, 16
      %v3821 = vrot.slane %v3819, 2
      %v3822 = vor.u32 %v3818, %v3821
      %v3823 = vsel %vm1076, %v3814, %v3822
      %v3825 = vshrl.u32 %v3504, 16
      %v3827 = vrot.slane %v3825, 1
      %v3828 = vshll.u32 %v3504, 16
      %v3830 = vrot.slane %v3828, 2
      %v3831 = vor.u32 %v3827, %v3830
      %v3833 = vshrl.u32 %v3632, 16
      %v3835 = vrot.slane %v3833, 1
      %v3836 = vshll.u32 %v3632, 16
      %v3838 = vrot.slane %v3836, 2
      %v3839 = vor.u32 %v3835, %v3838
      %v3840 = vsel %vm1076, %v3831, %v3839
      %v3842 = vshrl.u32 %v3505, 16
      %v3844 = vrot.slane %v3842, 1
      %v3845 = vshll.u32 %v3505, 16
      %v3847 = vrot.slane %v3845, 2
      %v3848 = vor.u32 %v3844, %v3847
      %v3850 = vshrl.u32 %v3633, 16
      %v3852 = vrot.slane %v3850, 1
      %v3853 = vshll.u32 %v3633, 16
      %v3855 = vrot.slane %v3853, 2
      %v3856 = vor.u32 %v3852, %v3855
      %v3857 = vsel %vm1076, %v3848, %v3856
      %v3859 = vshrl.u32 %v3506, 16
      %v3861 = vrot.slane %v3859, 1
      %v3862 = vshll.u32 %v3506, 16
      %v3864 = vrot.slane %v3862, 2
      %v3865 = vor.u32 %v3861, %v3864
      %v3867 = vshrl.u32 %v3634, 16
      %v3869 = vrot.slane %v3867, 1
      %v3870 = vshll.u32 %v3634, 16
      %v3872 = vrot.slane %v3870, 2
      %v3873 = vor.u32 %v3869, %v3872
      %v3874 = vsel %vm1076, %v3865, %v3873
      %v3876 = vshrl.u32 %v3507, 16
      %v3878 = vrot.slane %v3876, 1
      %v3879 = vshll.u32 %v3507, 16
      %v3881 = vrot.slane %v3879, 2
      %v3882 = vor.u32 %v3878, %v3881
      %v3884 = vshrl.u32 %v3635, 16
      %v3886 = vrot.slane %v3884, 1
      %v3887 = vshll.u32 %v3635, 16
      %v3889 = vrot.slane %v3887, 2
      %v3890 = vor.u32 %v3886, %v3889
      %v3891 = vsel %vm1076, %v3882, %v3890
      %v3893 = vshrl.u32 %v3508, 16
      %v3895 = vrot.slane %v3893, 1
      %v3896 = vshll.u32 %v3508, 16
      %v3898 = vrot.slane %v3896, 2
      %v3899 = vor.u32 %v3895, %v3898
      %v3901 = vshrl.u32 %v3636, 16
      %v3903 = vrot.slane %v3901, 1
      %v3904 = vshll.u32 %v3636, 16
      %v3906 = vrot.slane %v3904, 2
      %v3907 = vor.u32 %v3903, %v3906
      %v3908 = vsel %vm1076, %v3899, %v3907
      %3909 = vrot.lane.b32.xlu0 %v3653, 112
      %v3910 = vpop.permute.xlu0 %3909
      %3911 = vrot.lane.b32.xlu0 %v3670, 112
      %v3912 = vpop.permute.xlu0 %3911
      %3913 = vrot.lane.b32.xlu0 %v3687, 112
      %v3914 = vpop.permute.xlu0 %3913
      %3915 = vrot.lane.b32.xlu0 %v3704, 112
      %v3916 = vpop.permute.xlu0 %3915
      %3917 = vrot.lane.b32.xlu0 %v3721, 112
      %v3918 = vpop.permute.xlu0 %3917
      %3919 = vrot.lane.b32.xlu0 %v3738, 112
      %v3920 = vpop.permute.xlu0 %3919
      %3921 = vrot.lane.b32.xlu0 %v3755, 112
      %v3922 = vpop.permute.xlu0 %3921
      %3923 = vrot.lane.b32.xlu0 %v3772, 112
      %v3924 = vpop.permute.xlu0 %3923
      %3925 = vrot.lane.b32.xlu0 %v3789, 112
      %v3926 = vpop.permute.xlu0 %3925
      %3927 = vrot.lane.b32.xlu0 %v3806, 112
      %v3928 = vpop.permute.xlu0 %3927
      %3929 = vrot.lane.b32.xlu0 %v3823, 112
      %v3930 = vpop.permute.xlu0 %3929
      %3931 = vrot.lane.b32.xlu0 %v3840, 112
      %v3932 = vpop.permute.xlu0 %3931
      %3933 = vrot.lane.b32.xlu0 %v3857, 112
      %v3934 = vpop.permute.xlu0 %3933
      %3935 = vrot.lane.b32.xlu0 %v3874, 112
      %v3936 = vpop.permute.xlu0 %3935
      %3937 = vrot.lane.b32.xlu0 %v3891, 112
      %v3938 = vpop.permute.xlu0 %3937
      %3939 = vrot.lane.b32.xlu0 %v3908, 112
      %v3940 = vpop.permute.xlu0 %3939
      %vm3941 = vcmask 130048
      %v3943 = vsel %vm3941, %v610, %v868
      %v3945 = vsel %vm3941, %v611, %v870
      %v3947 = vsel %vm3941, %v612, %v872
      %v3949 = vsel %vm3941, %v613, %v874
      %v3951 = vsel %vm3941, %v614, %v876
      %v3953 = vsel %vm3941, %v615, %v878
      %v3955 = vsel %vm3941, %v616, %v880
      %v3957 = vsel %vm3941, %v617, %v882
      %v3959 = vsel %vm3941, %v618, %v884
      %v3961 = vsel %vm3941, %v619, %v886
      %v3963 = vsel %vm3941, %v620, %v888
      %v3965 = vsel %vm3941, %v621, %v890
      %v3967 = vsel %vm3941, %v622, %v892
      %v3969 = vsel %vm3941, %v623, %v894
      %v3971 = vsel %vm3941, %v624, %v896
      %v3973 = vsel %vm3941, %v625, %v898
      %vm3974 = vcmask 261120
      %v3976 = vsel %vm3974, %v3943, %v997
      %v3978 = vsel %vm3974, %v3945, %v999
      %v3980 = vsel %vm3974, %v3947, %v1001
      %v3982 = vsel %vm3974, %v3949, %v1003
      %v3984 = vsel %vm3974, %v3951, %v1005
      %v3986 = vsel %vm3974, %v3953, %v1007
      %v3988 = vsel %vm3974, %v3955, %v1009
      %v3990 = vsel %vm3974, %v3957, %v1011
      %v3992 = vsel %vm3974, %v3959, %v1013
      %v3994 = vsel %vm3974, %v3961, %v1015
      %v3996 = vsel %vm3974, %v3963, %v1017
      %v3998 = vsel %vm3974, %v3965, %v1019
      %v4000 = vsel %vm3974, %v3967, %v1021
      %v4002 = vsel %vm3974, %v3969, %v1023
      %v4004 = vsel %vm3974, %v3971, %v1025
      %v4006 = vsel %vm3974, %v3973, %v1027
      %vm4007 = vcmask 392192
      %v4009 = vsel %vm4007, %v3976, %v1350
      %v4011 = vsel %vm4007, %v3978, %v1352
      %v4013 = vsel %vm4007, %v3980, %v1354
      %v4015 = vsel %vm4007, %v3982, %v1356
      %v4017 = vsel %vm4007, %v3984, %v1358
      %v4019 = vsel %vm4007, %v3986, %v1360
      %v4021 = vsel %vm4007, %v3988, %v1362
      %v4023 = vsel %vm4007, %v3990, %v1364
      %v4025 = vsel %vm4007, %v3992, %v1366
      %v4027 = vsel %vm4007, %v3994, %v1368
      %v4029 = vsel %vm4007, %v3996, %v1370
      %v4031 = vsel %vm4007, %v3998, %v1372
      %v4033 = vsel %vm4007, %v4000, %v1374
      %v4035 = vsel %vm4007, %v4002, %v1376
      %v4037 = vsel %vm4007, %v4004, %v1378
      %v4039 = vsel %vm4007, %v4006, %v1380
      %vm4040 = vcmask 523264
      %v4042 = vsel %vm4040, %v4009, %v1462
      %v4044 = vsel %vm4040, %v4011, %v1464
      %v4046 = vsel %vm4040, %v4013, %v1466
      %v4048 = vsel %vm4040, %v4015, %v1468
      %v4050 = vsel %vm4040, %v4017, %v1470
      %v4052 = vsel %vm4040, %v4019, %v1472
      %v4054 = vsel %vm4040, %v4021, %v1474
      %v4056 = vsel %vm4040, %v4023, %v1476
      %v4058 = vsel %vm4040, %v4025, %v1478
      %v4060 = vsel %vm4040, %v4027, %v1480
      %v4062 = vsel %vm4040, %v4029, %v1482
      %v4064 = vsel %vm4040, %v4031, %v1484
      %v4066 = vsel %vm4040, %v4033, %v1486
      %v4068 = vsel %vm4040, %v4035, %v1488
      %v4070 = vsel %vm4040, %v4037, %v1490
      %v4072 = vsel %vm4040, %v4039, %v1492
      %vm4073 = vcmask 654336
      %v4075 = vsel %vm4073, %v4042, %v1734
      %v4077 = vsel %vm4073, %v4044, %v1736
      %v4079 = vsel %vm4073, %v4046, %v1738
      %v4081 = vsel %vm4073, %v4048, %v1740
      %v4083 = vsel %vm4073, %v4050, %v1742
      %v4085 = vsel %vm4073, %v4052, %v1744
      %v4087 = vsel %vm4073, %v4054, %v1746
      %v4089 = vsel %vm4073, %v4056, %v1748
      %v4091 = vsel %vm4073, %v4058, %v1750
      %v4093 = vsel %vm4073, %v4060, %v1752
      %v4095 = vsel %vm4073, %v4062, %v1754
      %v4097 = vsel %vm4073, %v4064, %v1756
      %v4099 = vsel %vm4073, %v4066, %v1758
      %v4101 = vsel %vm4073, %v4068, %v1760
      %v4103 = vsel %vm4073, %v4070, %v1762
      %v4105 = vsel %vm4073, %v4072, %v1764
      %vm4106 = vcmask 785408
      %v4108 = vsel %vm4106, %v4075, %v1862
      %v4110 = vsel %vm4106, %v4077, %v1864
      %v4112 = vsel %vm4106, %v4079, %v1866
      %v4114 = vsel %vm4106, %v4081, %v1868
      %v4116 = vsel %vm4106, %v4083, %v1870
      %v4118 = vsel %vm4106, %v4085, %v1872
      %v4120 = vsel %vm4106, %v4087, %v1874
      %v4122 = vsel %vm4106, %v4089, %v1876
      %v4124 = vsel %vm4106, %v4091, %v1878
      %v4126 = vsel %vm4106, %v4093, %v1880
      %v4128 = vsel %vm4106, %v4095, %v1882
      %v4130 = vsel %vm4106, %v4097, %v1884
      %v4132 = vsel %vm4106, %v4099, %v1886
      %v4134 = vsel %vm4106, %v4101, %v1888
      %v4136 = vsel %vm4106, %v4103, %v1890
      %v4138 = vsel %vm4106, %v4105, %v1892
      %vm4139 = vcmask 916480
      %v4141 = vsel %vm4139, %v4108, %v2214
      %v4144 = vsel %vm4139, %v4110, %v2216
      %v4147 = vsel %vm4139, %v4112, %v2218
      %v4150 = vsel %vm4139, %v4114, %v2220
      %v4153 = vsel %vm4139, %v4116, %v2222
      %v4156 = vsel %vm4139, %v4118, %v2224
      %v4159 = vsel %vm4139, %v4120, %v2226
      %v4162 = vsel %vm4139, %v4122, %v2228
      %v4165 = vsel %vm4139, %v4124, %v2230
      %v4168 = vsel %vm4139, %v4126, %v2232
      %v4171 = vsel %vm4139, %v4128, %v2234
      %v4174 = vsel %vm4139, %v4130, %v2236
      %v4177 = vsel %vm4139, %v4132, %v2238
      %v4180 = vsel %vm4139, %v4134, %v2240
      %v4183 = vsel %vm4139, %v4136, %v2242
      %v4186 = vsel %vm4139, %v4138, %v2244
      %v4189 = vsel %vm3941, %v2309, %v2566
      %v4191 = vsel %vm3941, %v2310, %v2568
      %v4193 = vsel %vm3941, %v2311, %v2570
      %v4195 = vsel %vm3941, %v2312, %v2572
      %v4197 = vsel %vm3941, %v2313, %v2574
      %v4199 = vsel %vm3941, %v2314, %v2576
      %v4201 = vsel %vm3941, %v2315, %v2578
      %v4203 = vsel %vm3941, %v2316, %v2580
      %v4205 = vsel %vm3941, %v2317, %v2582
      %v4207 = vsel %vm3941, %v2318, %v2584
      %v4209 = vsel %vm3941, %v2319, %v2586
      %v4211 = vsel %vm3941, %v2320, %v2588
      %v4213 = vsel %vm3941, %v2321, %v2590
      %v4215 = vsel %vm3941, %v2322, %v2592
      %v4217 = vsel %vm3941, %v2323, %v2594
      %v4219 = vsel %vm3941, %v2324, %v2596
      %v4221 = vsel %vm3974, %v4189, %v2694
      %v4223 = vsel %vm3974, %v4191, %v2696
      %v4225 = vsel %vm3974, %v4193, %v2698
      %v4227 = vsel %vm3974, %v4195, %v2700
      %v4229 = vsel %vm3974, %v4197, %v2702
      %v4231 = vsel %vm3974, %v4199, %v2704
      %v4233 = vsel %vm3974, %v4201, %v2706
      %v4235 = vsel %vm3974, %v4203, %v2708
      %v4237 = vsel %vm3974, %v4205, %v2710
      %v4239 = vsel %vm3974, %v4207, %v2712
      %v4241 = vsel %vm3974, %v4209, %v2714
      %v4243 = vsel %vm3974, %v4211, %v2716
      %v4245 = vsel %vm3974, %v4213, %v2718
      %v4247 = vsel %vm3974, %v4215, %v2720
      %v4249 = vsel %vm3974, %v4217, %v2722
      %v4251 = vsel %vm3974, %v4219, %v2724
      %v4253 = vsel %vm4007, %v4221, %v3046
      %v4255 = vsel %vm4007, %v4223, %v3048
      %v4257 = vsel %vm4007, %v4225, %v3050
      %v4259 = vsel %vm4007, %v4227, %v3052
      %v4261 = vsel %vm4007, %v4229, %v3054
      %v4263 = vsel %vm4007, %v4231, %v3056
      %v4265 = vsel %vm4007, %v4233, %v3058
      %v4267 = vsel %vm4007, %v4235, %v3060
      %v4269 = vsel %vm4007, %v4237, %v3062
      %v4271 = vsel %vm4007, %v4239, %v3064
      %v4273 = vsel %vm4007, %v4241, %v3066
      %v4275 = vsel %vm4007, %v4243, %v3068
      %v4277 = vsel %vm4007, %v4245, %v3070
      %v4279 = vsel %vm4007, %v4247, %v3072
      %v4281 = vsel %vm4007, %v4249, %v3074
      %v4283 = vsel %vm4007, %v4251, %v3076
      %v4285 = vsel %vm4040, %v4253, %v3158
      %v4287 = vsel %vm4040, %v4255, %v3160
      %v4289 = vsel %vm4040, %v4257, %v3162
      %v4291 = vsel %vm4040, %v4259, %v3164
      %v4293 = vsel %vm4040, %v4261, %v3166
      %v4295 = vsel %vm4040, %v4263, %v3168
      %v4297 = vsel %vm4040, %v4265, %v3170
      %v4299 = vsel %vm4040, %v4267, %v3172
      %v4301 = vsel %vm4040, %v4269, %v3174
      %v4303 = vsel %vm4040, %v4271, %v3176
      %v4305 = vsel %vm4040, %v4273, %v3178
      %v4307 = vsel %vm4040, %v4275, %v3180
      %v4309 = vsel %vm4040, %v4277, %v3182
      %v4311 = vsel %vm4040, %v4279, %v3184
      %v4313 = vsel %vm4040, %v4281, %v3186
      %v4315 = vsel %vm4040, %v4283, %v3188
      %v4317 = vsel %vm4073, %v4285, %v3430
      %v4319 = vsel %vm4073, %v4287, %v3432
      %v4321 = vsel %vm4073, %v4289, %v3434
      %v4323 = vsel %vm4073, %v4291, %v3436
      %v4325 = vsel %vm4073, %v4293, %v3438
      %v4327 = vsel %vm4073, %v4295, %v3440
      %v4329 = vsel %vm4073, %v4297, %v3442
      %v4331 = vsel %vm4073, %v4299, %v3444
      %v4333 = vsel %vm4073, %v4301, %v3446
      %v4335 = vsel %vm4073, %v4303, %v3448
      %v4337 = vsel %vm4073, %v4305, %v3450
      %v4339 = vsel %vm4073, %v4307, %v3452
      %v4341 = vsel %vm4073, %v4309, %v3454
      %v4343 = vsel %vm4073, %v4311, %v3456
      %v4345 = vsel %vm4073, %v4313, %v3458
      %v4347 = vsel %vm4073, %v4315, %v3460
      %v4349 = vsel %vm4106, %v4317, %v3558
      %v4351 = vsel %vm4106, %v4319, %v3560
      %v4353 = vsel %vm4106, %v4321, %v3562
      %v4355 = vsel %vm4106, %v4323, %v3564
      %v4357 = vsel %vm4106, %v4325, %v3566
      %v4359 = vsel %vm4106, %v4327, %v3568
      %v4361 = vsel %vm4106, %v4329, %v3570
      %v4363 = vsel %vm4106, %v4331, %v3572
      %v4365 = vsel %vm4106, %v4333, %v3574
      %v4367 = vsel %vm4106, %v4335, %v3576
      %v4369 = vsel %vm4106, %v4337, %v3578
      %v4371 = vsel %vm4106, %v4339, %v3580
      %v4373 = vsel %vm4106, %v4341, %v3582
      %v4375 = vsel %vm4106, %v4343, %v3584
      %v4377 = vsel %vm4106, %v4345, %v3586
      %v4379 = vsel %vm4106, %v4347, %v3588
      %v4381 = vsel %vm4139, %v4349, %v3910
      %v4384 = vsel %vm4139, %v4351, %v3912
      %v4387 = vsel %vm4139, %v4353, %v3914
      %v4390 = vsel %vm4139, %v4355, %v3916
      %v4393 = vsel %vm4139, %v4357, %v3918
      %v4396 = vsel %vm4139, %v4359, %v3920
      %v4399 = vsel %vm4139, %v4361, %v3922
      %v4402 = vsel %vm4139, %v4363, %v3924
      %v4405 = vsel %vm4139, %v4365, %v3926
      %v4408 = vsel %vm4139, %v4367, %v3928
      %v4411 = vsel %vm4139, %v4369, %v3930
      %v4414 = vsel %vm4139, %v4371, %v3932
      %v4417 = vsel %vm4139, %v4373, %v3934
      %v4420 = vsel %vm4139, %v4375, %v3936
      %v4423 = vsel %vm4139, %v4377, %v3938
      %v4426 = vsel %vm4139, %v4379, %v3940
      %v4428 = vld [vmem:[%s210] sm:$0xf]
      %v4429 = vld [vmem:[%s210 + $0x4] sm:$0xf]
      %v4430 = vld [vmem:[%s210 + $0x8] sm:$0xf]
      %v4431 = vld [vmem:[%s210 + $0xc] sm:$0xf]
      %v4432 = vld [vmem:[%s210 + $0x10] sm:$0xf]
      %v4433 = vld [vmem:[%s210 + $0x14] sm:$0xf]
      %v4434 = vld [vmem:[%s210 + $0x18] sm:$0xf]
      %v4435 = vld [vmem:[%s210 + $0x1c] sm:$0xf]
      %v4436 = vld [vmem:[%s210 + $0x20] sm:$0xf]
      %v4437 = vld [vmem:[%s210 + $0x24] sm:$0xf]
      %v4438 = vld [vmem:[%s210 + $0x28] sm:$0xf]
      %v4439 = vld [vmem:[%s210 + $0x2c] sm:$0xf]
      %v4440 = vld [vmem:[%s210 + $0x30] sm:$0xf]
      %v4441 = vld [vmem:[%s210 + $0x34] sm:$0xf]
      %v4442 = vld [vmem:[%s210 + $0x38] sm:$0xf]
      %v4443 = vld [vmem:[%s210 + $0x3c] sm:$0xf]
      %v4444 = vld [vmem:[%s210 + $0x40] sm:$0xf]
      %v4445 = vld [vmem:[%s210 + $0x44] sm:$0xf]
      %v4446 = vld [vmem:[%s210 + $0x48] sm:$0xf]
      %v4447 = vld [vmem:[%s210 + $0x4c] sm:$0xf]
      %v4448 = vld [vmem:[%s210 + $0x50] sm:$0xf]
      %v4449 = vld [vmem:[%s210 + $0x54] sm:$0xf]
      %v4450 = vld [vmem:[%s210 + $0x58] sm:$0xf]
      %v4451 = vld [vmem:[%s210 + $0x5c] sm:$0xf]
      %v4452 = vld [vmem:[%s210 + $0x60] sm:$0xf]
      %v4453 = vld [vmem:[%s210 + $0x64] sm:$0xf]
      %v4454 = vld [vmem:[%s210 + $0x68] sm:$0xf]
      %v4455 = vld [vmem:[%s210 + $0x6c] sm:$0xf]
      %v4456 = vld [vmem:[%s210 + $0x70] sm:$0xf]
      %v4457 = vld [vmem:[%s210 + $0x74] sm:$0xf]
      %v4458 = vld [vmem:[%s210 + $0x78] sm:$0xf]
      %v4459 = vld [vmem:[%s210 + $0x7c] sm:$0xf]
      %v4460 = vld [vmem:[%s213] sm:$0x1]
      %v4462 = vlaneseq
      %v4463 = vshrl.u32 %v4462, 7
      %v4464 = vsub.s32 0, %v4463
      %v4465 = vrot.slane %v4460, %v4464
      %v4499 = vunpack.c.l.b16 %v4428
      %v4500 = vunpack.c.l.b16 %v4429
      %v4501 = vunpack.c.l.b16 %v4430
      %v4502 = vunpack.c.l.b16 %v4431
      %v4503 = vunpack.c.l.b16 %v4432
      %v4504 = vunpack.c.l.b16 %v4433
      %v4505 = vunpack.c.l.b16 %v4434
      %v4506 = vunpack.c.l.b16 %v4435
      %v4507 = vunpack.c.l.b16 %v4436
      %v4508 = vunpack.c.l.b16 %v4437
      %v4509 = vunpack.c.l.b16 %v4438
      %v4510 = vunpack.c.l.b16 %v4439
      %v4511 = vunpack.c.l.b16 %v4440
      %v4512 = vunpack.c.l.b16 %v4441
      %v4513 = vunpack.c.l.b16 %v4442
      %v4514 = vunpack.c.l.b16 %v4443
      %v4515 = vunpack.c.l.b16 %v4444
      %v4516 = vunpack.c.l.b16 %v4445
      %v4517 = vunpack.c.l.b16 %v4446
      %v4518 = vunpack.c.l.b16 %v4447
      %v4519 = vunpack.c.l.b16 %v4448
      %v4520 = vunpack.c.l.b16 %v4449
      %v4521 = vunpack.c.l.b16 %v4450
      %v4522 = vunpack.c.l.b16 %v4451
      %v4523 = vunpack.c.l.b16 %v4452
      %v4524 = vunpack.c.l.b16 %v4453
      %v4525 = vunpack.c.l.b16 %v4454
      %v4526 = vunpack.c.l.b16 %v4455
      %v4527 = vunpack.c.l.b16 %v4456
      %v4528 = vunpack.c.l.b16 %v4457
      %v4529 = vunpack.c.l.b16 %v4458
      %v4530 = vunpack.c.l.b16 %v4459
      %v4531 = vpack.c.b16 %v4500, %v4499
      %v4532 = vpack.c.b16 %v4502, %v4501
      %v4533 = vpack.c.b16 %v4504, %v4503
      %v4534 = vpack.c.b16 %v4506, %v4505
      %v4535 = vpack.c.b16 %v4508, %v4507
      %v4536 = vpack.c.b16 %v4510, %v4509
      %v4537 = vpack.c.b16 %v4512, %v4511
      %v4538 = vpack.c.b16 %v4514, %v4513
      %v4539 = vpack.c.b16 %v4516, %v4515
      %v4540 = vpack.c.b16 %v4518, %v4517
      %v4541 = vpack.c.b16 %v4520, %v4519
      %v4542 = vpack.c.b16 %v4522, %v4521
      %v4543 = vpack.c.b16 %v4524, %v4523
      %v4544 = vpack.c.b16 %v4526, %v4525
      %v4545 = vpack.c.b16 %v4528, %v4527
      %v4546 = vpack.c.b16 %v4530, %v4529
      %4563 = vmatprep.subr.bf16.mxu0 0
      %4564 = vmatpush1.bf16.msra.mxu0 %v4531
      %4565 = vmatprep.subr.bf16.mxu0 0
      %4566 = vmatpush1.bf16.msra.mxu0 %v4532
      %4567 = vmatprep.subr.bf16.mxu0 0
      %4568 = vmatpush1.bf16.msra.mxu0 %v4533
      %4569 = vmatprep.subr.bf16.mxu0 0
      %4570 = vmatpush1.bf16.msra.mxu0 %v4534
      %4571 = vmatprep.subr.bf16.mxu0 0
      %4572 = vmatpush1.bf16.msra.mxu0 %v4535
      %4573 = vmatprep.subr.bf16.mxu0 0
      %4574 = vmatpush1.bf16.msra.mxu0 %v4536
      %4575 = vmatprep.subr.bf16.mxu0 0
      %4576 = vmatpush1.bf16.msra.mxu0 %v4537
      %4577 = vmatprep.subr.bf16.mxu0 0
      %4578 = vmatpush1.bf16.msra.mxu0 %v4538
      %4579 = vmatprep.subr.bf16.mxu0 0
      %4580 = vmatpush1.bf16.msra.mxu0 %v4539
      %4581 = vmatprep.subr.bf16.mxu0 0
      %4582 = vmatpush1.bf16.msra.mxu0 %v4540
      %4583 = vmatprep.subr.bf16.mxu0 0
      %4584 = vmatpush1.bf16.msra.mxu0 %v4541
      %4585 = vmatprep.subr.bf16.mxu0 0
      %4586 = vmatpush1.bf16.msra.mxu0 %v4542
      %4587 = vmatprep.subr.bf16.mxu0 0
      %4588 = vmatpush1.bf16.msra.mxu0 %v4543
      %4589 = vmatprep.subr.bf16.mxu0 0
      %4590 = vmatpush1.bf16.msra.mxu0 %v4544
      %4591 = vmatprep.subr.bf16.mxu0 0
      %4592 = vmatpush1.bf16.msra.mxu0 %v4545
      %4593 = vmatprep.subr.bf16.mxu0 0
      %4594 = vmatpush1.bf16.msra.mxu0 %v4546
      %4595 = vmatprep.mubr.bf16.mxu0 %v4381
      %4596 = vmatmul.mubr.bf16.gmra.mrb[0].mxu0 %v4141
      %v4597 = vpop.f32.mrb[0].mxu0
      %v4598 = vadd.f32 %v4465, %v4597
      %v4599 = vpop.f32.mrb[0].mxu0
      %v4600 = vpop.f32.mrb[0].mxu0
      %v4601 = vadd.f32 %v4465, %v4600
      %v4602 = vpop.f32.mrb[0].mxu0
      %4603 = vmatprep.mubr.bf16.mxu0 %v4384
      %4604 = vmatmul.mubr.bf16.gmra.mrb[0].mxu0 %v4144
      %v4605 = vpop.f32.mrb[0].mxu0
      %v4606 = vadd.f32 %v4465, %v4605
      %v4607 = vpop.f32.mrb[0].mxu0
      %v4608 = vpop.f32.mrb[0].mxu0
      %v4609 = vadd.f32 %v4465, %v4608
      %v4610 = vpop.f32.mrb[0].mxu0
      %4611 = vmatprep.mubr.bf16.mxu0 %v4387
      %4612 = vmatmul.mubr.bf16.gmra.mrb[0].mxu0 %v4147
      %v4613 = vpop.f32.mrb[0].mxu0
      %v4614 = vadd.f32 %v4465, %v4613
      %v4615 = vpop.f32.mrb[0].mxu0
      %v4616 = vpop.f32.mrb[0].mxu0
      %v4617 = vadd.f32 %v4465, %v4616
      %v4618 = vpop.f32.mrb[0].mxu0
      %4619 = vmatprep.mubr.bf16.mxu0 %v4390
      %4620 = vmatmul.mubr.bf16.gmra.mrb[0].mxu0 %v4150
      %v4621 = vpop.f32.mrb[0].mxu0
      %v4622 = vadd.f32 %v4465, %v4621
      %v4623 = vpop.f32.mrb[0].mxu0
      %v4624 = vpop.f32.mrb[0].mxu0
      %v4625 = vadd.f32 %v4465, %v4624
      %v4626 = vpop.f32.mrb[0].mxu0
      %4627 = vmatprep.mubr.bf16.mxu0 %v4393
      %4628 = vmatmul.mubr.bf16.gmra.mrb[0].mxu0 %v4153
      %v4629 = vpop.f32.mrb[0].mxu0
      %v4630 = vadd.f32 %v4465, %v4629
      %v4631 = vpop.f32.mrb[0].mxu0
      %v4632 = vpop.f32.mrb[0].mxu0
      %v4633 = vadd.f32 %v4465, %v4632
      %v4634 = vpop.f32.mrb[0].mxu0
      %4635 = vmatprep.mubr.bf16.mxu0 %v4396
      %4636 = vmatmul.mubr.bf16.gmra.mrb[0].mxu0 %v4156
      %v4637 = vpop.f32.mrb[0].mxu0
      %v4638 = vadd.f32 %v4465, %v4637
      %v4639 = vpop.f32.mrb[0].mxu0
      %v4640 = vpop.f32.mrb[0].mxu0
      %v4641 = vadd.f32 %v4465, %v4640
      %v4642 = vpop.f32.mrb[0].mxu0
      %4643 = vmatprep.mubr.bf16.mxu0 %v4399
      %4644 = vmatmul.mubr.bf16.gmra.mrb[0].mxu0 %v4159
      %v4645 = vpop.f32.mrb[0].mxu0
      %v4646 = vadd.f32 %v4465, %v4645
      %v4647 = vpop.f32.mrb[0].mxu0
      %v4648 = vpop.f32.mrb[0].mxu0
      %v4649 = vadd.f32 %v4465, %v4648
      %v4650 = vpop.f32.mrb[0].mxu0
      %4651 = vmatprep.mubr.bf16.mxu0 %v4402
      %4652 = vmatmul.mubr.bf16.gmra.mrb[0].mxu0 %v4162
      %v4653 = vpop.f32.mrb[0].mxu0
      %v4654 = vadd.f32 %v4465, %v4653
      %v4655 = vpop.f32.mrb[0].mxu0
      %v4656 = vpop.f32.mrb[0].mxu0
      %v4657 = vadd.f32 %v4465, %v4656
      %v4658 = vpop.f32.mrb[0].mxu0
      %4659 = vmatprep.mubr.bf16.mxu0 %v4405
      %4660 = vmatmul.mubr.bf16.gmra.mrb[0].mxu0 %v4165
      %v4661 = vpop.f32.mrb[0].mxu0
      %v4662 = vadd.f32 %v4465, %v4661
      %v4663 = vpop.f32.mrb[0].mxu0
      %v4664 = vpop.f32.mrb[0].mxu0
      %v4665 = vadd.f32 %v4465, %v4664
      %v4666 = vpop.f32.mrb[0].mxu0
      %4667 = vmatprep.mubr.bf16.mxu0 %v4408
      %4668 = vmatmul.mubr.bf16.gmra.mrb[0].mxu0 %v4168
      %v4669 = vpop.f32.mrb[0].mxu0
      %v4670 = vadd.f32 %v4465, %v4669
      %v4671 = vpop.f32.mrb[0].mxu0
      %v4672 = vpop.f32.mrb[0].mxu0
      %v4673 = vadd.f32 %v4465, %v4672
      %v4674 = vpop.f32.mrb[0].mxu0
      %4675 = vmatprep.mubr.bf16.mxu0 %v4411
      %4676 = vmatmul.mubr.bf16.gmra.mrb[0].mxu0 %v4171
      %v4677 = vpop.f32.mrb[0].mxu0
      %v4678 = vadd.f32 %v4465, %v4677
      %v4679 = vpop.f32.mrb[0].mxu0
      %v4680 = vpop.f32.mrb[0].mxu0
      %v4681 = vadd.f32 %v4465, %v4680
      %v4682 = vpop.f32.mrb[0].mxu0
      %4683 = vmatprep.mubr.bf16.mxu0 %v4414
      %4684 = vmatmul.mubr.bf16.gmra.mrb[0].mxu0 %v4174
      %v4685 = vpop.f32.mrb[0].mxu0
      %v4686 = vadd.f32 %v4465, %v4685
      %v4687 = vpop.f32.mrb[0].mxu0
      %v4688 = vpop.f32.mrb[0].mxu0
      %v4689 = vadd.f32 %v4465, %v4688
      %v4690 = vpop.f32.mrb[0].mxu0
      %4691 = vmatprep.mubr.bf16.mxu0 %v4417
      %4692 = vmatmul.mubr.bf16.gmra.mrb[0].mxu0 %v4177
      %v4693 = vpop.f32.mrb[0].mxu0
      %v4694 = vadd.f32 %v4465, %v4693
      %v4695 = vpop.f32.mrb[0].mxu0
      %v4696 = vpop.f32.mrb[0].mxu0
      %v4697 = vadd.f32 %v4465, %v4696
      %v4698 = vpop.f32.mrb[0].mxu0
      %4699 = vmatprep.mubr.bf16.mxu0 %v4420
      %4700 = vmatmul.mubr.bf16.gmra.mrb[0].mxu0 %v4180
      %v4701 = vpop.f32.mrb[0].mxu0
      %v4702 = vadd.f32 %v4465, %v4701
      %v4703 = vpop.f32.mrb[0].mxu0
      %v4704 = vpop.f32.mrb[0].mxu0
      %v4705 = vadd.f32 %v4465, %v4704
      %v4706 = vpop.f32.mrb[0].mxu0
      %4707 = vmatprep.mubr.bf16.mxu0 %v4423
      %4708 = vmatmul.mubr.bf16.gmra.mrb[0].mxu0 %v4183
      %v4709 = vpop.f32.mrb[0].mxu0
      %v4710 = vadd.f32 %v4465, %v4709
      %v4711 = vpop.f32.mrb[0].mxu0
      %v4712 = vpop.f32.mrb[0].mxu0
      %v4713 = vadd.f32 %v4465, %v4712
      %v4714 = vpop.f32.mrb[0].mxu0
      %4715 = vmatprep.mubr.bf16.mxu0 %v4426
      %4716 = vmatmul.mubr.bf16.gmra.mrb[0].mxu0 %v4186
      %v4717 = vpop.f32.mrb[0].mxu0
      %v4718 = vadd.f32 %v4465, %v4717
      %v4719 = vpop.f32.mrb[0].mxu0
      %v4720 = vpop.f32.mrb[0].mxu0
      %v4721 = vadd.f32 %v4465, %v4720
      %v4722 = vpop.f32.mrb[0].mxu0
      %4723 = vdwg.mxu0
      %v4724 = vmax.f32 %v4598, 0.0
      %v4725 = vmax.f32 %v4601, 0.0
      %v4726 = vmax.f32 %v4606, 0.0
      %v4727 = vmax.f32 %v4609, 0.0
      %v4728 = vmax.f32 %v4614, 0.0
      %v4729 = vmax.f32 %v4617, 0.0
      %v4730 = vmax.f32 %v4622, 0.0
      %v4731 = vmax.f32 %v4625, 0.0
      %v4732 = vmax.f32 %v4630, 0.0
      %v4733 = vmax.f32 %v4633, 0.0
      %v4734 = vmax.f32 %v4638, 0.0
      %v4735 = vmax.f32 %v4641, 0.0
      %v4736 = vmax.f32 %v4646, 0.0
      %v4737 = vmax.f32 %v4649, 0.0
      %v4738 = vmax.f32 %v4654, 0.0
      %v4739 = vmax.f32 %v4657, 0.0
      %v4740 = vmax.f32 %v4662, 0.0
      %v4741 = vmax.f32 %v4665, 0.0
      %v4742 = vmax.f32 %v4670, 0.0
      %v4743 = vmax.f32 %v4673, 0.0
      %v4744 = vmax.f32 %v4678, 0.0
      %v4745 = vmax.f32 %v4681, 0.0
      %v4746 = vmax.f32 %v4686, 0.0
      %v4747 = vmax.f32 %v4689, 0.0
      %v4748 = vmax.f32 %v4694, 0.0
      %v4749 = vmax.f32 %v4697, 0.0
      %v4750 = vmax.f32 %v4702, 0.0
      %v4751 = vmax.f32 %v4705, 0.0
      %v4752 = vmax.f32 %v4710, 0.0
      %v4753 = vmax.f32 %v4713, 0.0
      %v4754 = vmax.f32 %v4718, 0.0
      %v4755 = vmax.f32 %v4721, 0.0
      %v4756 = vpack.c.bf16 %v4725, %v4724
      %v4757 = vpack.c.bf16 %v4727, %v4726
      %v4758 = vpack.c.bf16 %v4729, %v4728
      %v4759 = vpack.c.bf16 %v4731, %v4730
      %v4760 = vpack.c.bf16 %v4733, %v4732
      %v4761 = vpack.c.bf16 %v4735, %v4734
      %v4762 = vpack.c.bf16 %v4737, %v4736
      %v4763 = vpack.c.bf16 %v4739, %v4738
      %v4764 = vpack.c.bf16 %v4741, %v4740
      %v4765 = vpack.c.bf16 %v4743, %v4742
      %v4766 = vpack.c.bf16 %v4745, %v4744
      %v4767 = vpack.c.bf16 %v4747, %v4746
      %v4768 = vpack.c.bf16 %v4749, %v4748
      %v4769 = vpack.c.bf16 %v4751, %v4750
      %v4770 = vpack.c.bf16 %v4753, %v4752
      %v4771 = vpack.c.bf16 %v4755, %v4754
      %v4788 = vunpack.c.l.b16 %v4756
      %v4789 = vunpack.c.h.b16 %v4756
      %v4790 = vunpack.c.l.b16 %v4757
      %v4791 = vunpack.c.h.b16 %v4757
      %v4792 = vunpack.c.l.b16 %v4758
      %v4793 = vunpack.c.h.b16 %v4758
      %v4794 = vunpack.c.l.b16 %v4759
      %v4795 = vunpack.c.h.b16 %v4759
      %v4796 = vunpack.c.l.b16 %v4760
      %v4797 = vunpack.c.h.b16 %v4760
      %v4798 = vunpack.c.l.b16 %v4761
      %v4799 = vunpack.c.h.b16 %v4761
      %v4800 = vunpack.c.l.b16 %v4762
      %v4801 = vunpack.c.h.b16 %v4762
      %v4802 = vunpack.c.l.b16 %v4763
      %v4803 = vunpack.c.h.b16 %v4763
      %v4804 = vunpack.c.l.b16 %v4764
      %v4805 = vunpack.c.h.b16 %v4764
      %v4806 = vunpack.c.l.b16 %v4765
      %v4807 = vunpack.c.h.b16 %v4765
      %v4808 = vunpack.c.l.b16 %v4766
      %v4809 = vunpack.c.h.b16 %v4766
      %v4810 = vunpack.c.l.b16 %v4767
      %v4811 = vunpack.c.h.b16 %v4767
      %v4812 = vunpack.c.l.b16 %v4768
      %v4813 = vunpack.c.h.b16 %v4768
      %v4814 = vunpack.c.l.b16 %v4769
      %v4815 = vunpack.c.h.b16 %v4769
      %v4816 = vunpack.c.l.b16 %v4770
      %v4817 = vunpack.c.h.b16 %v4770
      %v4818 = vunpack.c.l.b16 %v4771
      %v4819 = vunpack.c.h.b16 %v4771
      %v4820 = vpack.c.b16 %v4788, %v4788
      %v4821 = vpack.c.b16 %v4789, %v4789
      %v4822 = vpack.c.b16 %v4790, %v4790
      %v4823 = vpack.c.b16 %v4791, %v4791
      %v4824 = vpack.c.b16 %v4792, %v4792
      %v4825 = vpack.c.b16 %v4793, %v4793
      %v4826 = vpack.c.b16 %v4794, %v4794
      %v4827 = vpack.c.b16 %v4795, %v4795
      %v4828 = vpack.c.b16 %v4796, %v4796
      %v4829 = vpack.c.b16 %v4797, %v4797
      %v4830 = vpack.c.b16 %v4798, %v4798
      %v4831 = vpack.c.b16 %v4799, %v4799
      %v4832 = vpack.c.b16 %v4800, %v4800
      %v4833 = vpack.c.b16 %v4801, %v4801
      %v4834 = vpack.c.b16 %v4802, %v4802
      %v4835 = vpack.c.b16 %v4803, %v4803
      %v4836 = vpack.c.b16 %v4804, %v4804
      %v4837 = vpack.c.b16 %v4805, %v4805
      %v4838 = vpack.c.b16 %v4806, %v4806
      %v4839 = vpack.c.b16 %v4807, %v4807
      %v4840 = vpack.c.b16 %v4808, %v4808
      %v4841 = vpack.c.b16 %v4809, %v4809
      %v4842 = vpack.c.b16 %v4810, %v4810
      %v4843 = vpack.c.b16 %v4811, %v4811
      %v4844 = vpack.c.b16 %v4812, %v4812
      %v4845 = vpack.c.b16 %v4813, %v4813
      %v4846 = vpack.c.b16 %v4814, %v4814
      %v4847 = vpack.c.b16 %v4815, %v4815
      %v4848 = vpack.c.b16 %v4816, %v4816
      %v4849 = vpack.c.b16 %v4817, %v4817
      %v4850 = vpack.c.b16 %v4818, %v4818
      %v4851 = vpack.c.b16 %v4819, %v4819
      %vm4884 = vcmask 519168
      %4885 = vst.msk [vmem:[%s221] sm:$0xf] %vm4884, %v4820
      %4886 = vst.msk [vmem:[%s221 + $0x4] sm:$0xf] %vm4884, %v4821
      %4887 = vst.msk [vmem:[%s221 + $0x8] sm:$0xf] %vm4884, %v4822
      %4888 = vst.msk [vmem:[%s221 + $0xc] sm:$0xf] %vm4884, %v4823
      %4889 = vst.msk [vmem:[%s221 + $0x10] sm:$0xf] %vm4884, %v4824
      %4890 = vst.msk [vmem:[%s221 + $0x14] sm:$0xf] %vm4884, %v4825
      %4891 = vst.msk [vmem:[%s221 + $0x18] sm:$0xf] %vm4884, %v4826
      %4892 = vst.msk [vmem:[%s221 + $0x1c] sm:$0xf] %vm4884, %v4827
      %4893 = vst.msk [vmem:[%s221 + $0x20] sm:$0xf] %vm4884, %v4828
      %4894 = vst.msk [vmem:[%s221 + $0x24] sm:$0xf] %vm4884, %v4829
      %4895 = vst.msk [vmem:[%s221 + $0x28] sm:$0xf] %vm4884, %v4830
      %4896 = vst.msk [vmem:[%s221 + $0x2c] sm:$0xf] %vm4884, %v4831
      %4897 = vst.msk [vmem:[%s221 + $0x30] sm:$0xf] %vm4884, %v4832
      %4898 = vst.msk [vmem:[%s221 + $0x34] sm:$0xf] %vm4884, %v4833
      %4899 = vst.msk [vmem:[%s221 + $0x38] sm:$0xf] %vm4884, %v4834
      %4900 = vst.msk [vmem:[%s221 + $0x3c] sm:$0xf] %vm4884, %v4835
      %4901 = vst.msk [vmem:[%s221 + $0x40] sm:$0xf] %vm4884, %v4836
      %4902 = vst.msk [vmem:[%s221 + $0x44] sm:$0xf] %vm4884, %v4837
      %4903 = vst.msk [vmem:[%s221 + $0x48] sm:$0xf] %vm4884, %v4838
      %4904 = vst.msk [vmem:[%s221 + $0x4c] sm:$0xf] %vm4884, %v4839
      %4905 = vst.msk [vmem:[%s221 + $0x50] sm:$0xf] %vm4884, %v4840
      %4906 = vst.msk [vmem:[%s221 + $0x54] sm:$0xf] %vm4884, %v4841
      %4907 = vst.msk [vmem:[%s221 + $0x58] sm:$0xf] %vm4884, %v4842
      %4908 = vst.msk [vmem:[%s221 + $0x5c] sm:$0xf] %vm4884, %v4843
      %4909 = vst.msk [vmem:[%s221 + $0x60] sm:$0xf] %vm4884, %v4844
      %4910 = vst.msk [vmem:[%s221 + $0x64] sm:$0xf] %vm4884, %v4845
      %4911 = vst.msk [vmem:[%s221 + $0x68] sm:$0xf] %vm4884, %v4846
      %4912 = vst.msk [vmem:[%s221 + $0x6c] sm:$0xf] %vm4884, %v4847
      %4913 = vst.msk [vmem:[%s221 + $0x70] sm:$0xf] %vm4884, %v4848
      %4914 = vst.msk [vmem:[%s221 + $0x74] sm:$0xf] %vm4884, %v4849
      %4915 = vst.msk [vmem:[%s221 + $0x78] sm:$0xf] %vm4884, %v4850
      %4916 = vst.msk [vmem:[%s221 + $0x7c] sm:$0xf] %vm4884, %v4851
      %p4917 = scmp.lt.s32.totalorder %s19, 1
      %s4918 = scalar_select %p4917, %s19, 1
      %p4919 = scmp.lt.s32.totalorder %s18, 0
      %s4920 = scalar_select %p4919, %s18, 0
      %s4921 = smul.addr %s4918, 32
      %s4922 = sadd.s32 %s4920, %s4921
      %s4923 = smul.addr %s4922, 4
      %s4924 = scalar_lea.vmem %s3, %s4923
      // Predicated region
      $region33: #{tpu_custom_call.1} parent=31 // pred_check
        %p4925 = pneg %p124
      $region34: #{tpu_custom_call.1} parent=31 // pred_check_branch
        %4927 = sbr.rel (%p4925) target = $region36
      $region35: #{tpu_custom_call.1} parent=31 // pred_region
        _
      $region36: #{tpu_custom_call.1} parent=31 // pred_fallthru
        _
    $region32: #{tpu_custom_call.1} parent=5 // pred_fallthru
      _
    %p4928 = scmp.le.s32.totalorder 2, %s9
    // Predicated region
    $region37: #{tpu_custom_call.1} parent=5 // pred_check
      %p4929 = pneg %p4928
    $region38: #{tpu_custom_call.1} parent=5 // pred_check_branch
      %4931 = sbr.rel (%p4929) target = $region40
    $region39: #{tpu_custom_call.1} parent=5 // pred_region
      %s4932 = ssub.s32 %s9, 2
      // Predicated region
      $region41: #{tpu_custom_call.1} parent=39 // pred_check
        %p4933 = pneg %p130
      $region42: #{tpu_custom_call.1} parent=39 // pred_check_branch
        %4935 = sbr.rel (%p4933) target = $region44
      $region43: #{tpu_custom_call.1} parent=39 // pred_region
        %p4936 = scmp.lt.s32.totalorder %s21, 1
        %s4937 = scalar_select %p4936, %s21, 1
        %p4938 = scmp.lt.s32.totalorder %s20, 0
        %s4939 = scalar_select %p4938, %s20, 0
        %s4940 = smul.addr %s4937, 32
        %s4941 = sadd.s32 %s4939, %s4940
        %s4942 = smul.addr %s4941, 4
        %s4943 = scalar_lea.vmem %s3, %s4942
      $region44: #{tpu_custom_call.1} parent=39 // pred_fallthru
        _
    $region40: #{tpu_custom_call.1} parent=5 // pred_fallthru
      _
  $region6: #{tpu_custom_call.1} parent=0 // loop_footer
    %s13 = sadd.s32 1, %s9
  $region7: #{tpu_custom_call.1} parent=0 // loop_footer_branch
    %8 = sbr.rel target = $region3
  $region8: #{tpu_custom_call.1} parent=0 // loop_exit
    _

</llo_original>
